<compile_context>
chip_gen: v7x
topology: tpu7x:2x2x1
jax: 0.10.0
libtpu: 0.0.40
codegen_flags: <defaults>
</compile_context>

<pallas_src>
import functools

import jax
import jax.numpy as jnp
from jax.experimental import pallas as pl
from jax.experimental.pallas import tpu as pltpu

EPS = 1e-5   # nn.BatchNorm2d default
LANE = 128   # TPU lane width


def _round_up(x, m):
    return ((x + m - 1) // m) * m


def _vmem_cap_bytes():
    # Physical VMEM differs per generation (v5e/v6e: 128 MiB, v7x: 64 MiB).
    try:
        cap = int(pltpu.get_tpu_info().vmem_capacity_bytes)
    except Exception:                      # no TPU visible / interpret mode
        cap = 64 << 20
    return min(100 << 20, max(16 << 20, int(cap * 0.85)))


# ---------------------------------------------------------------------------
# Fused kernel: maxpool(2) -> conv1+BN1+ReLU -> conv2+BN2+ReLU, one image per
# grid step.  All intermediates live in VMEM; convs are per-tap MXU matmuls.
# ---------------------------------------------------------------------------
def _down_fused_kernel(x_ref, w1_ref, s1_ref, b1_ref, w2_ref, s2_ref, b2_ref,
                       o_ref, xpad1_ref, xpad2_ref, *, kh, kw, pad_h, pad_w):
    # x_ref:  (1, H, W, Cin)             input tile (NHWC)
    # w1_ref: (kh*kw*Cin,    Cmid_k)     im2col-ordered conv1 weights
    # w2_ref: (kh*kw*Cmid_k, Cout_p)     im2col-ordered conv2 weights
    # s*/b*:  (1, C)                     folded BN scale / bias (f32)
    # o_ref:  (1, Hp, Wp, Cout_p)        lane-dense output tile
    _, h, w, cin = x_ref.shape
    hp, wp = h // 2, w // 2
    cmid_k = w1_ref.shape[1]
    cout_p = w2_ref.shape[1]
    cdt = xpad1_ref.dtype

    # ---- MaxPool2d(2): value-level reshape + max (no strided ref reads) ----
    xv = x_ref[0, :, :, :]                                  # (h, w, cin)
    xv = xv.reshape(hp, 2, wp, 2, cin)
    pooled = jnp.max(jnp.max(xv, axis=3), axis=1)           # (hp, wp, cin)

    # ---- "SAME" padding: zero only the thin halo border (cheap, per step) --
    def _zero_border(ref, c):
        if pad_h > 0:
            ref[0:pad_h, :, :] = jnp.zeros((pad_h, wp + 2 * pad_w, c), cdt)
            ref[pad_h + hp:pad_h + hp + pad_h, :, :] = (
                jnp.zeros((pad_h, wp + 2 * pad_w, c), cdt))
        if pad_w > 0:
            ref[:, 0:pad_w, :] = jnp.zeros((hp + 2 * pad_h, pad_w, c), cdt)
            ref[:, pad_w + wp:pad_w + wp + pad_w, :] = (
                jnp.zeros((hp + 2 * pad_h, pad_w, c), cdt))

    # ---- conv1 (per-tap accumulated matmuls) + BN1 + ReLU -------------------
    _zero_border(xpad1_ref, cin)
    xpad1_ref[pad_h:pad_h + hp, pad_w:pad_w + wp, :] = pooled.astype(cdt)

    acc1 = None
    for dy in range(kh):
        for dx in range(kw):
            i = dy * kw + dx
            patch = xpad1_ref[dy:dy + hp, dx:dx + wp, :].reshape(hp * wp, cin)
            d = jnp.dot(patch, w1_ref[i * cin:(i + 1) * cin, :],
                        preferred_element_type=jnp.float32)
            acc1 = d if acc1 is None else acc1 + d          # (hp*wp, cmid_k) f32
    a1 = jnp.maximum(acc1 * s1_ref[...] + b1_ref[...], 0.0)

    # ---- conv2 (per-tap accumulated matmuls) + BN2 + ReLU -------------------
    _zero_border(xpad2_ref, cmid_k)
    xpad2_ref[pad_h:pad_h + hp, pad_w:pad_w + wp, :] = (
        a1.reshape(hp, wp, cmid_k).astype(cdt))

    acc2 = None
    for dy in range(kh):
        for dx in range(kw):
            i = dy * kw + dx
            patch = xpad2_ref[dy:dy + hp, dx:dx + wp, :].reshape(hp * wp, cmid_k)
            d = jnp.dot(patch, w2_ref[i * cmid_k:(i + 1) * cmid_k, :],
                        preferred_element_type=jnp.float32)
            acc2 = d if acc2 is None else acc2 + d          # (hp*wp, cout_p) f32
    a2 = jnp.maximum(acc2 * s2_ref[...] + b2_ref[...], 0.0)

    # Lane-dense store: last dim of the block is Cout_p (multiple of 128).
    o_ref[...] = a2.reshape(1, hp, wp, cout_p).astype(o_ref.dtype)


def _fold_bn(conv_b, gamma, beta, mean, var):
    scale = gamma / jnp.sqrt(var + EPS)
    bias = (conv_b - mean) * scale + beta
    return scale, bias


# ---------------------------------------------------------------------------
# Down forward (Pallas) and pure-JAX reference.
# ---------------------------------------------------------------------------
def down_forward(x_nchw, params, *, compute_dtype=jnp.float32):
    x = jnp.transpose(x_nchw, (0, 2, 3, 1))             # NCHW -> NHWC
    n, h, w, cin = x.shape
    assert h % 2 == 0 and w % 2 == 0, "MaxPool2d(2) needs even H, W"
    hp, wp = h // 2, w // 2

    w1_hwio = params["conv1_w_hwio"]                     # (kh, kw, cin,  cmid)
    w2_hwio = params["conv2_w_hwio"]                     # (kh, kw, cmid, cout)
    kh, kw, _, cmid = w1_hwio.shape
    cout = w2_hwio.shape[3]
    pad_h, pad_w = (kh - 1) // 2, (kw - 1) // 2
    # TODO(synk): even kernel_size has asymmetric PyTorch "same" padding; only
    #             odd kernel sizes are matched exactly here.

    # Mid channels: round only to the sublane multiple (no wasted MXU K work).
    # Out channels: round to the lane width for a lane-dense final store.
    sub = 8 if jnp.dtype(compute_dtype).itemsize == 4 else 16
    cmid_k = _round_up(cmid, sub)
    cout_p = _round_up(cout, LANE)

    s1, b1 = _fold_bn(params["conv1_b"], params["bn1_gamma"],
                      params["bn1_beta"], params["bn1_mean"], params["bn1_var"])
    s2, b2 = _fold_bn(params["conv2_b"], params["bn2_gamma"],
                      params["bn2_beta"], params["bn2_mean"], params["bn2_var"])

    # conv1 weights -> (kh*kw*cin, cmid_k); row order = ((dy*kw+dx)*cin + ci).
    w1 = w1_hwio.reshape(kh * kw * cin, cmid)
    w1 = jnp.pad(w1, ((0, 0), (0, cmid_k - cmid))).astype(compute_dtype)
    s1p = jnp.pad(s1, (0, cmid_k - cmid)).reshape(1, cmid_k).astype(jnp.float32)
    b1p = jnp.pad(b1, (0, cmid_k - cmid)).reshape(1, cmid_k).astype(jnp.float32)

    # conv2 weights: pad in-channels to cmid_k, out-channels to cout_p (zeros),
    # then reshape to (kh*kw*cmid_k, cout_p).  Padded rows/cols stay inert
    # because padded a1 channels and padded scale/bias are exactly zero.
    w2 = jnp.pad(w2_hwio,
                 ((0, 0), (0, 0), (0, cmid_k - cmid), (0, cout_p - cout)))
    w2 = w2.reshape(kh * kw * cmid_k, cout_p).astype(compute_dtype)
    s2p = jnp.pad(s2, (0, cout_p - cout)).reshape(1, cout_p).astype(jnp.float32)
    b2p = jnp.pad(b2, (0, cout_p - cout)).reshape(1, cout_p).astype(jnp.float32)

    kernel = functools.partial(_down_fused_kernel, kh=kh, kw=kw,
                               pad_h=pad_h, pad_w=pad_w)

    # Derive the VMEM limit from the real footprint instead of a fixed 32 MiB.
    cbytes = jnp.dtype(compute_dtype).itemsize
    xbytes = jnp.dtype(x.dtype).itemsize
    in_blk = h * w * cin * xbytes
    out_blk = hp * wp * cout_p * xbytes
    wts = (w1.size + w2.size) * cbytes + (2 * cmid_k + 2 * cout_p) * 4
    scratch = (hp + 2 * pad_h) * (wp + 2 * pad_w) * (cin + cmid_k) * cbytes
    needed = 2 * (in_blk + out_blk) + wts + scratch + (4 << 20)
    vmem_limit = int(min(_vmem_cap_bytes(), max(needed, 16 << 20)))

    out_padded = pl.pallas_call(
        kernel,
        out_shape=jax.ShapeDtypeStruct((n, hp, wp, cout_p), x.dtype),
        grid=(n,),
        in_specs=[
            pl.BlockSpec((1, h, w, cin), lambda i: (i, 0, 0, 0)),
            pl.BlockSpec((kh * kw * cin, cmid_k), lambda i: (0, 0)),
            pl.BlockSpec((1, cmid_k), lambda i: (0, 0)),
            pl.BlockSpec((1, cmid_k), lambda i: (0, 0)),
            pl.BlockSpec((kh * kw * cmid_k, cout_p), lambda i: (0, 0)),
            pl.BlockSpec((1, cout_p), lambda i: (0, 0)),
            pl.BlockSpec((1, cout_p), lambda i: (0, 0)),
        ],
        out_specs=pl.BlockSpec((1, hp, wp, cout_p), lambda i: (i, 0, 0, 0)),
        scratch_shapes=[
            pltpu.VMEM((hp + 2 * pad_h, wp + 2 * pad_w, cin), compute_dtype),
            pltpu.VMEM((hp + 2 * pad_h, wp + 2 * pad_w, cmid_k), compute_dtype),
        ],
        compiler_params=pltpu.CompilerParams(
            dimension_semantics=("parallel",),
            vmem_limit_bytes=vmem_limit,
        ),
    )(x, w1, s1p, b1p, w2, s2p, b2p)

    out = out_padded[..., :cout]                         # drop channel padding
    return jnp.transpose(out, (0, 3, 1, 2))              # NHWC -> NCHW


def ref_forward(x_nchw, params):
    x = jnp.transpose(x_nchw, (0, 2, 3, 1))
    x = jax.lax.reduce_window(x, -jnp.inf, jax.lax.max,
                              (1, 2, 2, 1), (1, 2, 2, 1), "VALID")
    for i in (1, 2):
        y = jax.lax.conv_general_dilated(
            x, params[f"conv{i}_w_hwio"], window_strides=(1, 1),
            padding="SAME", dimension_numbers=("NHWC", "HWIO", "NHWC"))
        y = y + params[f"conv{i}_b"]
        scale = params[f"bn{i}_gamma"] / jnp.sqrt(params[f"bn{i}_var"] + EPS)
        y = (y - params[f"bn{i}_mean"]) * scale + params[f"bn{i}_beta"]
        x = jnp.maximum(y, 0.0)
    return jnp.transpose(x, (0, 3, 1, 2))


def init_params(key, in_channels, out_channels, kernel_size):
    keys = jax.random.split(key, 12)

    def conv_w(kk, ci, co):
        # PyTorch Conv2d weight shape (Cout, Cin, kh, kw) -> HWIO
        w = 0.1 * jax.random.normal(kk, (co, ci, kernel_size, kernel_size),
                                    jnp.float32)
        return jnp.transpose(w, (2, 3, 1, 0))

    p = {}
    chans = [(in_channels, out_channels), (out_channels, out_channels)]
    for idx, (ci, co) in enumerate(chans, start=1):
        base = (idx - 1) * 6
        p[f"conv{idx}_w_hwio"] = conv_w(keys[base + 0], ci, co)
        p[f"conv{idx}_b"] = 0.1 * jax.random.normal(keys[base + 1], (co,),
                                                    jnp.float32)
        p[f"bn{idx}_gamma"] = 1.0 + 0.1 * jax.random.normal(
            keys[base + 2], (co,), jnp.float32)
        p[f"bn{idx}_beta"] = 0.1 * jax.random.normal(keys[base + 3], (co,),
                                                     jnp.float32)
        p[f"bn{idx}_mean"] = 0.1 * jax.random.normal(keys[base + 4], (co,),
                                                     jnp.float32)
        p[f"bn{idx}_var"] = 0.5 + jax.random.uniform(keys[base + 5], (co,),
                                                     jnp.float32)
    return p


if __name__ == "__main__":
    N, C_IN, H, W = 2, 4, 16, 16
    C_OUT, K = 8, 3

    key = jax.random.PRNGKey(0)
    kx, kp = jax.random.split(key)
    x = jax.random.normal(kx, (N, C_IN, H, W), jnp.float32)
    params = init_params(kp, C_IN, C_OUT, K)

    out = jax.block_until_ready(down_forward(x, params))
    assert out.shape == (N, C_OUT, H // 2, W // 2), out.shape

    ref = jax.block_until_ready(ref_forward(x, params))
    if not jnp.allclose(out, ref, atol=1e-4, rtol=1e-4):
        max_err = jnp.max(jnp.abs(out - ref))
        raise AssertionError(f"mismatch vs reference, max abs err = {max_err}")

    print("KERNEL_OK")
</pallas_src>

<mosaic_0001>
module attributes {stable_mosaic.version = 11 : i64} {
  func.func @_down_fused_kernel(%arg0: i32, %arg1: memref<1x16x16x4xf32, #tpu.memory_space<vmem>>, %arg2: memref<36x8xf32, #tpu.memory_space<vmem>>, %arg3: memref<1x8xf32, #tpu.memory_space<vmem>>, %arg4: memref<1x8xf32, #tpu.memory_space<vmem>>, %arg5: memref<72x128xf32, #tpu.memory_space<vmem>>, %arg6: memref<1x128xf32, #tpu.memory_space<vmem>>, %arg7: memref<1x128xf32, #tpu.memory_space<vmem>>, %arg8: memref<1x8x8x128xf32, #tpu.memory_space<vmem>>, %arg9: memref<10x10x4xf32, #tpu.memory_space<vmem>>, %arg10: memref<10x10x8xf32, #tpu.memory_space<vmem>>) attributes {dimension_semantics = [#tpu.dimension_semantics<parallel>], iteration_bounds = array<i64: 2>, scalar_prefetch = 0 : i64, scratch_operands = 2 : i64, tpu.core_type = #tpu.core_type<tc>, window_params = [{transform_indices = @transform_0, window_bounds = array<i64: 1, 16, 16, 4>}, {pipeline_mode = #tpu.pipeline_mode<synchronous>, transform_indices = @transform_1, window_bounds = array<i64: 36, 8>}, {pipeline_mode = #tpu.pipeline_mode<synchronous>, transform_indices = @transform_2, window_bounds = array<i64: 1, 8>}, {pipeline_mode = #tpu.pipeline_mode<synchronous>, transform_indices = @transform_3, window_bounds = array<i64: 1, 8>}, {pipeline_mode = #tpu.pipeline_mode<synchronous>, transform_indices = @transform_4, window_bounds = array<i64: 72, 128>}, {pipeline_mode = #tpu.pipeline_mode<synchronous>, transform_indices = @transform_5, window_bounds = array<i64: 1, 128>}, {pipeline_mode = #tpu.pipeline_mode<synchronous>, transform_indices = @transform_6, window_bounds = array<i64: 1, 128>}, {transform_indices = @transform_7, window_bounds = array<i64: 1, 8, 8, 128>}]} {
    %c0 = arith.constant 0 : index
    %c0_0 = arith.constant 0 : index
    %c0_1 = arith.constant 0 : index
    %c0_2 = arith.constant 0 : index
    %0 = vector.load %arg1[%c0, %c0_0, %c0_1, %c0_2] : memref<1x16x16x4xf32, #tpu.memory_space<vmem>>, vector<1x16x16x4xf32>
    %1 = vector.shape_cast %0 : vector<1x16x16x4xf32> to vector<16x16x4xf32>
    %2 = vector.shape_cast %1 : vector<16x16x4xf32> to vector<8x2x8x2x4xf32>
    %cst = arith.constant dense<0xFF800000> : vector<8x2x8x4xf32>
    %3 = vector.multi_reduction <maximumf>, %2, %cst [3] : vector<8x2x8x2x4xf32> to vector<8x2x8x4xf32>
    %cst_3 = arith.constant dense<0xFF800000> : vector<8x8x4xf32>
    %4 = vector.multi_reduction <maximumf>, %3, %cst_3 [1] : vector<8x2x8x4xf32> to vector<8x8x4xf32>
    %cst_4 = arith.constant 0.000000e+00 : f32
    %5 = vector.broadcast %cst_4 : f32 to vector<1x10x4xf32>
    %c0_5 = arith.constant 0 : index
    %c0_6 = arith.constant 0 : index
    %c0_7 = arith.constant 0 : index
    %6 = vector.load %arg9[%c0_5, %c0_6, %c0_7] : memref<10x10x4xf32, #tpu.memory_space<vmem>>, vector<1x10x4xf32>
    tpu.vector_store %arg9[%c0_5, %c0_6, %c0_7], %5 {strides = array<i32>} : memref<10x10x4xf32, #tpu.memory_space<vmem>>, vector<1x10x4xf32>,
    %cst_8 = arith.constant 0.000000e+00 : f32
    %7 = vector.broadcast %cst_8 : f32 to vector<1x10x4xf32>
    %c9 = arith.constant 9 : index
    %c0_9 = arith.constant 0 : index
    %c0_10 = arith.constant 0 : index
    %8 = vector.load %arg9[%c9, %c0_9, %c0_10] : memref<10x10x4xf32, #tpu.memory_space<vmem>>, vector<1x10x4xf32>
    tpu.vector_store %arg9[%c9, %c0_9, %c0_10], %7 {strides = array<i32>} : memref<10x10x4xf32, #tpu.memory_space<vmem>>, vector<1x10x4xf32>,
    %cst_11 = arith.constant 0.000000e+00 : f32
    %9 = vector.broadcast %cst_11 : f32 to vector<10x1x4xf32>
    %c0_12 = arith.constant 0 : index
    %c0_13 = arith.constant 0 : index
    %c0_14 = arith.constant 0 : index
    %10 = vector.load %arg9[%c0_12, %c0_13, %c0_14] : memref<10x10x4xf32, #tpu.memory_space<vmem>>, vector<10x1x4xf32>
    tpu.vector_store %arg9[%c0_12, %c0_13, %c0_14], %9 {strides = array<i32>} : memref<10x10x4xf32, #tpu.memory_space<vmem>>, vector<10x1x4xf32>,
    %cst_15 = arith.constant 0.000000e+00 : f32
    %11 = vector.broadcast %cst_15 : f32 to vector<10x1x4xf32>
    %c0_16 = arith.constant 0 : index
    %c9_17 = arith.constant 9 : index
    %c0_18 = arith.constant 0 : index
    %12 = vector.load %arg9[%c0_16, %c9_17, %c0_18] : memref<10x10x4xf32, #tpu.memory_space<vmem>>, vector<10x1x4xf32>
    tpu.vector_store %arg9[%c0_16, %c9_17, %c0_18], %11 {strides = array<i32>} : memref<10x10x4xf32, #tpu.memory_space<vmem>>, vector<10x1x4xf32>,
    %c1 = arith.constant 1 : index
    %c1_19 = arith.constant 1 : index
    %c0_20 = arith.constant 0 : index
    %13 = vector.load %arg9[%c1, %c1_19, %c0_20] : memref<10x10x4xf32, #tpu.memory_space<vmem>>, vector<8x8x4xf32>
    tpu.vector_store %arg9[%c1, %c1_19, %c0_20], %4 {strides = array<i32>} : memref<10x10x4xf32, #tpu.memory_space<vmem>>, vector<8x8x4xf32>,
    %c0_21 = arith.constant 0 : index
    %c0_22 = arith.constant 0 : index
    %c0_23 = arith.constant 0 : index
    %14 = vector.load %arg9[%c0_21, %c0_22, %c0_23] : memref<10x10x4xf32, #tpu.memory_space<vmem>>, vector<8x8x4xf32>
    %15 = vector.shape_cast %14 : vector<8x8x4xf32> to vector<64x4xf32>
    %c0_24 = arith.constant 0 : index
    %c0_25 = arith.constant 0 : index
    %16 = vector.load %arg2[%c0_24, %c0_25] : memref<36x8xf32, #tpu.memory_space<vmem>>, vector<4x8xf32>
    %cst_26 = arith.constant dense<0.000000e+00> : vector<64x8xf32>
    %17 = tpu.matmul %15, %16, %cst_26 {dimension_numbers = #tpu.dot_dimension_numbers<[1], [0], [0], [1], [0, 0, 1, 1], [], []>} : vector<64x4xf32>, vector<4x8xf32>, vector<64x8xf32> -> vector<64x8xf32>
    %c0_27 = arith.constant 0 : index
    %c1_28 = arith.constant 1 : index
    %c0_29 = arith.constant 0 : index
    %18 = vector.load %arg9[%c0_27, %c1_28, %c0_29] : memref<10x10x4xf32, #tpu.memory_space<vmem>>, vector<8x8x4xf32>
    %19 = vector.shape_cast %18 : vector<8x8x4xf32> to vector<64x4xf32>
    %c4 = arith.constant 4 : index
    %c0_30 = arith.constant 0 : index
    %20 = vector.load %arg2[%c4, %c0_30] : memref<36x8xf32, #tpu.memory_space<vmem>>, vector<4x8xf32>
    %cst_31 = arith.constant dense<0.000000e+00> : vector<64x8xf32>
    %21 = tpu.matmul %19, %20, %cst_31 {dimension_numbers = #tpu.dot_dimension_numbers<[1], [0], [0], [1], [0, 0, 1, 1], [], []>} : vector<64x4xf32>, vector<4x8xf32>, vector<64x8xf32> -> vector<64x8xf32>
    %22 = arith.addf %17, %21 : vector<64x8xf32>
    %c0_32 = arith.constant 0 : index
    %c2 = arith.constant 2 : index
    %c0_33 = arith.constant 0 : index
    %23 = vector.load %arg9[%c0_32, %c2, %c0_33] : memref<10x10x4xf32, #tpu.memory_space<vmem>>, vector<8x8x4xf32>
    %24 = vector.shape_cast %23 : vector<8x8x4xf32> to vector<64x4xf32>
    %c8 = arith.constant 8 : index
    %c0_34 = arith.constant 0 : index
    %25 = vector.load %arg2[%c8, %c0_34] : memref<36x8xf32, #tpu.memory_space<vmem>>, vector<4x8xf32>
    %cst_35 = arith.constant dense<0.000000e+00> : vector<64x8xf32>
    %26 = tpu.matmul %24, %25, %cst_35 {dimension_numbers = #tpu.dot_dimension_numbers<[1], [0], [0], [1], [0, 0, 1, 1], [], []>} : vector<64x4xf32>, vector<4x8xf32>, vector<64x8xf32> -> vector<64x8xf32>
    %27 = arith.addf %22, %26 : vector<64x8xf32>
    %c1_36 = arith.constant 1 : index
    %c0_37 = arith.constant 0 : index
    %c0_38 = arith.constant 0 : index
    %28 = vector.load %arg9[%c1_36, %c0_37, %c0_38] : memref<10x10x4xf32, #tpu.memory_space<vmem>>, vector<8x8x4xf32>
    %29 = vector.shape_cast %28 : vector<8x8x4xf32> to vector<64x4xf32>
    %c12 = arith.constant 12 : index
    %c0_39 = arith.constant 0 : index
    %30 = vector.load %arg2[%c12, %c0_39] : memref<36x8xf32, #tpu.memory_space<vmem>>, vector<4x8xf32>
    %cst_40 = arith.constant dense<0.000000e+00> : vector<64x8xf32>
    %31 = tpu.matmul %29, %30, %cst_40 {dimension_numbers = #tpu.dot_dimension_numbers<[1], [0], [0], [1], [0, 0, 1, 1], [], []>} : vector<64x4xf32>, vector<4x8xf32>, vector<64x8xf32> -> vector<64x8xf32>
    %32 = arith.addf %27, %31 : vector<64x8xf32>
    %c1_41 = arith.constant 1 : index
    %c1_42 = arith.constant 1 : index
    %c0_43 = arith.constant 0 : index
    %33 = vector.load %arg9[%c1_41, %c1_42, %c0_43] : memref<10x10x4xf32, #tpu.memory_space<vmem>>, vector<8x8x4xf32>
    %34 = vector.shape_cast %33 : vector<8x8x4xf32> to vector<64x4xf32>
    %c16 = arith.constant 16 : index
    %c0_44 = arith.constant 0 : index
    %35 = vector.load %arg2[%c16, %c0_44] : memref<36x8xf32, #tpu.memory_space<vmem>>, vector<4x8xf32>
    %cst_45 = arith.constant dense<0.000000e+00> : vector<64x8xf32>
    %36 = tpu.matmul %34, %35, %cst_45 {dimension_numbers = #tpu.dot_dimension_numbers<[1], [0], [0], [1], [0, 0, 1, 1], [], []>} : vector<64x4xf32>, vector<4x8xf32>, vector<64x8xf32> -> vector<64x8xf32>
    %37 = arith.addf %32, %36 : vector<64x8xf32>
    %c1_46 = arith.constant 1 : index
    %c2_47 = arith.constant 2 : index
    %c0_48 = arith.constant 0 : index
    %38 = vector.load %arg9[%c1_46, %c2_47, %c0_48] : memref<10x10x4xf32, #tpu.memory_space<vmem>>, vector<8x8x4xf32>
    %39 = vector.shape_cast %38 : vector<8x8x4xf32> to vector<64x4xf32>
    %c20 = arith.constant 20 : index
    %c0_49 = arith.constant 0 : index
    %40 = vector.load %arg2[%c20, %c0_49] : memref<36x8xf32, #tpu.memory_space<vmem>>, vector<4x8xf32>
    %cst_50 = arith.constant dense<0.000000e+00> : vector<64x8xf32>
    %41 = tpu.matmul %39, %40, %cst_50 {dimension_numbers = #tpu.dot_dimension_numbers<[1], [0], [0], [1], [0, 0, 1, 1], [], []>} : vector<64x4xf32>, vector<4x8xf32>, vector<64x8xf32> -> vector<64x8xf32>
    %42 = arith.addf %37, %41 : vector<64x8xf32>
    %c2_51 = arith.constant 2 : index
    %c0_52 = arith.constant 0 : index
    %c0_53 = arith.constant 0 : index
    %43 = vector.load %arg9[%c2_51, %c0_52, %c0_53] : memref<10x10x4xf32, #tpu.memory_space<vmem>>, vector<8x8x4xf32>
    %44 = vector.shape_cast %43 : vector<8x8x4xf32> to vector<64x4xf32>
    %c24 = arith.constant 24 : index
    %c0_54 = arith.constant 0 : index
    %45 = vector.load %arg2[%c24, %c0_54] : memref<36x8xf32, #tpu.memory_space<vmem>>, vector<4x8xf32>
    %cst_55 = arith.constant dense<0.000000e+00> : vector<64x8xf32>
    %46 = tpu.matmul %44, %45, %cst_55 {dimension_numbers = #tpu.dot_dimension_numbers<[1], [0], [0], [1], [0, 0, 1, 1], [], []>} : vector<64x4xf32>, vector<4x8xf32>, vector<64x8xf32> -> vector<64x8xf32>
    %47 = arith.addf %42, %46 : vector<64x8xf32>
    %c2_56 = arith.constant 2 : index
    %c1_57 = arith.constant 1 : index
    %c0_58 = arith.constant 0 : index
    %48 = vector.load %arg9[%c2_56, %c1_57, %c0_58] : memref<10x10x4xf32, #tpu.memory_space<vmem>>, vector<8x8x4xf32>
    %49 = vector.shape_cast %48 : vector<8x8x4xf32> to vector<64x4xf32>
    %c28 = arith.constant 28 : index
    %c0_59 = arith.constant 0 : index
    %50 = vector.load %arg2[%c28, %c0_59] : memref<36x8xf32, #tpu.memory_space<vmem>>, vector<4x8xf32>
    %cst_60 = arith.constant dense<0.000000e+00> : vector<64x8xf32>
    %51 = tpu.matmul %49, %50, %cst_60 {dimension_numbers = #tpu.dot_dimension_numbers<[1], [0], [0], [1], [0, 0, 1, 1], [], []>} : vector<64x4xf32>, vector<4x8xf32>, vector<64x8xf32> -> vector<64x8xf32>
    %52 = arith.addf %47, %51 : vector<64x8xf32>
    %c2_61 = arith.constant 2 : index
    %c2_62 = arith.constant 2 : index
    %c0_63 = arith.constant 0 : index
    %53 = vector.load %arg9[%c2_61, %c2_62, %c0_63] : memref<10x10x4xf32, #tpu.memory_space<vmem>>, vector<8x8x4xf32>
    %54 = vector.shape_cast %53 : vector<8x8x4xf32> to vector<64x4xf32>
    %c32 = arith.constant 32 : index
    %c0_64 = arith.constant 0 : index
    %55 = vector.load %arg2[%c32, %c0_64] : memref<36x8xf32, #tpu.memory_space<vmem>>, vector<4x8xf32>
    %cst_65 = arith.constant dense<0.000000e+00> : vector<64x8xf32>
    %56 = tpu.matmul %54, %55, %cst_65 {dimension_numbers = #tpu.dot_dimension_numbers<[1], [0], [0], [1], [0, 0, 1, 1], [], []>} : vector<64x4xf32>, vector<4x8xf32>, vector<64x8xf32> -> vector<64x8xf32>
    %57 = arith.addf %52, %56 : vector<64x8xf32>
    %c0_66 = arith.constant 0 : index
    %c0_67 = arith.constant 0 : index
    %58 = vector.load %arg3[%c0_66, %c0_67] : memref<1x8xf32, #tpu.memory_space<vmem>>, vector<1x8xf32>
    %59 = vector.broadcast %58 : vector<1x8xf32> to vector<64x8xf32>
    %60 = arith.mulf %57, %59 : vector<64x8xf32>
    %c0_68 = arith.constant 0 : index
    %c0_69 = arith.constant 0 : index
    %61 = vector.load %arg4[%c0_68, %c0_69] : memref<1x8xf32, #tpu.memory_space<vmem>>, vector<1x8xf32>
    %62 = vector.broadcast %61 : vector<1x8xf32> to vector<64x8xf32>
    %63 = arith.addf %60, %62 : vector<64x8xf32>
    %cst_70 = arith.constant 0.000000e+00 : f32
    %64 = vector.broadcast %cst_70 : f32 to vector<64x8xf32>
    %65 = arith.maximumf %63, %64 : vector<64x8xf32>
    %cst_71 = arith.constant 0.000000e+00 : f32
    %66 = vector.broadcast %cst_71 : f32 to vector<1x10x8xf32>
    %c0_72 = arith.constant 0 : index
    %c0_73 = arith.constant 0 : index
    %c0_74 = arith.constant 0 : index
    %67 = vector.load %arg10[%c0_72, %c0_73, %c0_74] : memref<10x10x8xf32, #tpu.memory_space<vmem>>, vector<1x10x8xf32>
    tpu.vector_store %arg10[%c0_72, %c0_73, %c0_74], %66 {strides = array<i32>} : memref<10x10x8xf32, #tpu.memory_space<vmem>>, vector<1x10x8xf32>,
    %cst_75 = arith.constant 0.000000e+00 : f32
    %68 = vector.broadcast %cst_75 : f32 to vector<1x10x8xf32>
    %c9_76 = arith.constant 9 : index
    %c0_77 = arith.constant 0 : index
    %c0_78 = arith.constant 0 : index
    %69 = vector.load %arg10[%c9_76, %c0_77, %c0_78] : memref<10x10x8xf32, #tpu.memory_space<vmem>>, vector<1x10x8xf32>
    tpu.vector_store %arg10[%c9_76, %c0_77, %c0_78], %68 {strides = array<i32>} : memref<10x10x8xf32, #tpu.memory_space<vmem>>, vector<1x10x8xf32>,
    %cst_79 = arith.constant 0.000000e+00 : f32
    %70 = vector.broadcast %cst_79 : f32 to vector<10x1x8xf32>
    %c0_80 = arith.constant 0 : index
    %c0_81 = arith.constant 0 : index
    %c0_82 = arith.constant 0 : index
    %71 = vector.load %arg10[%c0_80, %c0_81, %c0_82] : memref<10x10x8xf32, #tpu.memory_space<vmem>>, vector<10x1x8xf32>
    tpu.vector_store %arg10[%c0_80, %c0_81, %c0_82], %70 {strides = array<i32>} : memref<10x10x8xf32, #tpu.memory_space<vmem>>, vector<10x1x8xf32>,
    %cst_83 = arith.constant 0.000000e+00 : f32
    %72 = vector.broadcast %cst_83 : f32 to vector<10x1x8xf32>
    %c0_84 = arith.constant 0 : index
    %c9_85 = arith.constant 9 : index
    %c0_86 = arith.constant 0 : index
    %73 = vector.load %arg10[%c0_84, %c9_85, %c0_86] : memref<10x10x8xf32, #tpu.memory_space<vmem>>, vector<10x1x8xf32>
    tpu.vector_store %arg10[%c0_84, %c9_85, %c0_86], %72 {strides = array<i32>} : memref<10x10x8xf32, #tpu.memory_space<vmem>>, vector<10x1x8xf32>,
    %74 = vector.shape_cast %65 : vector<64x8xf32> to vector<8x8x8xf32>
    %c1_87 = arith.constant 1 : index
    %c1_88 = arith.constant 1 : index
    %c0_89 = arith.constant 0 : index
    %75 = vector.load %arg10[%c1_87, %c1_88, %c0_89] : memref<10x10x8xf32, #tpu.memory_space<vmem>>, vector<8x8x8xf32>
    tpu.vector_store %arg10[%c1_87, %c1_88, %c0_89], %74 {strides = array<i32>} : memref<10x10x8xf32, #tpu.memory_space<vmem>>, vector<8x8x8xf32>,
    %c0_90 = arith.constant 0 : index
    %c0_91 = arith.constant 0 : index
    %c0_92 = arith.constant 0 : index
    %76 = vector.load %arg10[%c0_90, %c0_91, %c0_92] : memref<10x10x8xf32, #tpu.memory_space<vmem>>, vector<8x8x8xf32>
    %77 = vector.shape_cast %76 : vector<8x8x8xf32> to vector<64x8xf32>
    %c0_93 = arith.constant 0 : index
    %c0_94 = arith.constant 0 : index
    %78 = vector.load %arg5[%c0_93, %c0_94] : memref<72x128xf32, #tpu.memory_space<vmem>>, vector<8x128xf32>
    %cst_95 = arith.constant dense<0.000000e+00> : vector<64x128xf32>
    %79 = tpu.matmul %77, %78, %cst_95 {dimension_numbers = #tpu.dot_dimension_numbers<[1], [0], [0], [1], [0, 0, 1, 1], [], []>} : vector<64x8xf32>, vector<8x128xf32>, vector<64x128xf32> -> vector<64x128xf32>
    %c0_96 = arith.constant 0 : index
    %c1_97 = arith.constant 1 : index
    %c0_98 = arith.constant 0 : index
    %80 = vector.load %arg10[%c0_96, %c1_97, %c0_98] : memref<10x10x8xf32, #tpu.memory_space<vmem>>, vector<8x8x8xf32>
    %81 = vector.shape_cast %80 : vector<8x8x8xf32> to vector<64x8xf32>
    %c8_99 = arith.constant 8 : index
    %c0_100 = arith.constant 0 : index
    %82 = vector.load %arg5[%c8_99, %c0_100] : memref<72x128xf32, #tpu.memory_space<vmem>>, vector<8x128xf32>
    %cst_101 = arith.constant dense<0.000000e+00> : vector<64x128xf32>
    %83 = tpu.matmul %81, %82, %cst_101 {dimension_numbers = #tpu.dot_dimension_numbers<[1], [0], [0], [1], [0, 0, 1, 1], [], []>} : vector<64x8xf32>, vector<8x128xf32>, vector<64x128xf32> -> vector<64x128xf32>
    %84 = arith.addf %79, %83 : vector<64x128xf32>
    %c0_102 = arith.constant 0 : index
    %c2_103 = arith.constant 2 : index
    %c0_104 = arith.constant 0 : index
    %85 = vector.load %arg10[%c0_102, %c2_103, %c0_104] : memref<10x10x8xf32, #tpu.memory_space<vmem>>, vector<8x8x8xf32>
    %86 = vector.shape_cast %85 : vector<8x8x8xf32> to vector<64x8xf32>
    %c16_105 = arith.constant 16 : index
    %c0_106 = arith.constant 0 : index
    %87 = vector.load %arg5[%c16_105, %c0_106] : memref<72x128xf32, #tpu.memory_space<vmem>>, vector<8x128xf32>
    %cst_107 = arith.constant dense<0.000000e+00> : vector<64x128xf32>
    %88 = tpu.matmul %86, %87, %cst_107 {dimension_numbers = #tpu.dot_dimension_numbers<[1], [0], [0], [1], [0, 0, 1, 1], [], []>} : vector<64x8xf32>, vector<8x128xf32>, vector<64x128xf32> -> vector<64x128xf32>
    %89 = arith.addf %84, %88 : vector<64x128xf32>
    %c1_108 = arith.constant 1 : index
    %c0_109 = arith.constant 0 : index
    %c0_110 = arith.constant 0 : index
    %90 = vector.load %arg10[%c1_108, %c0_109, %c0_110] : memref<10x10x8xf32, #tpu.memory_space<vmem>>, vector<8x8x8xf32>
    %91 = vector.shape_cast %90 : vector<8x8x8xf32> to vector<64x8xf32>
    %c24_111 = arith.constant 24 : index
    %c0_112 = arith.constant 0 : index
    %92 = vector.load %arg5[%c24_111, %c0_112] : memref<72x128xf32, #tpu.memory_space<vmem>>, vector<8x128xf32>
    %cst_113 = arith.constant dense<0.000000e+00> : vector<64x128xf32>
    %93 = tpu.matmul %91, %92, %cst_113 {dimension_numbers = #tpu.dot_dimension_numbers<[1], [0], [0], [1], [0, 0, 1, 1], [], []>} : vector<64x8xf32>, vector<8x128xf32>, vector<64x128xf32> -> vector<64x128xf32>
    %94 = arith.addf %89, %93 : vector<64x128xf32>
    %c1_114 = arith.constant 1 : index
    %c1_115 = arith.constant 1 : index
    %c0_116 = arith.constant 0 : index
    %95 = vector.load %arg10[%c1_114, %c1_115, %c0_116] : memref<10x10x8xf32, #tpu.memory_space<vmem>>, vector<8x8x8xf32>
    %96 = vector.shape_cast %95 : vector<8x8x8xf32> to vector<64x8xf32>
    %c32_117 = arith.constant 32 : index
    %c0_118 = arith.constant 0 : index
    %97 = vector.load %arg5[%c32_117, %c0_118] : memref<72x128xf32, #tpu.memory_space<vmem>>, vector<8x128xf32>
    %cst_119 = arith.constant dense<0.000000e+00> : vector<64x128xf32>
    %98 = tpu.matmul %96, %97, %cst_119 {dimension_numbers = #tpu.dot_dimension_numbers<[1], [0], [0], [1], [0, 0, 1, 1], [], []>} : vector<64x8xf32>, vector<8x128xf32>, vector<64x128xf32> -> vector<64x128xf32>
    %99 = arith.addf %94, %98 : vector<64x128xf32>
    %c1_120 = arith.constant 1 : index
    %c2_121 = arith.constant 2 : index
    %c0_122 = arith.constant 0 : index
    %100 = vector.load %arg10[%c1_120, %c2_121, %c0_122] : memref<10x10x8xf32, #tpu.memory_space<vmem>>, vector<8x8x8xf32>
    %101 = vector.shape_cast %100 : vector<8x8x8xf32> to vector<64x8xf32>
    %c40 = arith.constant 40 : index
    %c0_123 = arith.constant 0 : index
    %102 = vector.load %arg5[%c40, %c0_123] : memref<72x128xf32, #tpu.memory_space<vmem>>, vector<8x128xf32>
    %cst_124 = arith.constant dense<0.000000e+00> : vector<64x128xf32>
    %103 = tpu.matmul %101, %102, %cst_124 {dimension_numbers = #tpu.dot_dimension_numbers<[1], [0], [0], [1], [0, 0, 1, 1], [], []>} : vector<64x8xf32>, vector<8x128xf32>, vector<64x128xf32> -> vector<64x128xf32>
    %104 = arith.addf %99, %103 : vector<64x128xf32>
    %c2_125 = arith.constant 2 : index
    %c0_126 = arith.constant 0 : index
    %c0_127 = arith.constant 0 : index
    %105 = vector.load %arg10[%c2_125, %c0_126, %c0_127] : memref<10x10x8xf32, #tpu.memory_space<vmem>>, vector<8x8x8xf32>
    %106 = vector.shape_cast %105 : vector<8x8x8xf32> to vector<64x8xf32>
    %c48 = arith.constant 48 : index
    %c0_128 = arith.constant 0 : index
    %107 = vector.load %arg5[%c48, %c0_128] : memref<72x128xf32, #tpu.memory_space<vmem>>, vector<8x128xf32>
    %cst_129 = arith.constant dense<0.000000e+00> : vector<64x128xf32>
    %108 = tpu.matmul %106, %107, %cst_129 {dimension_numbers = #tpu.dot_dimension_numbers<[1], [0], [0], [1], [0, 0, 1, 1], [], []>} : vector<64x8xf32>, vector<8x128xf32>, vector<64x128xf32> -> vector<64x128xf32>
    %109 = arith.addf %104, %108 : vector<64x128xf32>
    %c2_130 = arith.constant 2 : index
    %c1_131 = arith.constant 1 : index
    %c0_132 = arith.constant 0 : index
    %110 = vector.load %arg10[%c2_130, %c1_131, %c0_132] : memref<10x10x8xf32, #tpu.memory_space<vmem>>, vector<8x8x8xf32>
    %111 = vector.shape_cast %110 : vector<8x8x8xf32> to vector<64x8xf32>
    %c56 = arith.constant 56 : index
    %c0_133 = arith.constant 0 : index
    %112 = vector.load %arg5[%c56, %c0_133] : memref<72x128xf32, #tpu.memory_space<vmem>>, vector<8x128xf32>
    %cst_134 = arith.constant dense<0.000000e+00> : vector<64x128xf32>
    %113 = tpu.matmul %111, %112, %cst_134 {dimension_numbers = #tpu.dot_dimension_numbers<[1], [0], [0], [1], [0, 0, 1, 1], [], []>} : vector<64x8xf32>, vector<8x128xf32>, vector<64x128xf32> -> vector<64x128xf32>
    %114 = arith.addf %109, %113 : vector<64x128xf32>
    %c2_135 = arith.constant 2 : index
    %c2_136 = arith.constant 2 : index
    %c0_137 = arith.constant 0 : index
    %115 = vector.load %arg10[%c2_135, %c2_136, %c0_137] : memref<10x10x8xf32, #tpu.memory_space<vmem>>, vector<8x8x8xf32>
    %116 = vector.shape_cast %115 : vector<8x8x8xf32> to vector<64x8xf32>
    %c64 = arith.constant 64 : index
    %c0_138 = arith.constant 0 : index
    %117 = vector.load %arg5[%c64, %c0_138] : memref<72x128xf32, #tpu.memory_space<vmem>>, vector<8x128xf32>
    %cst_139 = arith.constant dense<0.000000e+00> : vector<64x128xf32>
    %118 = tpu.matmul %116, %117, %cst_139 {dimension_numbers = #tpu.dot_dimension_numbers<[1], [0], [0], [1], [0, 0, 1, 1], [], []>} : vector<64x8xf32>, vector<8x128xf32>, vector<64x128xf32> -> vector<64x128xf32>
    %119 = arith.addf %114, %118 : vector<64x128xf32>
    %c0_140 = arith.constant 0 : index
    %c0_141 = arith.constant 0 : index
    %120 = vector.load %arg6[%c0_140, %c0_141] : memref<1x128xf32, #tpu.memory_space<vmem>>, vector<1x128xf32>
    %121 = vector.broadcast %120 : vector<1x128xf32> to vector<64x128xf32>
    %122 = arith.mulf %119, %121 : vector<64x128xf32>
    %c0_142 = arith.constant 0 : index
    %c0_143 = arith.constant 0 : index
    %123 = vector.load %arg7[%c0_142, %c0_143] : memref<1x128xf32, #tpu.memory_space<vmem>>, vector<1x128xf32>
    %124 = vector.broadcast %123 : vector<1x128xf32> to vector<64x128xf32>
    %125 = arith.addf %122, %124 : vector<64x128xf32>
    %cst_144 = arith.constant 0.000000e+00 : f32
    %126 = vector.broadcast %cst_144 : f32 to vector<64x128xf32>
    %127 = arith.maximumf %125, %126 : vector<64x128xf32>
    %128 = vector.shape_cast %127 : vector<64x128xf32> to vector<1x8x8x128xf32>
    %c0_145 = arith.constant 0 : index
    %c0_146 = arith.constant 0 : index
    %c0_147 = arith.constant 0 : index
    %c0_148 = arith.constant 0 : index
    %129 = vector.load %arg8[%c0_145, %c0_146, %c0_147, %c0_148] : memref<1x8x8x128xf32, #tpu.memory_space<vmem>>, vector<1x8x8x128xf32>
    tpu.vector_store %arg8[%c0_145, %c0_146, %c0_147, %c0_148], %128 {strides = array<i32>} : memref<1x8x8x128xf32, #tpu.memory_space<vmem>>, vector<1x8x8x128xf32>,
    return
  }
  func.func @transform_0(%arg0: i32) -> (i32, i32, i32, i32) {
    %c0_i32 = arith.constant 0 : i32
    %c0_i32_0 = arith.constant 0 : i32
    %c0_i32_1 = arith.constant 0 : i32
    %c0_i32_2 = arith.constant 0 : i32
    return %arg0, %c0_i32, %c0_i32_0, %c0_i32_1 : i32, i32, i32, i32
  }
  func.func @transform_1(%arg0: i32) -> (i32, i32) {
    %c0_i32 = arith.constant 0 : i32
    %c0_i32_0 = arith.constant 0 : i32
    %c0_i32_1 = arith.constant 0 : i32
    return %c0_i32, %c0_i32_0 : i32, i32
  }
  func.func @transform_2(%arg0: i32) -> (i32, i32) {
    %c0_i32 = arith.constant 0 : i32
    %c0_i32_0 = arith.constant 0 : i32
    %c0_i32_1 = arith.constant 0 : i32
    return %c0_i32, %c0_i32_0 : i32, i32
  }
  func.func @transform_3(%arg0: i32) -> (i32, i32) {
    %c0_i32 = arith.constant 0 : i32
    %c0_i32_0 = arith.constant 0 : i32
    %c0_i32_1 = arith.constant 0 : i32
    return %c0_i32, %c0_i32_0 : i32, i32
  }
  func.func @transform_4(%arg0: i32) -> (i32, i32) {
    %c0_i32 = arith.constant 0 : i32
    %c0_i32_0 = arith.constant 0 : i32
    %c0_i32_1 = arith.constant 0 : i32
    return %c0_i32, %c0_i32_0 : i32, i32
  }
  func.func @transform_5(%arg0: i32) -> (i32, i32) {
    %c0_i32 = arith.constant 0 : i32
    %c0_i32_0 = arith.constant 0 : i32
    %c0_i32_1 = arith.constant 0 : i32
    return %c0_i32, %c0_i32_0 : i32, i32
  }
  func.func @transform_6(%arg0: i32) -> (i32, i32) {
    %c0_i32 = arith.constant 0 : i32
    %c0_i32_0 = arith.constant 0 : i32
    %c0_i32_1 = arith.constant 0 : i32
    return %c0_i32, %c0_i32_0 : i32, i32
  }
  func.func @transform_7(%arg0: i32) -> (i32, i32, i32, i32) {
    %c0_i32 = arith.constant 0 : i32
    %c0_i32_0 = arith.constant 0 : i32
    %c0_i32_1 = arith.constant 0 : i32
    %c0_i32_2 = arith.constant 0 : i32
    return %arg0, %c0_i32, %c0_i32_0, %c0_i32_1 : i32, i32, i32, i32
  }
}

</mosaic_0001>

<llo_original>
// kernel: tpu_custom_call.1
$region0: #{tpu_custom_call.1}
  #allocation0 [shape = 'u32[]', space=smem, size = 0x4, offset = 0x4, fixed_abs, tag = 'smem constant byte address 0x4 - core index']
  #allocation1 [shape = 'u32[144,128]{1,0:T(1,128)}', space=vmem, size = 0x12000, scoped, tag = 'internal scratch']
  #allocation2 [shape = 'f32[10,10,4]{2,1,0:T(8,128)}', space=vmem, size = 0x14000, scoped, tag = 'scratch operand']
  #allocation3 [shape = 'f32[10,10,8]{2,1,0:T(8,128)}', space=vmem, size = 0x14000, scoped, tag = 'scratch operand']
  %s0 = inlined_call_operand.vmem [shape: f32[2,16,16,4], index: 0, kind: input, shape index: {}]
  %s1 = inlined_call_operand.vmem [shape: f32[36,8], index: 1, kind: input, shape index: {}]
  %s2 = inlined_call_operand.vmem [shape: f32[1,8], index: 2, kind: input, shape index: {}]
  %s3 = inlined_call_operand.vmem [shape: f32[1,8], index: 3, kind: input, shape index: {}]
  %s4 = inlined_call_operand.vmem [shape: f32[72,128], index: 4, kind: input, shape index: {}]
  %s5 = inlined_call_operand.vmem [shape: f32[1,128], index: 5, kind: input, shape index: {}]
  %s6 = inlined_call_operand.vmem [shape: f32[1,128], index: 6, kind: input, shape index: {}]
  %s7 = inlined_call_operand.hbm [shape: f32[2,8,8,128], index: 7, kind: output, shape index: {}]
  %s8 = sld [smem:[#allocation0]]
  $region61: #{tpu_custom_call.1} parent=0
    _
  %s10 = ssub.s32 1, %s8
  %s11 = scalar_select 0, %s10, %s8
  $region1: #{tpu_custom_call.1} parent=0
    #allocation4 [shape = 'u8[65536]{0}', space=vmem, size = 0x10000, scoped, tag = 'output window, operand 0']
    #allocation5 [shape = 's32[2]{0}', space=sflag, size = 0x8, scoped, tag = 'scoped memory for tpu_custom_call.1']
    %12 = vsyncpa [#allocation5], 0
    %s13 = scalar_lea.sflag [#allocation5], 1
    %14 = vsyncpa %s13, 0
    loop: start=0, step=1, limit=4
    $region2: #{tpu_custom_call.1} parent=1 // loop_pre_header
      _
    $region3: #{tpu_custom_call.1} parent=1 // loop_header
      %s16 = sphi 0, %s20
      %p17 = scmp.ge.s32.totalorder %s16, 4
      %s26 = sphi 0, %s28
      %s29 = sphi 0, %s26
      %s30 = sphi 0, %s29
      %s46 = sphi 0, %s30
      %s50 = sphi 0, %s50
      %s52 = sphi 0, %s50
      %s53 = sphi 0, %s52
      %s67 = sphi 0, %s53
      %s71 = sphi 0, %s71
      %s73 = sphi 0, %s71
      %s74 = sphi 0, %s73
      %s88 = sphi 0, %s74
      %s92 = sphi 0, %s92
      %s94 = sphi 0, %s92
      %s95 = sphi 0, %s94
      %s109 = sphi 0, %s95
      %s113 = sphi 0, %s113
      %s115 = sphi 0, %s113
      %s116 = sphi 0, %s115
      %s130 = sphi 0, %s116
      %s134 = sphi 0, %s134
      %s136 = sphi 0, %s134
      %s137 = sphi 0, %s136
      %s151 = sphi 0, %s137
      %s155 = sphi 0, %s155
      %s157 = sphi 0, %s155
      %s158 = sphi 0, %s157
      %s172 = sphi 0, %s158
      %s178 = sphi 0, %s180
      %s181 = sphi 0, %s178
      %s182 = sphi 0, %s181
      %s198 = sphi 0, %s182
    $region4: #{tpu_custom_call.1} parent=1 // loop_header_branch
      %19 = sbr.rel (%p17) target = $region8
    $region5: #{tpu_custom_call.1} parent=1 // loop_body
      %s21 = ssub.s32 %s16, 1
      %s22 = ssub.s32 %s16, 2
      %s23 = sadd.s32 %s16, 1
      %s24 = ssub.s32 %s16, %s23
      %p25 = scmp.eq.s32.totalorder %s24, 0
      %s27 = sadd.s32 %s26, 1
      %s28 = scalar_select %p25, %s26, %s27
      %p31 = pneg %p25
      %p32 = scmp.eq.s32.totalorder %s16, 1
      %p33 = por %p31, %p32
      %p34 = scmp.ne.s32.totalorder %s26, %s29
      %p35 = scmp.eq.s32.totalorder %s16, 0
      %p36 = por %p34, %p35
      %p37 = scmp.ne.s32.totalorder %s26, %s29
      %p38 = scmp.eq.s32.totalorder %s21, 1
      %p39 = por %p37, %p38
      %p40 = scmp.ne.s32.totalorder %s29, %s30
      %p41 = scmp.eq.s32.totalorder %s21, 0
      %p42 = por %p40, %p41
      %p43 = scmp.ne.s32.totalorder %s29, %s30
      %p44 = scmp.eq.s32.totalorder %s22, 1
      %p45 = por %p43, %p44
      %p47 = scmp.ne.s32.totalorder %s30, %s46
      %p48 = scmp.eq.s32.totalorder %s22, 0
      %p49 = por %p47, %p48
      %s51 = sadd.s32 %s50, 1
      %p54 = scmp.eq.s32.totalorder %s16, 1
      %p55 = scmp.ne.s32.totalorder %s50, %s52
      %p56 = scmp.eq.s32.totalorder %s16, 0
      %p57 = por %p55, %p56
      %p58 = scmp.ne.s32.totalorder %s50, %s52
      %p59 = scmp.eq.s32.totalorder %s21, 1
      %p60 = por %p58, %p59
      %p61 = scmp.ne.s32.totalorder %s52, %s53
      %p62 = scmp.eq.s32.totalorder %s21, 0
      %p63 = por %p61, %p62
      %p64 = scmp.ne.s32.totalorder %s52, %s53
      %p65 = scmp.eq.s32.totalorder %s22, 1
      %p66 = por %p64, %p65
      %p68 = scmp.ne.s32.totalorder %s53, %s67
      %p69 = scmp.eq.s32.totalorder %s22, 0
      %p70 = por %p68, %p69
      %s72 = sadd.s32 %s71, 1
      %p75 = scmp.eq.s32.totalorder %s16, 1
      %p76 = scmp.ne.s32.totalorder %s71, %s73
      %p77 = scmp.eq.s32.totalorder %s16, 0
      %p78 = por %p76, %p77
      %p79 = scmp.ne.s32.totalorder %s71, %s73
      %p80 = scmp.eq.s32.totalorder %s21, 1
      %p81 = por %p79, %p80
      %p82 = scmp.ne.s32.totalorder %s73, %s74
      %p83 = scmp.eq.s32.totalorder %s21, 0
      %p84 = por %p82, %p83
      %p85 = scmp.ne.s32.totalorder %s73, %s74
      %p86 = scmp.eq.s32.totalorder %s22, 1
      %p87 = por %p85, %p86
      %p89 = scmp.ne.s32.totalorder %s74, %s88
      %p90 = scmp.eq.s32.totalorder %s22, 0
      %p91 = por %p89, %p90
      %s93 = sadd.s32 %s92, 1
      %p96 = scmp.eq.s32.totalorder %s16, 1
      %p97 = scmp.ne.s32.totalorder %s92, %s94
      %p98 = scmp.eq.s32.totalorder %s16, 0
      %p99 = por %p97, %p98
      %p100 = scmp.ne.s32.totalorder %s92, %s94
      %p101 = scmp.eq.s32.totalorder %s21, 1
      %p102 = por %p100, %p101
      %p103 = scmp.ne.s32.totalorder %s94, %s95
      %p104 = scmp.eq.s32.totalorder %s21, 0
      %p105 = por %p103, %p104
      %p106 = scmp.ne.s32.totalorder %s94, %s95
      %p107 = scmp.eq.s32.totalorder %s22, 1
      %p108 = por %p106, %p107
      %p110 = scmp.ne.s32.totalorder %s95, %s109
      %p111 = scmp.eq.s32.totalorder %s22, 0
      %p112 = por %p110, %p111
      %s114 = sadd.s32 %s113, 1
      %p117 = scmp.eq.s32.totalorder %s16, 1
      %p118 = scmp.ne.s32.totalorder %s113, %s115
      %p119 = scmp.eq.s32.totalorder %s16, 0
      %p120 = por %p118, %p119
      %p121 = scmp.ne.s32.totalorder %s113, %s115
      %p122 = scmp.eq.s32.totalorder %s21, 1
      %p123 = por %p121, %p122
      %p124 = scmp.ne.s32.totalorder %s115, %s116
      %p125 = scmp.eq.s32.totalorder %s21, 0
      %p126 = por %p124, %p125
      %p127 = scmp.ne.s32.totalorder %s115, %s116
      %p128 = scmp.eq.s32.totalorder %s22, 1
      %p129 = por %p127, %p128
      %p131 = scmp.ne.s32.totalorder %s116, %s130
      %p132 = scmp.eq.s32.totalorder %s22, 0
      %p133 = por %p131, %p132
      %s135 = sadd.s32 %s134, 1
      %p138 = scmp.eq.s32.totalorder %s16, 1
      %p139 = scmp.ne.s32.totalorder %s134, %s136
      %p140 = scmp.eq.s32.totalorder %s16, 0
      %p141 = por %p139, %p140
      %p142 = scmp.ne.s32.totalorder %s134, %s136
      %p143 = scmp.eq.s32.totalorder %s21, 1
      %p144 = por %p142, %p143
      %p145 = scmp.ne.s32.totalorder %s136, %s137
      %p146 = scmp.eq.s32.totalorder %s21, 0
      %p147 = por %p145, %p146
      %p148 = scmp.ne.s32.totalorder %s136, %s137
      %p149 = scmp.eq.s32.totalorder %s22, 1
      %p150 = por %p148, %p149
      %p152 = scmp.ne.s32.totalorder %s137, %s151
      %p153 = scmp.eq.s32.totalorder %s22, 0
      %p154 = por %p152, %p153
      %s156 = sadd.s32 %s155, 1
      %p159 = scmp.eq.s32.totalorder %s16, 1
      %p160 = scmp.ne.s32.totalorder %s155, %s157
      %p161 = scmp.eq.s32.totalorder %s16, 0
      %p162 = por %p160, %p161
      %p163 = scmp.ne.s32.totalorder %s155, %s157
      %p164 = scmp.eq.s32.totalorder %s21, 1
      %p165 = por %p163, %p164
      %p166 = scmp.ne.s32.totalorder %s157, %s158
      %p167 = scmp.eq.s32.totalorder %s21, 0
      %p168 = por %p166, %p167
      %p169 = scmp.ne.s32.totalorder %s157, %s158
      %p170 = scmp.eq.s32.totalorder %s22, 1
      %p171 = por %p169, %p170
      %p173 = scmp.ne.s32.totalorder %s158, %s172
      %p174 = scmp.eq.s32.totalorder %s22, 0
      %p175 = por %p173, %p174
      %s176 = ssub.s32 %s16, %s23
      %p177 = scmp.eq.s32.totalorder %s176, 0
      %s179 = sadd.s32 %s178, 1
      %s180 = scalar_select %p177, %s178, %s179
      %p183 = pneg %p177
      %p184 = scmp.eq.s32.totalorder %s16, 1
      %p185 = por %p183, %p184
      %p186 = scmp.ne.s32.totalorder %s178, %s181
      %p187 = scmp.eq.s32.totalorder %s16, 0
      %p188 = por %p186, %p187
      %p189 = scmp.ne.s32.totalorder %s178, %s181
      %p190 = scmp.eq.s32.totalorder %s21, 1
      %p191 = por %p189, %p190
      %p192 = scmp.ne.s32.totalorder %s181, %s182
      %p193 = scmp.eq.s32.totalorder %s21, 0
      %p194 = por %p192, %p193
      %p195 = scmp.ne.s32.totalorder %s181, %s182
      %p196 = scmp.eq.s32.totalorder %s22, 1
      %p197 = por %p195, %p196
      %p199 = scmp.ne.s32.totalorder %s182, %s198
      %p200 = scmp.eq.s32.totalorder %s22, 0
      %p201 = por %p199, %p200
      %p202 = scmp.le.s32.totalorder 1, %s16
      %p203 = scmp.lt.s32.totalorder %s16, 3
      %p204 = pnand %p202, %p203
      %p205 = pneg %p204
      // Predicated region
      $region9: #{tpu_custom_call.1} parent=5 // pred_check
        _
      $region10: #{tpu_custom_call.1} parent=5 // pred_check_branch
        %207 = sbr.rel (%p204) target = $region12
      $region11: #{tpu_custom_call.1} parent=5 // pred_region
        %s208 = ssub.s32 %s16, 1
        // Predicated region
        $region13: #{tpu_custom_call.1} parent=11 // pred_check
          %p209 = pneg %p63
        $region14: #{tpu_custom_call.1} parent=11 // pred_check_branch
          %211 = sbr.rel (%p209) target = $region16
        $region15: #{tpu_custom_call.1} parent=11 // pred_region
          _
        $region16: #{tpu_custom_call.1} parent=11 // pred_fallthru
          _
        // Predicated region
        $region17: #{tpu_custom_call.1} parent=11 // pred_check
          %p212 = pneg %p84
        $region18: #{tpu_custom_call.1} parent=11 // pred_check_branch
          %214 = sbr.rel (%p212) target = $region20
        $region19: #{tpu_custom_call.1} parent=11 // pred_region
          _
        $region20: #{tpu_custom_call.1} parent=11 // pred_fallthru
          _
        // Predicated region
        $region21: #{tpu_custom_call.1} parent=11 // pred_check
          %p215 = pneg %p105
        $region22: #{tpu_custom_call.1} parent=11 // pred_check_branch
          %217 = sbr.rel (%p215) target = $region24
        $region23: #{tpu_custom_call.1} parent=11 // pred_region
          _
        $region24: #{tpu_custom_call.1} parent=11 // pred_fallthru
          _
        // Predicated region
        $region25: #{tpu_custom_call.1} parent=11 // pred_check
          %p218 = pneg %p126
        $region26: #{tpu_custom_call.1} parent=11 // pred_check_branch
          %220 = sbr.rel (%p218) target = $region28
        $region27: #{tpu_custom_call.1} parent=11 // pred_region
          _
        $region28: #{tpu_custom_call.1} parent=11 // pred_fallthru
          _
        // Predicated region
        $region29: #{tpu_custom_call.1} parent=11 // pred_check
          %p221 = pneg %p147
        $region30: #{tpu_custom_call.1} parent=11 // pred_check_branch
          %223 = sbr.rel (%p221) target = $region32
        $region31: #{tpu_custom_call.1} parent=11 // pred_region
          _
        $region32: #{tpu_custom_call.1} parent=11 // pred_fallthru
          _
        // Predicated region
        $region33: #{tpu_custom_call.1} parent=11 // pred_check
          %p224 = pneg %p168
        $region34: #{tpu_custom_call.1} parent=11 // pred_check_branch
          %226 = sbr.rel (%p224) target = $region36
        $region35: #{tpu_custom_call.1} parent=11 // pred_region
          _
        $region36: #{tpu_custom_call.1} parent=11 // pred_fallthru
          _
      $region12: #{tpu_custom_call.1} parent=5 // pred_fallthru
        _
      %p227 = scmp.lt.s32.totalorder %s16, 2
      // Predicated region
      $region37: #{tpu_custom_call.1} parent=5 // pred_check
        %p228 = pneg %p227
      $region38: #{tpu_custom_call.1} parent=5 // pred_check_branch
        %230 = sbr.rel (%p228) target = $region40
      $region39: #{tpu_custom_call.1} parent=5 // pred_region
        // Predicated region
        $region41: #{tpu_custom_call.1} parent=39 // pred_check
          %p231 = pneg %p36
        $region42: #{tpu_custom_call.1} parent=39 // pred_check_branch
          %233 = sbr.rel (%p231) target = $region44
        $region43: #{tpu_custom_call.1} parent=39 // pred_region
          %p234 = scmp.lt.s32.totalorder %s16, 1
          %s235 = scalar_select %p234, %s16, 1
          %s236 = smul.addr %s235, 32
          %s237 = smul.addr %s236, 8
          %s238 = scalar_lea.vmem %s0, %s237
        $region44: #{tpu_custom_call.1} parent=39 // pred_fallthru
          _
      $region40: #{tpu_custom_call.1} parent=5 // pred_fallthru
        _
      %p239 = scmp.le.s32.totalorder 1, %s16
      %p240 = scmp.lt.s32.totalorder %s16, 3
      %p241 = pnand %p239, %p240
      %p242 = pneg %p241
      // Predicated region
      $region45: #{tpu_custom_call.1} parent=5 // pred_check
        _
      $region46: #{tpu_custom_call.1} parent=5 // pred_check_branch
        %244 = sbr.rel (%p241) target = $region48
      $region47: #{tpu_custom_call.1} parent=5 // pred_region
        %s245 = ssub.s32 %s16, 1
        %p246 = scmp.lt.s32.totalorder %s21, 1
        %s247 = scalar_select %p246, %s21, 1
        %s248 = smul.addr %s247, 32
        %s249 = smul.addr %s248, 8
        %s250 = scalar_lea.vmem %s0, %s249
        %p251 = pneg %p42
        %p252 = pneg %p39
        %p253 = pneg %p63
        %p254 = pneg %p60
        %p255 = pneg %p84
        %p256 = pneg %p81
        %p257 = pneg %p105
        %p258 = pneg %p102
        %p259 = pneg %p126
        %p260 = pneg %p123
        %p261 = pneg %p147
        %p262 = pneg %p144
        %p263 = pneg %p168
        %p264 = pneg %p165
        %p265 = pneg %p194
        %p266 = pneg %p191
        %s267 = sand.u32 %s181, 1
        %s268 = scalar_lea.sflag [#allocation5], %s267
        %s269 = sand.u32 %s181, 1
        %s270 = smul.addr %s269, 64
        %s271 = scalar_lea.vmem [#allocation4], %s270
        %p272 = scmp.lt.s32.totalorder %s21, 1
        %s273 = scalar_select %p272, %s21, 1
        %s274 = smul.addr %s273, 32
        %s275 = smul.addr %s274, 8
        %s276 = scalar_lea.vmem %s0, %s275
        %v277 = vld [vmem:[%s276] sm:$0xff]
        %v278 = vld [vmem:[%s276 + $0x8] sm:$0xff]
        %v279 = vld [vmem:[%s276 + $0x10] sm:$0xff]
        %v280 = vld [vmem:[%s276 + $0x18] sm:$0xff]
        %v281 = vld [vmem:[%s276 + $0x20] sm:$0xff]
        %v282 = vld [vmem:[%s276 + $0x28] sm:$0xff]
        %v283 = vld [vmem:[%s276 + $0x30] sm:$0xff]
        %v284 = vld [vmem:[%s276 + $0x38] sm:$0xff]
        %v285 = vld [vmem:[%s276 + $0x40] sm:$0xff]
        %v286 = vld [vmem:[%s276 + $0x48] sm:$0xff]
        %v287 = vld [vmem:[%s276 + $0x50] sm:$0xff]
        %v288 = vld [vmem:[%s276 + $0x58] sm:$0xff]
        %v289 = vld [vmem:[%s276 + $0x60] sm:$0xff]
        %v290 = vld [vmem:[%s276 + $0x68] sm:$0xff]
        %v291 = vld [vmem:[%s276 + $0x70] sm:$0xff]
        %v292 = vld [vmem:[%s276 + $0x78] sm:$0xff]
        %v293 = vld [vmem:[%s276 + $0x80] sm:$0xff]
        %v294 = vld [vmem:[%s276 + $0x88] sm:$0xff]
        %v295 = vld [vmem:[%s276 + $0x90] sm:$0xff]
        %v296 = vld [vmem:[%s276 + $0x98] sm:$0xff]
        %v297 = vld [vmem:[%s276 + $0xa0] sm:$0xff]
        %v298 = vld [vmem:[%s276 + $0xa8] sm:$0xff]
        %v299 = vld [vmem:[%s276 + $0xb0] sm:$0xff]
        %v300 = vld [vmem:[%s276 + $0xb8] sm:$0xff]
        %v301 = vld [vmem:[%s276 + $0xc0] sm:$0xff]
        %v302 = vld [vmem:[%s276 + $0xc8] sm:$0xff]
        %v303 = vld [vmem:[%s276 + $0xd0] sm:$0xff]
        %v304 = vld [vmem:[%s276 + $0xd8] sm:$0xff]
        %v305 = vld [vmem:[%s276 + $0xe0] sm:$0xff]
        %v306 = vld [vmem:[%s276 + $0xe8] sm:$0xff]
        %v307 = vld [vmem:[%s276 + $0xf0] sm:$0xff]
        %v308 = vld [vmem:[%s276 + $0xf8] sm:$0xff]
        %v341 = vcombine.high %v277, %v277
        %v343 = vunpack.c.l.s4 1983009808
        %v344 = vunpack.c.0.s8 %v343
        %v345 = vlaneseq
        %v346 = vshrl.u32 %v345, 7
        %v347 = vsub.s32 %v344, %v346
        %v348 = vrot.slane %v277, %v347
        %v350 = vunpack.c.l.s4 1983009808
        %v351 = vunpack.c.0.s8 %v350
        %v352 = vlaneseq
        %v353 = vshrl.u32 %v352, 7
        %v354 = vsub.s32 %v351, %v353
        %v355 = vrot.slane %v341, %v354
        %v356 = vcombine.high %v348, %v348
        %v357 = vcombine.high %v355, %v355
        %v358 = vcombine.high %v278, %v278
        %v360 = vunpack.c.l.s4 1983009808
        %v361 = vunpack.c.0.s8 %v360
        %v362 = vlaneseq
        %v363 = vshrl.u32 %v362, 7
        %v364 = vsub.s32 %v361, %v363
        %v365 = vrot.slane %v278, %v364
        %v367 = vunpack.c.l.s4 1983009808
        %v368 = vunpack.c.0.s8 %v367
        %v369 = vlaneseq
        %v370 = vshrl.u32 %v369, 7
        %v371 = vsub.s32 %v368, %v370
        %v372 = vrot.slane %v358, %v371
        %v373 = vcombine.high %v365, %v365
        %v374 = vcombine.high %v372, %v372
        %v375 = vcombine.high %v279, %v279
        %v377 = vunpack.c.l.s4 1983009808
        %v378 = vunpack.c.0.s8 %v377
        %v379 = vlaneseq
        %v380 = vshrl.u32 %v379, 7
        %v381 = vsub.s32 %v378, %v380
        %v382 = vrot.slane %v279, %v381
        %v384 = vunpack.c.l.s4 1983009808
        %v385 = vunpack.c.0.s8 %v384
        %v386 = vlaneseq
        %v387 = vshrl.u32 %v386, 7
        %v388 = vsub.s32 %v385, %v387
        %v389 = vrot.slane %v375, %v388
        %v390 = vcombine.high %v382, %v382
        %v391 = vcombine.high %v389, %v389
        %v392 = vcombine.high %v280, %v280
        %v394 = vunpack.c.l.s4 1983009808
        %v395 = vunpack.c.0.s8 %v394
        %v396 = vlaneseq
        %v397 = vshrl.u32 %v396, 7
        %v398 = vsub.s32 %v395, %v397
        %v399 = vrot.slane %v280, %v398
        %v401 = vunpack.c.l.s4 1983009808
        %v402 = vunpack.c.0.s8 %v401
        %v403 = vlaneseq
        %v404 = vshrl.u32 %v403, 7
        %v405 = vsub.s32 %v402, %v404
        %v406 = vrot.slane %v392, %v405
        %v407 = vcombine.high %v399, %v399
        %v408 = vcombine.high %v406, %v406
        %v409 = vcombine.high %v281, %v281
        %v411 = vunpack.c.l.s4 1983009808
        %v412 = vunpack.c.0.s8 %v411
        %v413 = vlaneseq
        %v414 = vshrl.u32 %v413, 7
        %v415 = vsub.s32 %v412, %v414
        %v416 = vrot.slane %v281, %v415
        %v418 = vunpack.c.l.s4 1983009808
        %v419 = vunpack.c.0.s8 %v418
        %v420 = vlaneseq
        %v421 = vshrl.u32 %v420, 7
        %v422 = vsub.s32 %v419, %v421
        %v423 = vrot.slane %v409, %v422
        %v424 = vcombine.high %v416, %v416
        %v425 = vcombine.high %v423, %v423
        %v426 = vcombine.high %v282, %v282
        %v428 = vunpack.c.l.s4 1983009808
        %v429 = vunpack.c.0.s8 %v428
        %v430 = vlaneseq
        %v431 = vshrl.u32 %v430, 7
        %v432 = vsub.s32 %v429, %v431
        %v433 = vrot.slane %v282, %v432
        %v435 = vunpack.c.l.s4 1983009808
        %v436 = vunpack.c.0.s8 %v435
        %v437 = vlaneseq
        %v438 = vshrl.u32 %v437, 7
        %v439 = vsub.s32 %v436, %v438
        %v440 = vrot.slane %v426, %v439
        %v441 = vcombine.high %v433, %v433
        %v442 = vcombine.high %v440, %v440
        %v443 = vcombine.high %v283, %v283
        %v445 = vunpack.c.l.s4 1983009808
        %v446 = vunpack.c.0.s8 %v445
        %v447 = vlaneseq
        %v448 = vshrl.u32 %v447, 7
        %v449 = vsub.s32 %v446, %v448
        %v450 = vrot.slane %v283, %v449
        %v452 = vunpack.c.l.s4 1983009808
        %v453 = vunpack.c.0.s8 %v452
        %v454 = vlaneseq
        %v455 = vshrl.u32 %v454, 7
        %v456 = vsub.s32 %v453, %v455
        %v457 = vrot.slane %v443, %v456
        %v458 = vcombine.high %v450, %v450
        %v459 = vcombine.high %v457, %v457
        %v460 = vcombine.high %v284, %v284
        %v462 = vunpack.c.l.s4 1983009808
        %v463 = vunpack.c.0.s8 %v462
        %v464 = vlaneseq
        %v465 = vshrl.u32 %v464, 7
        %v466 = vsub.s32 %v463, %v465
        %v467 = vrot.slane %v284, %v466
        %v469 = vunpack.c.l.s4 1983009808
        %v470 = vunpack.c.0.s8 %v469
        %v471 = vlaneseq
        %v472 = vshrl.u32 %v471, 7
        %v473 = vsub.s32 %v470, %v472
        %v474 = vrot.slane %v460, %v473
        %v475 = vcombine.high %v467, %v467
        %v476 = vcombine.high %v474, %v474
        %v477 = vcombine.high %v285, %v285
        %v479 = vunpack.c.l.s4 1983009808
        %v480 = vunpack.c.0.s8 %v479
        %v481 = vlaneseq
        %v482 = vshrl.u32 %v481, 7
        %v483 = vsub.s32 %v480, %v482
        %v484 = vrot.slane %v285, %v483
        %v486 = vunpack.c.l.s4 1983009808
        %v487 = vunpack.c.0.s8 %v486
        %v488 = vlaneseq
        %v489 = vshrl.u32 %v488, 7
        %v490 = vsub.s32 %v487, %v489
        %v491 = vrot.slane %v477, %v490
        %v492 = vcombine.high %v484, %v484
        %v493 = vcombine.high %v491, %v491
        %v494 = vcombine.high %v286, %v286
        %v496 = vunpack.c.l.s4 1983009808
        %v497 = vunpack.c.0.s8 %v496
        %v498 = vlaneseq
        %v499 = vshrl.u32 %v498, 7
        %v500 = vsub.s32 %v497, %v499
        %v501 = vrot.slane %v286, %v500
        %v503 = vunpack.c.l.s4 1983009808
        %v504 = vunpack.c.0.s8 %v503
        %v505 = vlaneseq
        %v506 = vshrl.u32 %v505, 7
        %v507 = vsub.s32 %v504, %v506
        %v508 = vrot.slane %v494, %v507
        %v509 = vcombine.high %v501, %v501
        %v510 = vcombine.high %v508, %v508
        %v511 = vcombine.high %v287, %v287
        %v513 = vunpack.c.l.s4 1983009808
        %v514 = vunpack.c.0.s8 %v513
        %v515 = vlaneseq
        %v516 = vshrl.u32 %v515, 7
        %v517 = vsub.s32 %v514, %v516
        %v518 = vrot.slane %v287, %v517
        %v520 = vunpack.c.l.s4 1983009808
        %v521 = vunpack.c.0.s8 %v520
        %v522 = vlaneseq
        %v523 = vshrl.u32 %v522, 7
        %v524 = vsub.s32 %v521, %v523
        %v525 = vrot.slane %v511, %v524
        %v526 = vcombine.high %v518, %v518
        %v527 = vcombine.high %v525, %v525
        %v528 = vcombine.high %v288, %v288
        %v530 = vunpack.c.l.s4 1983009808
        %v531 = vunpack.c.0.s8 %v530
        %v532 = vlaneseq
        %v533 = vshrl.u32 %v532, 7
        %v534 = vsub.s32 %v531, %v533
        %v535 = vrot.slane %v288, %v534
        %v537 = vunpack.c.l.s4 1983009808
        %v538 = vunpack.c.0.s8 %v537
        %v539 = vlaneseq
        %v540 = vshrl.u32 %v539, 7
        %v541 = vsub.s32 %v538, %v540
        %v542 = vrot.slane %v528, %v541
        %v543 = vcombine.high %v535, %v535
        %v544 = vcombine.high %v542, %v542
        %v545 = vcombine.high %v289, %v289
        %v547 = vunpack.c.l.s4 1983009808
        %v548 = vunpack.c.0.s8 %v547
        %v549 = vlaneseq
        %v550 = vshrl.u32 %v549, 7
        %v551 = vsub.s32 %v548, %v550
        %v552 = vrot.slane %v289, %v551
        %v554 = vunpack.c.l.s4 1983009808
        %v555 = vunpack.c.0.s8 %v554
        %v556 = vlaneseq
        %v557 = vshrl.u32 %v556, 7
        %v558 = vsub.s32 %v555, %v557
        %v559 = vrot.slane %v545, %v558
        %v560 = vcombine.high %v552, %v552
        %v561 = vcombine.high %v559, %v559
        %v562 = vcombine.high %v290, %v290
        %v564 = vunpack.c.l.s4 1983009808
        %v565 = vunpack.c.0.s8 %v564
        %v566 = vlaneseq
        %v567 = vshrl.u32 %v566, 7
        %v568 = vsub.s32 %v565, %v567
        %v569 = vrot.slane %v290, %v568
        %v571 = vunpack.c.l.s4 1983009808
        %v572 = vunpack.c.0.s8 %v571
        %v573 = vlaneseq
        %v574 = vshrl.u32 %v573, 7
        %v575 = vsub.s32 %v572, %v574
        %v576 = vrot.slane %v562, %v575
        %v577 = vcombine.high %v569, %v569
        %v578 = vcombine.high %v576, %v576
        %v579 = vcombine.high %v291, %v291
        %v581 = vunpack.c.l.s4 1983009808
        %v582 = vunpack.c.0.s8 %v581
        %v583 = vlaneseq
        %v584 = vshrl.u32 %v583, 7
        %v585 = vsub.s32 %v582, %v584
        %v586 = vrot.slane %v291, %v585
        %v588 = vunpack.c.l.s4 1983009808
        %v589 = vunpack.c.0.s8 %v588
        %v590 = vlaneseq
        %v591 = vshrl.u32 %v590, 7
        %v592 = vsub.s32 %v589, %v591
        %v593 = vrot.slane %v579, %v592
        %v594 = vcombine.high %v586, %v586
        %v595 = vcombine.high %v593, %v593
        %v596 = vcombine.high %v292, %v292
        %v598 = vunpack.c.l.s4 1983009808
        %v599 = vunpack.c.0.s8 %v598
        %v600 = vlaneseq
        %v601 = vshrl.u32 %v600, 7
        %v602 = vsub.s32 %v599, %v601
        %v603 = vrot.slane %v292, %v602
        %v605 = vunpack.c.l.s4 1983009808
        %v606 = vunpack.c.0.s8 %v605
        %v607 = vlaneseq
        %v608 = vshrl.u32 %v607, 7
        %v609 = vsub.s32 %v606, %v608
        %v610 = vrot.slane %v596, %v609
        %v611 = vcombine.high %v603, %v603
        %v612 = vcombine.high %v610, %v610
        %v613 = vcombine.high %v293, %v293
        %v615 = vunpack.c.l.s4 1983009808
        %v616 = vunpack.c.0.s8 %v615
        %v617 = vlaneseq
        %v618 = vshrl.u32 %v617, 7
        %v619 = vsub.s32 %v616, %v618
        %v620 = vrot.slane %v293, %v619
        %v622 = vunpack.c.l.s4 1983009808
        %v623 = vunpack.c.0.s8 %v622
        %v624 = vlaneseq
        %v625 = vshrl.u32 %v624, 7
        %v626 = vsub.s32 %v623, %v625
        %v627 = vrot.slane %v613, %v626
        %v628 = vcombine.high %v620, %v620
        %v629 = vcombine.high %v627, %v627
        %v630 = vcombine.high %v294, %v294
        %v632 = vunpack.c.l.s4 1983009808
        %v633 = vunpack.c.0.s8 %v632
        %v634 = vlaneseq
        %v635 = vshrl.u32 %v634, 7
        %v636 = vsub.s32 %v633, %v635
        %v637 = vrot.slane %v294, %v636
        %v639 = vunpack.c.l.s4 1983009808
        %v640 = vunpack.c.0.s8 %v639
        %v641 = vlaneseq
        %v642 = vshrl.u32 %v641, 7
        %v643 = vsub.s32 %v640, %v642
        %v644 = vrot.slane %v630, %v643
        %v645 = vcombine.high %v637, %v637
        %v646 = vcombine.high %v644, %v644
        %v647 = vcombine.high %v295, %v295
        %v649 = vunpack.c.l.s4 1983009808
        %v650 = vunpack.c.0.s8 %v649
        %v651 = vlaneseq
        %v652 = vshrl.u32 %v651, 7
        %v653 = vsub.s32 %v650, %v652
        %v654 = vrot.slane %v295, %v653
        %v656 = vunpack.c.l.s4 1983009808
        %v657 = vunpack.c.0.s8 %v656
        %v658 = vlaneseq
        %v659 = vshrl.u32 %v658, 7
        %v660 = vsub.s32 %v657, %v659
        %v661 = vrot.slane %v647, %v660
        %v662 = vcombine.high %v654, %v654
        %v663 = vcombine.high %v661, %v661
        %v664 = vcombine.high %v296, %v296
        %v666 = vunpack.c.l.s4 1983009808
        %v667 = vunpack.c.0.s8 %v666
        %v668 = vlaneseq
        %v669 = vshrl.u32 %v668, 7
        %v670 = vsub.s32 %v667, %v669
        %v671 = vrot.slane %v296, %v670
        %v673 = vunpack.c.l.s4 1983009808
        %v674 = vunpack.c.0.s8 %v673
        %v675 = vlaneseq
        %v676 = vshrl.u32 %v675, 7
        %v677 = vsub.s32 %v674, %v676
        %v678 = vrot.slane %v664, %v677
        %v679 = vcombine.high %v671, %v671
        %v680 = vcombine.high %v678, %v678
        %v681 = vcombine.high %v297, %v297
        %v683 = vunpack.c.l.s4 1983009808
        %v684 = vunpack.c.0.s8 %v683
        %v685 = vlaneseq
        %v686 = vshrl.u32 %v685, 7
        %v687 = vsub.s32 %v684, %v686
        %v688 = vrot.slane %v297, %v687
        %v690 = vunpack.c.l.s4 1983009808
        %v691 = vunpack.c.0.s8 %v690
        %v692 = vlaneseq
        %v693 = vshrl.u32 %v692, 7
        %v694 = vsub.s32 %v691, %v693
        %v695 = vrot.slane %v681, %v694
        %v696 = vcombine.high %v688, %v688
        %v697 = vcombine.high %v695, %v695
        %v698 = vcombine.high %v298, %v298
        %v700 = vunpack.c.l.s4 1983009808
        %v701 = vunpack.c.0.s8 %v700
        %v702 = vlaneseq
        %v703 = vshrl.u32 %v702, 7
        %v704 = vsub.s32 %v701, %v703
        %v705 = vrot.slane %v298, %v704
        %v707 = vunpack.c.l.s4 1983009808
        %v708 = vunpack.c.0.s8 %v707
        %v709 = vlaneseq
        %v710 = vshrl.u32 %v709, 7
        %v711 = vsub.s32 %v708, %v710
        %v712 = vrot.slane %v698, %v711
        %v713 = vcombine.high %v705, %v705
        %v714 = vcombine.high %v712, %v712
        %v715 = vcombine.high %v299, %v299
        %v717 = vunpack.c.l.s4 1983009808
        %v718 = vunpack.c.0.s8 %v717
        %v719 = vlaneseq
        %v720 = vshrl.u32 %v719, 7
        %v721 = vsub.s32 %v718, %v720
        %v722 = vrot.slane %v299, %v721
        %v724 = vunpack.c.l.s4 1983009808
        %v725 = vunpack.c.0.s8 %v724
        %v726 = vlaneseq
        %v727 = vshrl.u32 %v726, 7
        %v728 = vsub.s32 %v725, %v727
        %v729 = vrot.slane %v715, %v728
        %v730 = vcombine.high %v722, %v722
        %v731 = vcombine.high %v729, %v729
        %v732 = vcombine.high %v300, %v300
        %v734 = vunpack.c.l.s4 1983009808
        %v735 = vunpack.c.0.s8 %v734
        %v736 = vlaneseq
        %v737 = vshrl.u32 %v736, 7
        %v738 = vsub.s32 %v735, %v737
        %v739 = vrot.slane %v300, %v738
        %v741 = vunpack.c.l.s4 1983009808
        %v742 = vunpack.c.0.s8 %v741
        %v743 = vlaneseq
        %v744 = vshrl.u32 %v743, 7
        %v745 = vsub.s32 %v742, %v744
        %v746 = vrot.slane %v732, %v745
        %v747 = vcombine.high %v739, %v739
        %v748 = vcombine.high %v746, %v746
        %v749 = vcombine.high %v301, %v301
        %v751 = vunpack.c.l.s4 1983009808
        %v752 = vunpack.c.0.s8 %v751
        %v753 = vlaneseq
        %v754 = vshrl.u32 %v753, 7
        %v755 = vsub.s32 %v752, %v754
        %v756 = vrot.slane %v301, %v755
        %v758 = vunpack.c.l.s4 1983009808
        %v759 = vunpack.c.0.s8 %v758
        %v760 = vlaneseq
        %v761 = vshrl.u32 %v760, 7
        %v762 = vsub.s32 %v759, %v761
        %v763 = vrot.slane %v749, %v762
        %v764 = vcombine.high %v756, %v756
        %v765 = vcombine.high %v763, %v763
        %v766 = vcombine.high %v302, %v302
        %v768 = vunpack.c.l.s4 1983009808
        %v769 = vunpack.c.0.s8 %v768
        %v770 = vlaneseq
        %v771 = vshrl.u32 %v770, 7
        %v772 = vsub.s32 %v769, %v771
        %v773 = vrot.slane %v302, %v772
        %v775 = vunpack.c.l.s4 1983009808
        %v776 = vunpack.c.0.s8 %v775
        %v777 = vlaneseq
        %v778 = vshrl.u32 %v777, 7
        %v779 = vsub.s32 %v776, %v778
        %v780 = vrot.slane %v766, %v779
        %v781 = vcombine.high %v773, %v773
        %v782 = vcombine.high %v780, %v780
        %v783 = vcombine.high %v303, %v303
        %v785 = vunpack.c.l.s4 1983009808
        %v786 = vunpack.c.0.s8 %v785
        %v787 = vlaneseq
        %v788 = vshrl.u32 %v787, 7
        %v789 = vsub.s32 %v786, %v788
        %v790 = vrot.slane %v303, %v789
        %v792 = vunpack.c.l.s4 1983009808
        %v793 = vunpack.c.0.s8 %v792
        %v794 = vlaneseq
        %v795 = vshrl.u32 %v794, 7
        %v796 = vsub.s32 %v793, %v795
        %v797 = vrot.slane %v783, %v796
        %v798 = vcombine.high %v790, %v790
        %v799 = vcombine.high %v797, %v797
        %v800 = vcombine.high %v304, %v304
        %v802 = vunpack.c.l.s4 1983009808
        %v803 = vunpack.c.0.s8 %v802
        %v804 = vlaneseq
        %v805 = vshrl.u32 %v804, 7
        %v806 = vsub.s32 %v803, %v805
        %v807 = vrot.slane %v304, %v806
        %v809 = vunpack.c.l.s4 1983009808
        %v810 = vunpack.c.0.s8 %v809
        %v811 = vlaneseq
        %v812 = vshrl.u32 %v811, 7
        %v813 = vsub.s32 %v810, %v812
        %v814 = vrot.slane %v800, %v813
        %v815 = vcombine.high %v807, %v807
        %v816 = vcombine.high %v814, %v814
        %v817 = vcombine.high %v305, %v305
        %v819 = vunpack.c.l.s4 1983009808
        %v820 = vunpack.c.0.s8 %v819
        %v821 = vlaneseq
        %v822 = vshrl.u32 %v821, 7
        %v823 = vsub.s32 %v820, %v822
        %v824 = vrot.slane %v305, %v823
        %v826 = vunpack.c.l.s4 1983009808
        %v827 = vunpack.c.0.s8 %v826
        %v828 = vlaneseq
        %v829 = vshrl.u32 %v828, 7
        %v830 = vsub.s32 %v827, %v829
        %v831 = vrot.slane %v817, %v830
        %v832 = vcombine.high %v824, %v824
        %v833 = vcombine.high %v831, %v831
        %v834 = vcombine.high %v306, %v306
        %v836 = vunpack.c.l.s4 1983009808
        %v837 = vunpack.c.0.s8 %v836
        %v838 = vlaneseq
        %v839 = vshrl.u32 %v838, 7
        %v840 = vsub.s32 %v837, %v839
        %v841 = vrot.slane %v306, %v840
        %v843 = vunpack.c.l.s4 1983009808
        %v844 = vunpack.c.0.s8 %v843
        %v845 = vlaneseq
        %v846 = vshrl.u32 %v845, 7
        %v847 = vsub.s32 %v844, %v846
        %v848 = vrot.slane %v834, %v847
        %v849 = vcombine.high %v841, %v841
        %v850 = vcombine.high %v848, %v848
        %v851 = vcombine.high %v307, %v307
        %v853 = vunpack.c.l.s4 1983009808
        %v854 = vunpack.c.0.s8 %v853
        %v855 = vlaneseq
        %v856 = vshrl.u32 %v855, 7
        %v857 = vsub.s32 %v854, %v856
        %v858 = vrot.slane %v307, %v857
        %v860 = vunpack.c.l.s4 1983009808
        %v861 = vunpack.c.0.s8 %v860
        %v862 = vlaneseq
        %v863 = vshrl.u32 %v862, 7
        %v864 = vsub.s32 %v861, %v863
        %v865 = vrot.slane %v851, %v864
        %v866 = vcombine.high %v858, %v858
        %v867 = vcombine.high %v865, %v865
        %v868 = vcombine.high %v308, %v308
        %v870 = vunpack.c.l.s4 1983009808
        %v871 = vunpack.c.0.s8 %v870
        %v872 = vlaneseq
        %v873 = vshrl.u32 %v872, 7
        %v874 = vsub.s32 %v871, %v873
        %v875 = vrot.slane %v308, %v874
        %v877 = vunpack.c.l.s4 1983009808
        %v878 = vunpack.c.0.s8 %v877
        %v879 = vlaneseq
        %v880 = vshrl.u32 %v879, 7
        %v881 = vsub.s32 %v878, %v880
        %v882 = vrot.slane %v868, %v881
        %v883 = vcombine.high %v875, %v875
        %v884 = vcombine.high %v882, %v882
        %vm1013 = vcmask 25600
        %v1014 = vsel %vm1013, %v348, -inf
        %v1015 = vrot.slane %v1014, 4
        %v1016 = vmax.f32 %v1014, %v1015
        %v1017 = vrot.slane %v1016, 2
        %v1018 = vmax.f32 %v1016, %v1017
        %v1019 = vrot.slane %v1018, 1
        %v1020 = vmax.f32 %v1018, %v1019
        %v1021 = vsel %vm1013, %v356, -inf
        %v1022 = vrot.slane %v1021, 4
        %v1023 = vmax.f32 %v1021, %v1022
        %v1024 = vrot.slane %v1023, 2
        %v1025 = vmax.f32 %v1023, %v1024
        %v1026 = vrot.slane %v1025, 1
        %v1027 = vmax.f32 %v1025, %v1026
        %v1028 = vsel %vm1013, %v355, -inf
        %v1029 = vrot.slane %v1028, 4
        %v1030 = vmax.f32 %v1028, %v1029
        %v1031 = vrot.slane %v1030, 2
        %v1032 = vmax.f32 %v1030, %v1031
        %v1033 = vrot.slane %v1032, 1
        %v1034 = vmax.f32 %v1032, %v1033
        %v1035 = vsel %vm1013, %v357, -inf
        %v1036 = vrot.slane %v1035, 4
        %v1037 = vmax.f32 %v1035, %v1036
        %v1038 = vrot.slane %v1037, 2
        %v1039 = vmax.f32 %v1037, %v1038
        %v1040 = vrot.slane %v1039, 1
        %v1041 = vmax.f32 %v1039, %v1040
        %v1042 = vsel %vm1013, %v365, -inf
        %v1043 = vrot.slane %v1042, 4
        %v1044 = vmax.f32 %v1042, %v1043
        %v1045 = vrot.slane %v1044, 2
        %v1046 = vmax.f32 %v1044, %v1045
        %v1047 = vrot.slane %v1046, 1
        %v1048 = vmax.f32 %v1046, %v1047
        %v1049 = vsel %vm1013, %v373, -inf
        %v1050 = vrot.slane %v1049, 4
        %v1051 = vmax.f32 %v1049, %v1050
        %v1052 = vrot.slane %v1051, 2
        %v1053 = vmax.f32 %v1051, %v1052
        %v1054 = vrot.slane %v1053, 1
        %v1055 = vmax.f32 %v1053, %v1054
        %v1056 = vsel %vm1013, %v372, -inf
        %v1057 = vrot.slane %v1056, 4
        %v1058 = vmax.f32 %v1056, %v1057
        %v1059 = vrot.slane %v1058, 2
        %v1060 = vmax.f32 %v1058, %v1059
        %v1061 = vrot.slane %v1060, 1
        %v1062 = vmax.f32 %v1060, %v1061
        %v1063 = vsel %vm1013, %v374, -inf
        %v1064 = vrot.slane %v1063, 4
        %v1065 = vmax.f32 %v1063, %v1064
        %v1066 = vrot.slane %v1065, 2
        %v1067 = vmax.f32 %v1065, %v1066
        %v1068 = vrot.slane %v1067, 1
        %v1069 = vmax.f32 %v1067, %v1068
        %v1070 = vsel %vm1013, %v382, -inf
        %v1071 = vrot.slane %v1070, 4
        %v1072 = vmax.f32 %v1070, %v1071
        %v1073 = vrot.slane %v1072, 2
        %v1074 = vmax.f32 %v1072, %v1073
        %v1075 = vrot.slane %v1074, 1
        %v1076 = vmax.f32 %v1074, %v1075
        %v1077 = vsel %vm1013, %v390, -inf
        %v1078 = vrot.slane %v1077, 4
        %v1079 = vmax.f32 %v1077, %v1078
        %v1080 = vrot.slane %v1079, 2
        %v1081 = vmax.f32 %v1079, %v1080
        %v1082 = vrot.slane %v1081, 1
        %v1083 = vmax.f32 %v1081, %v1082
        %v1084 = vsel %vm1013, %v389, -inf
        %v1085 = vrot.slane %v1084, 4
        %v1086 = vmax.f32 %v1084, %v1085
        %v1087 = vrot.slane %v1086, 2
        %v1088 = vmax.f32 %v1086, %v1087
        %v1089 = vrot.slane %v1088, 1
        %v1090 = vmax.f32 %v1088, %v1089
        %v1091 = vsel %vm1013, %v391, -inf
        %v1092 = vrot.slane %v1091, 4
        %v1093 = vmax.f32 %v1091, %v1092
        %v1094 = vrot.slane %v1093, 2
        %v1095 = vmax.f32 %v1093, %v1094
        %v1096 = vrot.slane %v1095, 1
        %v1097 = vmax.f32 %v1095, %v1096
        %v1098 = vsel %vm1013, %v399, -inf
        %v1099 = vrot.slane %v1098, 4
        %v1100 = vmax.f32 %v1098, %v1099
        %v1101 = vrot.slane %v1100, 2
        %v1102 = vmax.f32 %v1100, %v1101
        %v1103 = vrot.slane %v1102, 1
        %v1104 = vmax.f32 %v1102, %v1103
        %v1105 = vsel %vm1013, %v407, -inf
        %v1106 = vrot.slane %v1105, 4
        %v1107 = vmax.f32 %v1105, %v1106
        %v1108 = vrot.slane %v1107, 2
        %v1109 = vmax.f32 %v1107, %v1108
        %v1110 = vrot.slane %v1109, 1
        %v1111 = vmax.f32 %v1109, %v1110
        %v1112 = vsel %vm1013, %v406, -inf
        %v1113 = vrot.slane %v1112, 4
        %v1114 = vmax.f32 %v1112, %v1113
        %v1115 = vrot.slane %v1114, 2
        %v1116 = vmax.f32 %v1114, %v1115
        %v1117 = vrot.slane %v1116, 1
        %v1118 = vmax.f32 %v1116, %v1117
        %v1119 = vsel %vm1013, %v408, -inf
        %v1120 = vrot.slane %v1119, 4
        %v1121 = vmax.f32 %v1119, %v1120
        %v1122 = vrot.slane %v1121, 2
        %v1123 = vmax.f32 %v1121, %v1122
        %v1124 = vrot.slane %v1123, 1
        %v1125 = vmax.f32 %v1123, %v1124
        %v1126 = vsel %vm1013, %v416, -inf
        %v1127 = vrot.slane %v1126, 4
        %v1128 = vmax.f32 %v1126, %v1127
        %v1129 = vrot.slane %v1128, 2
        %v1130 = vmax.f32 %v1128, %v1129
        %v1131 = vrot.slane %v1130, 1
        %v1132 = vmax.f32 %v1130, %v1131
        %v1133 = vsel %vm1013, %v424, -inf
        %v1134 = vrot.slane %v1133, 4
        %v1135 = vmax.f32 %v1133, %v1134
        %v1136 = vrot.slane %v1135, 2
        %v1137 = vmax.f32 %v1135, %v1136
        %v1138 = vrot.slane %v1137, 1
        %v1139 = vmax.f32 %v1137, %v1138
        %v1140 = vsel %vm1013, %v423, -inf
        %v1141 = vrot.slane %v1140, 4
        %v1142 = vmax.f32 %v1140, %v1141
        %v1143 = vrot.slane %v1142, 2
        %v1144 = vmax.f32 %v1142, %v1143
        %v1145 = vrot.slane %v1144, 1
        %v1146 = vmax.f32 %v1144, %v1145
        %v1147 = vsel %vm1013, %v425, -inf
        %v1148 = vrot.slane %v1147, 4
        %v1149 = vmax.f32 %v1147, %v1148
        %v1150 = vrot.slane %v1149, 2
        %v1151 = vmax.f32 %v1149, %v1150
        %v1152 = vrot.slane %v1151, 1
        %v1153 = vmax.f32 %v1151, %v1152
        %v1154 = vsel %vm1013, %v433, -inf
        %v1155 = vrot.slane %v1154, 4
        %v1156 = vmax.f32 %v1154, %v1155
        %v1157 = vrot.slane %v1156, 2
        %v1158 = vmax.f32 %v1156, %v1157
        %v1159 = vrot.slane %v1158, 1
        %v1160 = vmax.f32 %v1158, %v1159
        %v1161 = vsel %vm1013, %v441, -inf
        %v1162 = vrot.slane %v1161, 4
        %v1163 = vmax.f32 %v1161, %v1162
        %v1164 = vrot.slane %v1163, 2
        %v1165 = vmax.f32 %v1163, %v1164
        %v1166 = vrot.slane %v1165, 1
        %v1167 = vmax.f32 %v1165, %v1166
        %v1168 = vsel %vm1013, %v440, -inf
        %v1169 = vrot.slane %v1168, 4
        %v1170 = vmax.f32 %v1168, %v1169
        %v1171 = vrot.slane %v1170, 2
        %v1172 = vmax.f32 %v1170, %v1171
        %v1173 = vrot.slane %v1172, 1
        %v1174 = vmax.f32 %v1172, %v1173
        %v1175 = vsel %vm1013, %v442, -inf
        %v1176 = vrot.slane %v1175, 4
        %v1177 = vmax.f32 %v1175, %v1176
        %v1178 = vrot.slane %v1177, 2
        %v1179 = vmax.f32 %v1177, %v1178
        %v1180 = vrot.slane %v1179, 1
        %v1181 = vmax.f32 %v1179, %v1180
        %v1182 = vsel %vm1013, %v450, -inf
        %v1183 = vrot.slane %v1182, 4
        %v1184 = vmax.f32 %v1182, %v1183
        %v1185 = vrot.slane %v1184, 2
        %v1186 = vmax.f32 %v1184, %v1185
        %v1187 = vrot.slane %v1186, 1
        %v1188 = vmax.f32 %v1186, %v1187
        %v1189 = vsel %vm1013, %v458, -inf
        %v1190 = vrot.slane %v1189, 4
        %v1191 = vmax.f32 %v1189, %v1190
        %v1192 = vrot.slane %v1191, 2
        %v1193 = vmax.f32 %v1191, %v1192
        %v1194 = vrot.slane %v1193, 1
        %v1195 = vmax.f32 %v1193, %v1194
        %v1196 = vsel %vm1013, %v457, -inf
        %v1197 = vrot.slane %v1196, 4
        %v1198 = vmax.f32 %v1196, %v1197
        %v1199 = vrot.slane %v1198, 2
        %v1200 = vmax.f32 %v1198, %v1199
        %v1201 = vrot.slane %v1200, 1
        %v1202 = vmax.f32 %v1200, %v1201
        %v1203 = vsel %vm1013, %v459, -inf
        %v1204 = vrot.slane %v1203, 4
        %v1205 = vmax.f32 %v1203, %v1204
        %v1206 = vrot.slane %v1205, 2
        %v1207 = vmax.f32 %v1205, %v1206
        %v1208 = vrot.slane %v1207, 1
        %v1209 = vmax.f32 %v1207, %v1208
        %v1210 = vsel %vm1013, %v467, -inf
        %v1211 = vrot.slane %v1210, 4
        %v1212 = vmax.f32 %v1210, %v1211
        %v1213 = vrot.slane %v1212, 2
        %v1214 = vmax.f32 %v1212, %v1213
        %v1215 = vrot.slane %v1214, 1
        %v1216 = vmax.f32 %v1214, %v1215
        %v1217 = vsel %vm1013, %v475, -inf
        %v1218 = vrot.slane %v1217, 4
        %v1219 = vmax.f32 %v1217, %v1218
        %v1220 = vrot.slane %v1219, 2
        %v1221 = vmax.f32 %v1219, %v1220
        %v1222 = vrot.slane %v1221, 1
        %v1223 = vmax.f32 %v1221, %v1222
        %v1224 = vsel %vm1013, %v474, -inf
        %v1225 = vrot.slane %v1224, 4
        %v1226 = vmax.f32 %v1224, %v1225
        %v1227 = vrot.slane %v1226, 2
        %v1228 = vmax.f32 %v1226, %v1227
        %v1229 = vrot.slane %v1228, 1
        %v1230 = vmax.f32 %v1228, %v1229
        %v1231 = vsel %vm1013, %v476, -inf
        %v1232 = vrot.slane %v1231, 4
        %v1233 = vmax.f32 %v1231, %v1232
        %v1234 = vrot.slane %v1233, 2
        %v1235 = vmax.f32 %v1233, %v1234
        %v1236 = vrot.slane %v1235, 1
        %v1237 = vmax.f32 %v1235, %v1236
        %v1238 = vsel %vm1013, %v484, -inf
        %v1239 = vrot.slane %v1238, 4
        %v1240 = vmax.f32 %v1238, %v1239
        %v1241 = vrot.slane %v1240, 2
        %v1242 = vmax.f32 %v1240, %v1241
        %v1243 = vrot.slane %v1242, 1
        %v1244 = vmax.f32 %v1242, %v1243
        %v1245 = vsel %vm1013, %v492, -inf
        %v1246 = vrot.slane %v1245, 4
        %v1247 = vmax.f32 %v1245, %v1246
        %v1248 = vrot.slane %v1247, 2
        %v1249 = vmax.f32 %v1247, %v1248
        %v1250 = vrot.slane %v1249, 1
        %v1251 = vmax.f32 %v1249, %v1250
        %v1252 = vsel %vm1013, %v491, -inf
        %v1253 = vrot.slane %v1252, 4
        %v1254 = vmax.f32 %v1252, %v1253
        %v1255 = vrot.slane %v1254, 2
        %v1256 = vmax.f32 %v1254, %v1255
        %v1257 = vrot.slane %v1256, 1
        %v1258 = vmax.f32 %v1256, %v1257
        %v1259 = vsel %vm1013, %v493, -inf
        %v1260 = vrot.slane %v1259, 4
        %v1261 = vmax.f32 %v1259, %v1260
        %v1262 = vrot.slane %v1261, 2
        %v1263 = vmax.f32 %v1261, %v1262
        %v1264 = vrot.slane %v1263, 1
        %v1265 = vmax.f32 %v1263, %v1264
        %v1266 = vsel %vm1013, %v501, -inf
        %v1267 = vrot.slane %v1266, 4
        %v1268 = vmax.f32 %v1266, %v1267
        %v1269 = vrot.slane %v1268, 2
        %v1270 = vmax.f32 %v1268, %v1269
        %v1271 = vrot.slane %v1270, 1
        %v1272 = vmax.f32 %v1270, %v1271
        %v1273 = vsel %vm1013, %v509, -inf
        %v1274 = vrot.slane %v1273, 4
        %v1275 = vmax.f32 %v1273, %v1274
        %v1276 = vrot.slane %v1275, 2
        %v1277 = vmax.f32 %v1275, %v1276
        %v1278 = vrot.slane %v1277, 1
        %v1279 = vmax.f32 %v1277, %v1278
        %v1280 = vsel %vm1013, %v508, -inf
        %v1281 = vrot.slane %v1280, 4
        %v1282 = vmax.f32 %v1280, %v1281
        %v1283 = vrot.slane %v1282, 2
        %v1284 = vmax.f32 %v1282, %v1283
        %v1285 = vrot.slane %v1284, 1
        %v1286 = vmax.f32 %v1284, %v1285
        %v1287 = vsel %vm1013, %v510, -inf
        %v1288 = vrot.slane %v1287, 4
        %v1289 = vmax.f32 %v1287, %v1288
        %v1290 = vrot.slane %v1289, 2
        %v1291 = vmax.f32 %v1289, %v1290
        %v1292 = vrot.slane %v1291, 1
        %v1293 = vmax.f32 %v1291, %v1292
        %v1294 = vsel %vm1013, %v518, -inf
        %v1295 = vrot.slane %v1294, 4
        %v1296 = vmax.f32 %v1294, %v1295
        %v1297 = vrot.slane %v1296, 2
        %v1298 = vmax.f32 %v1296, %v1297
        %v1299 = vrot.slane %v1298, 1
        %v1300 = vmax.f32 %v1298, %v1299
        %v1301 = vsel %vm1013, %v526, -inf
        %v1302 = vrot.slane %v1301, 4
        %v1303 = vmax.f32 %v1301, %v1302
        %v1304 = vrot.slane %v1303, 2
        %v1305 = vmax.f32 %v1303, %v1304
        %v1306 = vrot.slane %v1305, 1
        %v1307 = vmax.f32 %v1305, %v1306
        %v1308 = vsel %vm1013, %v525, -inf
        %v1309 = vrot.slane %v1308, 4
        %v1310 = vmax.f32 %v1308, %v1309
        %v1311 = vrot.slane %v1310, 2
        %v1312 = vmax.f32 %v1310, %v1311
        %v1313 = vrot.slane %v1312, 1
        %v1314 = vmax.f32 %v1312, %v1313
        %v1315 = vsel %vm1013, %v527, -inf
        %v1316 = vrot.slane %v1315, 4
        %v1317 = vmax.f32 %v1315, %v1316
        %v1318 = vrot.slane %v1317, 2
        %v1319 = vmax.f32 %v1317, %v1318
        %v1320 = vrot.slane %v1319, 1
        %v1321 = vmax.f32 %v1319, %v1320
        %v1322 = vsel %vm1013, %v535, -inf
        %v1323 = vrot.slane %v1322, 4
        %v1324 = vmax.f32 %v1322, %v1323
        %v1325 = vrot.slane %v1324, 2
        %v1326 = vmax.f32 %v1324, %v1325
        %v1327 = vrot.slane %v1326, 1
        %v1328 = vmax.f32 %v1326, %v1327
        %v1329 = vsel %vm1013, %v543, -inf
        %v1330 = vrot.slane %v1329, 4
        %v1331 = vmax.f32 %v1329, %v1330
        %v1332 = vrot.slane %v1331, 2
        %v1333 = vmax.f32 %v1331, %v1332
        %v1334 = vrot.slane %v1333, 1
        %v1335 = vmax.f32 %v1333, %v1334
        %v1336 = vsel %vm1013, %v542, -inf
        %v1337 = vrot.slane %v1336, 4
        %v1338 = vmax.f32 %v1336, %v1337
        %v1339 = vrot.slane %v1338, 2
        %v1340 = vmax.f32 %v1338, %v1339
        %v1341 = vrot.slane %v1340, 1
        %v1342 = vmax.f32 %v1340, %v1341
        %v1343 = vsel %vm1013, %v544, -inf
        %v1344 = vrot.slane %v1343, 4
        %v1345 = vmax.f32 %v1343, %v1344
        %v1346 = vrot.slane %v1345, 2
        %v1347 = vmax.f32 %v1345, %v1346
        %v1348 = vrot.slane %v1347, 1
        %v1349 = vmax.f32 %v1347, %v1348
        %v1350 = vsel %vm1013, %v552, -inf
        %v1351 = vrot.slane %v1350, 4
        %v1352 = vmax.f32 %v1350, %v1351
        %v1353 = vrot.slane %v1352, 2
        %v1354 = vmax.f32 %v1352, %v1353
        %v1355 = vrot.slane %v1354, 1
        %v1356 = vmax.f32 %v1354, %v1355
        %v1357 = vsel %vm1013, %v560, -inf
        %v1358 = vrot.slane %v1357, 4
        %v1359 = vmax.f32 %v1357, %v1358
        %v1360 = vrot.slane %v1359, 2
        %v1361 = vmax.f32 %v1359, %v1360
        %v1362 = vrot.slane %v1361, 1
        %v1363 = vmax.f32 %v1361, %v1362
        %v1364 = vsel %vm1013, %v559, -inf
        %v1365 = vrot.slane %v1364, 4
        %v1366 = vmax.f32 %v1364, %v1365
        %v1367 = vrot.slane %v1366, 2
        %v1368 = vmax.f32 %v1366, %v1367
        %v1369 = vrot.slane %v1368, 1
        %v1370 = vmax.f32 %v1368, %v1369
        %v1371 = vsel %vm1013, %v561, -inf
        %v1372 = vrot.slane %v1371, 4
        %v1373 = vmax.f32 %v1371, %v1372
        %v1374 = vrot.slane %v1373, 2
        %v1375 = vmax.f32 %v1373, %v1374
        %v1376 = vrot.slane %v1375, 1
        %v1377 = vmax.f32 %v1375, %v1376
        %v1378 = vsel %vm1013, %v569, -inf
        %v1379 = vrot.slane %v1378, 4
        %v1380 = vmax.f32 %v1378, %v1379
        %v1381 = vrot.slane %v1380, 2
        %v1382 = vmax.f32 %v1380, %v1381
        %v1383 = vrot.slane %v1382, 1
        %v1384 = vmax.f32 %v1382, %v1383
        %v1385 = vsel %vm1013, %v577, -inf
        %v1386 = vrot.slane %v1385, 4
        %v1387 = vmax.f32 %v1385, %v1386
        %v1388 = vrot.slane %v1387, 2
        %v1389 = vmax.f32 %v1387, %v1388
        %v1390 = vrot.slane %v1389, 1
        %v1391 = vmax.f32 %v1389, %v1390
        %v1392 = vsel %vm1013, %v576, -inf
        %v1393 = vrot.slane %v1392, 4
        %v1394 = vmax.f32 %v1392, %v1393
        %v1395 = vrot.slane %v1394, 2
        %v1396 = vmax.f32 %v1394, %v1395
        %v1397 = vrot.slane %v1396, 1
        %v1398 = vmax.f32 %v1396, %v1397
        %v1399 = vsel %vm1013, %v578, -inf
        %v1400 = vrot.slane %v1399, 4
        %v1401 = vmax.f32 %v1399, %v1400
        %v1402 = vrot.slane %v1401, 2
        %v1403 = vmax.f32 %v1401, %v1402
        %v1404 = vrot.slane %v1403, 1
        %v1405 = vmax.f32 %v1403, %v1404
        %v1406 = vsel %vm1013, %v586, -inf
        %v1407 = vrot.slane %v1406, 4
        %v1408 = vmax.f32 %v1406, %v1407
        %v1409 = vrot.slane %v1408, 2
        %v1410 = vmax.f32 %v1408, %v1409
        %v1411 = vrot.slane %v1410, 1
        %v1412 = vmax.f32 %v1410, %v1411
        %v1413 = vsel %vm1013, %v594, -inf
        %v1414 = vrot.slane %v1413, 4
        %v1415 = vmax.f32 %v1413, %v1414
        %v1416 = vrot.slane %v1415, 2
        %v1417 = vmax.f32 %v1415, %v1416
        %v1418 = vrot.slane %v1417, 1
        %v1419 = vmax.f32 %v1417, %v1418
        %v1420 = vsel %vm1013, %v593, -inf
        %v1421 = vrot.slane %v1420, 4
        %v1422 = vmax.f32 %v1420, %v1421
        %v1423 = vrot.slane %v1422, 2
        %v1424 = vmax.f32 %v1422, %v1423
        %v1425 = vrot.slane %v1424, 1
        %v1426 = vmax.f32 %v1424, %v1425
        %v1427 = vsel %vm1013, %v595, -inf
        %v1428 = vrot.slane %v1427, 4
        %v1429 = vmax.f32 %v1427, %v1428
        %v1430 = vrot.slane %v1429, 2
        %v1431 = vmax.f32 %v1429, %v1430
        %v1432 = vrot.slane %v1431, 1
        %v1433 = vmax.f32 %v1431, %v1432
        %v1434 = vsel %vm1013, %v603, -inf
        %v1435 = vrot.slane %v1434, 4
        %v1436 = vmax.f32 %v1434, %v1435
        %v1437 = vrot.slane %v1436, 2
        %v1438 = vmax.f32 %v1436, %v1437
        %v1439 = vrot.slane %v1438, 1
        %v1440 = vmax.f32 %v1438, %v1439
        %v1441 = vsel %vm1013, %v611, -inf
        %v1442 = vrot.slane %v1441, 4
        %v1443 = vmax.f32 %v1441, %v1442
        %v1444 = vrot.slane %v1443, 2
        %v1445 = vmax.f32 %v1443, %v1444
        %v1446 = vrot.slane %v1445, 1
        %v1447 = vmax.f32 %v1445, %v1446
        %v1448 = vsel %vm1013, %v610, -inf
        %v1449 = vrot.slane %v1448, 4
        %v1450 = vmax.f32 %v1448, %v1449
        %v1451 = vrot.slane %v1450, 2
        %v1452 = vmax.f32 %v1450, %v1451
        %v1453 = vrot.slane %v1452, 1
        %v1454 = vmax.f32 %v1452, %v1453
        %v1455 = vsel %vm1013, %v612, -inf
        %v1456 = vrot.slane %v1455, 4
        %v1457 = vmax.f32 %v1455, %v1456
        %v1458 = vrot.slane %v1457, 2
        %v1459 = vmax.f32 %v1457, %v1458
        %v1460 = vrot.slane %v1459, 1
        %v1461 = vmax.f32 %v1459, %v1460
        %v1462 = vsel %vm1013, %v620, -inf
        %v1463 = vrot.slane %v1462, 4
        %v1464 = vmax.f32 %v1462, %v1463
        %v1465 = vrot.slane %v1464, 2
        %v1466 = vmax.f32 %v1464, %v1465
        %v1467 = vrot.slane %v1466, 1
        %v1468 = vmax.f32 %v1466, %v1467
        %v1469 = vsel %vm1013, %v628, -inf
        %v1470 = vrot.slane %v1469, 4
        %v1471 = vmax.f32 %v1469, %v1470
        %v1472 = vrot.slane %v1471, 2
        %v1473 = vmax.f32 %v1471, %v1472
        %v1474 = vrot.slane %v1473, 1
        %v1475 = vmax.f32 %v1473, %v1474
        %v1476 = vsel %vm1013, %v627, -inf
        %v1477 = vrot.slane %v1476, 4
        %v1478 = vmax.f32 %v1476, %v1477
        %v1479 = vrot.slane %v1478, 2
        %v1480 = vmax.f32 %v1478, %v1479
        %v1481 = vrot.slane %v1480, 1
        %v1482 = vmax.f32 %v1480, %v1481
        %v1483 = vsel %vm1013, %v629, -inf
        %v1484 = vrot.slane %v1483, 4
        %v1485 = vmax.f32 %v1483, %v1484
        %v1486 = vrot.slane %v1485, 2
        %v1487 = vmax.f32 %v1485, %v1486
        %v1488 = vrot.slane %v1487, 1
        %v1489 = vmax.f32 %v1487, %v1488
        %v1490 = vsel %vm1013, %v637, -inf
        %v1491 = vrot.slane %v1490, 4
        %v1492 = vmax.f32 %v1490, %v1491
        %v1493 = vrot.slane %v1492, 2
        %v1494 = vmax.f32 %v1492, %v1493
        %v1495 = vrot.slane %v1494, 1
        %v1496 = vmax.f32 %v1494, %v1495
        %v1497 = vsel %vm1013, %v645, -inf
        %v1498 = vrot.slane %v1497, 4
        %v1499 = vmax.f32 %v1497, %v1498
        %v1500 = vrot.slane %v1499, 2
        %v1501 = vmax.f32 %v1499, %v1500
        %v1502 = vrot.slane %v1501, 1
        %v1503 = vmax.f32 %v1501, %v1502
        %v1504 = vsel %vm1013, %v644, -inf
        %v1505 = vrot.slane %v1504, 4
        %v1506 = vmax.f32 %v1504, %v1505
        %v1507 = vrot.slane %v1506, 2
        %v1508 = vmax.f32 %v1506, %v1507
        %v1509 = vrot.slane %v1508, 1
        %v1510 = vmax.f32 %v1508, %v1509
        %v1511 = vsel %vm1013, %v646, -inf
        %v1512 = vrot.slane %v1511, 4
        %v1513 = vmax.f32 %v1511, %v1512
        %v1514 = vrot.slane %v1513, 2
        %v1515 = vmax.f32 %v1513, %v1514
        %v1516 = vrot.slane %v1515, 1
        %v1517 = vmax.f32 %v1515, %v1516
        %v1518 = vsel %vm1013, %v654, -inf
        %v1519 = vrot.slane %v1518, 4
        %v1520 = vmax.f32 %v1518, %v1519
        %v1521 = vrot.slane %v1520, 2
        %v1522 = vmax.f32 %v1520, %v1521
        %v1523 = vrot.slane %v1522, 1
        %v1524 = vmax.f32 %v1522, %v1523
        %v1525 = vsel %vm1013, %v662, -inf
        %v1526 = vrot.slane %v1525, 4
        %v1527 = vmax.f32 %v1525, %v1526
        %v1528 = vrot.slane %v1527, 2
        %v1529 = vmax.f32 %v1527, %v1528
        %v1530 = vrot.slane %v1529, 1
        %v1531 = vmax.f32 %v1529, %v1530
        %v1532 = vsel %vm1013, %v661, -inf
        %v1533 = vrot.slane %v1532, 4
        %v1534 = vmax.f32 %v1532, %v1533
        %v1535 = vrot.slane %v1534, 2
        %v1536 = vmax.f32 %v1534, %v1535
        %v1537 = vrot.slane %v1536, 1
        %v1538 = vmax.f32 %v1536, %v1537
        %v1539 = vsel %vm1013, %v663, -inf
        %v1540 = vrot.slane %v1539, 4
        %v1541 = vmax.f32 %v1539, %v1540
        %v1542 = vrot.slane %v1541, 2
        %v1543 = vmax.f32 %v1541, %v1542
        %v1544 = vrot.slane %v1543, 1
        %v1545 = vmax.f32 %v1543, %v1544
        %v1546 = vsel %vm1013, %v671, -inf
        %v1547 = vrot.slane %v1546, 4
        %v1548 = vmax.f32 %v1546, %v1547
        %v1549 = vrot.slane %v1548, 2
        %v1550 = vmax.f32 %v1548, %v1549
        %v1551 = vrot.slane %v1550, 1
        %v1552 = vmax.f32 %v1550, %v1551
        %v1553 = vsel %vm1013, %v679, -inf
        %v1554 = vrot.slane %v1553, 4
        %v1555 = vmax.f32 %v1553, %v1554
        %v1556 = vrot.slane %v1555, 2
        %v1557 = vmax.f32 %v1555, %v1556
        %v1558 = vrot.slane %v1557, 1
        %v1559 = vmax.f32 %v1557, %v1558
        %v1560 = vsel %vm1013, %v678, -inf
        %v1561 = vrot.slane %v1560, 4
        %v1562 = vmax.f32 %v1560, %v1561
        %v1563 = vrot.slane %v1562, 2
        %v1564 = vmax.f32 %v1562, %v1563
        %v1565 = vrot.slane %v1564, 1
        %v1566 = vmax.f32 %v1564, %v1565
        %v1567 = vsel %vm1013, %v680, -inf
        %v1568 = vrot.slane %v1567, 4
        %v1569 = vmax.f32 %v1567, %v1568
        %v1570 = vrot.slane %v1569, 2
        %v1571 = vmax.f32 %v1569, %v1570
        %v1572 = vrot.slane %v1571, 1
        %v1573 = vmax.f32 %v1571, %v1572
        %v1574 = vsel %vm1013, %v688, -inf
        %v1575 = vrot.slane %v1574, 4
        %v1576 = vmax.f32 %v1574, %v1575
        %v1577 = vrot.slane %v1576, 2
        %v1578 = vmax.f32 %v1576, %v1577
        %v1579 = vrot.slane %v1578, 1
        %v1580 = vmax.f32 %v1578, %v1579
        %v1581 = vsel %vm1013, %v696, -inf
        %v1582 = vrot.slane %v1581, 4
        %v1583 = vmax.f32 %v1581, %v1582
        %v1584 = vrot.slane %v1583, 2
        %v1585 = vmax.f32 %v1583, %v1584
        %v1586 = vrot.slane %v1585, 1
        %v1587 = vmax.f32 %v1585, %v1586
        %v1588 = vsel %vm1013, %v695, -inf
        %v1589 = vrot.slane %v1588, 4
        %v1590 = vmax.f32 %v1588, %v1589
        %v1591 = vrot.slane %v1590, 2
        %v1592 = vmax.f32 %v1590, %v1591
        %v1593 = vrot.slane %v1592, 1
        %v1594 = vmax.f32 %v1592, %v1593
        %v1595 = vsel %vm1013, %v697, -inf
        %v1596 = vrot.slane %v1595, 4
        %v1597 = vmax.f32 %v1595, %v1596
        %v1598 = vrot.slane %v1597, 2
        %v1599 = vmax.f32 %v1597, %v1598
        %v1600 = vrot.slane %v1599, 1
        %v1601 = vmax.f32 %v1599, %v1600
        %v1602 = vsel %vm1013, %v705, -inf
        %v1603 = vrot.slane %v1602, 4
        %v1604 = vmax.f32 %v1602, %v1603
        %v1605 = vrot.slane %v1604, 2
        %v1606 = vmax.f32 %v1604, %v1605
        %v1607 = vrot.slane %v1606, 1
        %v1608 = vmax.f32 %v1606, %v1607
        %v1609 = vsel %vm1013, %v713, -inf
        %v1610 = vrot.slane %v1609, 4
        %v1611 = vmax.f32 %v1609, %v1610
        %v1612 = vrot.slane %v1611, 2
        %v1613 = vmax.f32 %v1611, %v1612
        %v1614 = vrot.slane %v1613, 1
        %v1615 = vmax.f32 %v1613, %v1614
        %v1616 = vsel %vm1013, %v712, -inf
        %v1617 = vrot.slane %v1616, 4
        %v1618 = vmax.f32 %v1616, %v1617
        %v1619 = vrot.slane %v1618, 2
        %v1620 = vmax.f32 %v1618, %v1619
        %v1621 = vrot.slane %v1620, 1
        %v1622 = vmax.f32 %v1620, %v1621
        %v1623 = vsel %vm1013, %v714, -inf
        %v1624 = vrot.slane %v1623, 4
        %v1625 = vmax.f32 %v1623, %v1624
        %v1626 = vrot.slane %v1625, 2
        %v1627 = vmax.f32 %v1625, %v1626
        %v1628 = vrot.slane %v1627, 1
        %v1629 = vmax.f32 %v1627, %v1628
        %v1630 = vsel %vm1013, %v722, -inf
        %v1631 = vrot.slane %v1630, 4
        %v1632 = vmax.f32 %v1630, %v1631
        %v1633 = vrot.slane %v1632, 2
        %v1634 = vmax.f32 %v1632, %v1633
        %v1635 = vrot.slane %v1634, 1
        %v1636 = vmax.f32 %v1634, %v1635
        %v1637 = vsel %vm1013, %v730, -inf
        %v1638 = vrot.slane %v1637, 4
        %v1639 = vmax.f32 %v1637, %v1638
        %v1640 = vrot.slane %v1639, 2
        %v1641 = vmax.f32 %v1639, %v1640
        %v1642 = vrot.slane %v1641, 1
        %v1643 = vmax.f32 %v1641, %v1642
        %v1644 = vsel %vm1013, %v729, -inf
        %v1645 = vrot.slane %v1644, 4
        %v1646 = vmax.f32 %v1644, %v1645
        %v1647 = vrot.slane %v1646, 2
        %v1648 = vmax.f32 %v1646, %v1647
        %v1649 = vrot.slane %v1648, 1
        %v1650 = vmax.f32 %v1648, %v1649
        %v1651 = vsel %vm1013, %v731, -inf
        %v1652 = vrot.slane %v1651, 4
        %v1653 = vmax.f32 %v1651, %v1652
        %v1654 = vrot.slane %v1653, 2
        %v1655 = vmax.f32 %v1653, %v1654
        %v1656 = vrot.slane %v1655, 1
        %v1657 = vmax.f32 %v1655, %v1656
        %v1658 = vsel %vm1013, %v739, -inf
        %v1659 = vrot.slane %v1658, 4
        %v1660 = vmax.f32 %v1658, %v1659
        %v1661 = vrot.slane %v1660, 2
        %v1662 = vmax.f32 %v1660, %v1661
        %v1663 = vrot.slane %v1662, 1
        %v1664 = vmax.f32 %v1662, %v1663
        %v1665 = vsel %vm1013, %v747, -inf
        %v1666 = vrot.slane %v1665, 4
        %v1667 = vmax.f32 %v1665, %v1666
        %v1668 = vrot.slane %v1667, 2
        %v1669 = vmax.f32 %v1667, %v1668
        %v1670 = vrot.slane %v1669, 1
        %v1671 = vmax.f32 %v1669, %v1670
        %v1672 = vsel %vm1013, %v746, -inf
        %v1673 = vrot.slane %v1672, 4
        %v1674 = vmax.f32 %v1672, %v1673
        %v1675 = vrot.slane %v1674, 2
        %v1676 = vmax.f32 %v1674, %v1675
        %v1677 = vrot.slane %v1676, 1
        %v1678 = vmax.f32 %v1676, %v1677
        %v1679 = vsel %vm1013, %v748, -inf
        %v1680 = vrot.slane %v1679, 4
        %v1681 = vmax.f32 %v1679, %v1680
        %v1682 = vrot.slane %v1681, 2
        %v1683 = vmax.f32 %v1681, %v1682
        %v1684 = vrot.slane %v1683, 1
        %v1685 = vmax.f32 %v1683, %v1684
        %v1686 = vsel %vm1013, %v756, -inf
        %v1687 = vrot.slane %v1686, 4
        %v1688 = vmax.f32 %v1686, %v1687
        %v1689 = vrot.slane %v1688, 2
        %v1690 = vmax.f32 %v1688, %v1689
        %v1691 = vrot.slane %v1690, 1
        %v1692 = vmax.f32 %v1690, %v1691
        %v1693 = vsel %vm1013, %v764, -inf
        %v1694 = vrot.slane %v1693, 4
        %v1695 = vmax.f32 %v1693, %v1694
        %v1696 = vrot.slane %v1695, 2
        %v1697 = vmax.f32 %v1695, %v1696
        %v1698 = vrot.slane %v1697, 1
        %v1699 = vmax.f32 %v1697, %v1698
        %v1700 = vsel %vm1013, %v763, -inf
        %v1701 = vrot.slane %v1700, 4
        %v1702 = vmax.f32 %v1700, %v1701
        %v1703 = vrot.slane %v1702, 2
        %v1704 = vmax.f32 %v1702, %v1703
        %v1705 = vrot.slane %v1704, 1
        %v1706 = vmax.f32 %v1704, %v1705
        %v1707 = vsel %vm1013, %v765, -inf
        %v1708 = vrot.slane %v1707, 4
        %v1709 = vmax.f32 %v1707, %v1708
        %v1710 = vrot.slane %v1709, 2
        %v1711 = vmax.f32 %v1709, %v1710
        %v1712 = vrot.slane %v1711, 1
        %v1713 = vmax.f32 %v1711, %v1712
        %v1714 = vsel %vm1013, %v773, -inf
        %v1715 = vrot.slane %v1714, 4
        %v1716 = vmax.f32 %v1714, %v1715
        %v1717 = vrot.slane %v1716, 2
        %v1718 = vmax.f32 %v1716, %v1717
        %v1719 = vrot.slane %v1718, 1
        %v1720 = vmax.f32 %v1718, %v1719
        %v1721 = vsel %vm1013, %v781, -inf
        %v1722 = vrot.slane %v1721, 4
        %v1723 = vmax.f32 %v1721, %v1722
        %v1724 = vrot.slane %v1723, 2
        %v1725 = vmax.f32 %v1723, %v1724
        %v1726 = vrot.slane %v1725, 1
        %v1727 = vmax.f32 %v1725, %v1726
        %v1728 = vsel %vm1013, %v780, -inf
        %v1729 = vrot.slane %v1728, 4
        %v1730 = vmax.f32 %v1728, %v1729
        %v1731 = vrot.slane %v1730, 2
        %v1732 = vmax.f32 %v1730, %v1731
        %v1733 = vrot.slane %v1732, 1
        %v1734 = vmax.f32 %v1732, %v1733
        %v1735 = vsel %vm1013, %v782, -inf
        %v1736 = vrot.slane %v1735, 4
        %v1737 = vmax.f32 %v1735, %v1736
        %v1738 = vrot.slane %v1737, 2
        %v1739 = vmax.f32 %v1737, %v1738
        %v1740 = vrot.slane %v1739, 1
        %v1741 = vmax.f32 %v1739, %v1740
        %v1742 = vsel %vm1013, %v790, -inf
        %v1743 = vrot.slane %v1742, 4
        %v1744 = vmax.f32 %v1742, %v1743
        %v1745 = vrot.slane %v1744, 2
        %v1746 = vmax.f32 %v1744, %v1745
        %v1747 = vrot.slane %v1746, 1
        %v1748 = vmax.f32 %v1746, %v1747
        %v1749 = vsel %vm1013, %v798, -inf
        %v1750 = vrot.slane %v1749, 4
        %v1751 = vmax.f32 %v1749, %v1750
        %v1752 = vrot.slane %v1751, 2
        %v1753 = vmax.f32 %v1751, %v1752
        %v1754 = vrot.slane %v1753, 1
        %v1755 = vmax.f32 %v1753, %v1754
        %v1756 = vsel %vm1013, %v797, -inf
        %v1757 = vrot.slane %v1756, 4
        %v1758 = vmax.f32 %v1756, %v1757
        %v1759 = vrot.slane %v1758, 2
        %v1760 = vmax.f32 %v1758, %v1759
        %v1761 = vrot.slane %v1760, 1
        %v1762 = vmax.f32 %v1760, %v1761
        %v1763 = vsel %vm1013, %v799, -inf
        %v1764 = vrot.slane %v1763, 4
        %v1765 = vmax.f32 %v1763, %v1764
        %v1766 = vrot.slane %v1765, 2
        %v1767 = vmax.f32 %v1765, %v1766
        %v1768 = vrot.slane %v1767, 1
        %v1769 = vmax.f32 %v1767, %v1768
        %v1770 = vsel %vm1013, %v807, -inf
        %v1771 = vrot.slane %v1770, 4
        %v1772 = vmax.f32 %v1770, %v1771
        %v1773 = vrot.slane %v1772, 2
        %v1774 = vmax.f32 %v1772, %v1773
        %v1775 = vrot.slane %v1774, 1
        %v1776 = vmax.f32 %v1774, %v1775
        %v1777 = vsel %vm1013, %v815, -inf
        %v1778 = vrot.slane %v1777, 4
        %v1779 = vmax.f32 %v1777, %v1778
        %v1780 = vrot.slane %v1779, 2
        %v1781 = vmax.f32 %v1779, %v1780
        %v1782 = vrot.slane %v1781, 1
        %v1783 = vmax.f32 %v1781, %v1782
        %v1784 = vsel %vm1013, %v814, -inf
        %v1785 = vrot.slane %v1784, 4
        %v1786 = vmax.f32 %v1784, %v1785
        %v1787 = vrot.slane %v1786, 2
        %v1788 = vmax.f32 %v1786, %v1787
        %v1789 = vrot.slane %v1788, 1
        %v1790 = vmax.f32 %v1788, %v1789
        %v1791 = vsel %vm1013, %v816, -inf
        %v1792 = vrot.slane %v1791, 4
        %v1793 = vmax.f32 %v1791, %v1792
        %v1794 = vrot.slane %v1793, 2
        %v1795 = vmax.f32 %v1793, %v1794
        %v1796 = vrot.slane %v1795, 1
        %v1797 = vmax.f32 %v1795, %v1796
        %v1798 = vsel %vm1013, %v824, -inf
        %v1799 = vrot.slane %v1798, 4
        %v1800 = vmax.f32 %v1798, %v1799
        %v1801 = vrot.slane %v1800, 2
        %v1802 = vmax.f32 %v1800, %v1801
        %v1803 = vrot.slane %v1802, 1
        %v1804 = vmax.f32 %v1802, %v1803
        %v1805 = vsel %vm1013, %v832, -inf
        %v1806 = vrot.slane %v1805, 4
        %v1807 = vmax.f32 %v1805, %v1806
        %v1808 = vrot.slane %v1807, 2
        %v1809 = vmax.f32 %v1807, %v1808
        %v1810 = vrot.slane %v1809, 1
        %v1811 = vmax.f32 %v1809, %v1810
        %v1812 = vsel %vm1013, %v831, -inf
        %v1813 = vrot.slane %v1812, 4
        %v1814 = vmax.f32 %v1812, %v1813
        %v1815 = vrot.slane %v1814, 2
        %v1816 = vmax.f32 %v1814, %v1815
        %v1817 = vrot.slane %v1816, 1
        %v1818 = vmax.f32 %v1816, %v1817
        %v1819 = vsel %vm1013, %v833, -inf
        %v1820 = vrot.slane %v1819, 4
        %v1821 = vmax.f32 %v1819, %v1820
        %v1822 = vrot.slane %v1821, 2
        %v1823 = vmax.f32 %v1821, %v1822
        %v1824 = vrot.slane %v1823, 1
        %v1825 = vmax.f32 %v1823, %v1824
        %v1826 = vsel %vm1013, %v841, -inf
        %v1827 = vrot.slane %v1826, 4
        %v1828 = vmax.f32 %v1826, %v1827
        %v1829 = vrot.slane %v1828, 2
        %v1830 = vmax.f32 %v1828, %v1829
        %v1831 = vrot.slane %v1830, 1
        %v1832 = vmax.f32 %v1830, %v1831
        %v1833 = vsel %vm1013, %v849, -inf
        %v1834 = vrot.slane %v1833, 4
        %v1835 = vmax.f32 %v1833, %v1834
        %v1836 = vrot.slane %v1835, 2
        %v1837 = vmax.f32 %v1835, %v1836
        %v1838 = vrot.slane %v1837, 1
        %v1839 = vmax.f32 %v1837, %v1838
        %v1840 = vsel %vm1013, %v848, -inf
        %v1841 = vrot.slane %v1840, 4
        %v1842 = vmax.f32 %v1840, %v1841
        %v1843 = vrot.slane %v1842, 2
        %v1844 = vmax.f32 %v1842, %v1843
        %v1845 = vrot.slane %v1844, 1
        %v1846 = vmax.f32 %v1844, %v1845
        %v1847 = vsel %vm1013, %v850, -inf
        %v1848 = vrot.slane %v1847, 4
        %v1849 = vmax.f32 %v1847, %v1848
        %v1850 = vrot.slane %v1849, 2
        %v1851 = vmax.f32 %v1849, %v1850
        %v1852 = vrot.slane %v1851, 1
        %v1853 = vmax.f32 %v1851, %v1852
        %v1854 = vsel %vm1013, %v858, -inf
        %v1855 = vrot.slane %v1854, 4
        %v1856 = vmax.f32 %v1854, %v1855
        %v1857 = vrot.slane %v1856, 2
        %v1858 = vmax.f32 %v1856, %v1857
        %v1859 = vrot.slane %v1858, 1
        %v1860 = vmax.f32 %v1858, %v1859
        %v1861 = vsel %vm1013, %v866, -inf
        %v1862 = vrot.slane %v1861, 4
        %v1863 = vmax.f32 %v1861, %v1862
        %v1864 = vrot.slane %v1863, 2
        %v1865 = vmax.f32 %v1863, %v1864
        %v1866 = vrot.slane %v1865, 1
        %v1867 = vmax.f32 %v1865, %v1866
        %v1868 = vsel %vm1013, %v865, -inf
        %v1869 = vrot.slane %v1868, 4
        %v1870 = vmax.f32 %v1868, %v1869
        %v1871 = vrot.slane %v1870, 2
        %v1872 = vmax.f32 %v1870, %v1871
        %v1873 = vrot.slane %v1872, 1
        %v1874 = vmax.f32 %v1872, %v1873
        %v1875 = vsel %vm1013, %v867, -inf
        %v1876 = vrot.slane %v1875, 4
        %v1877 = vmax.f32 %v1875, %v1876
        %v1878 = vrot.slane %v1877, 2
        %v1879 = vmax.f32 %v1877, %v1878
        %v1880 = vrot.slane %v1879, 1
        %v1881 = vmax.f32 %v1879, %v1880
        %v1882 = vsel %vm1013, %v875, -inf
        %v1883 = vrot.slane %v1882, 4
        %v1884 = vmax.f32 %v1882, %v1883
        %v1885 = vrot.slane %v1884, 2
        %v1886 = vmax.f32 %v1884, %v1885
        %v1887 = vrot.slane %v1886, 1
        %v1888 = vmax.f32 %v1886, %v1887
        %v1889 = vsel %vm1013, %v883, -inf
        %v1890 = vrot.slane %v1889, 4
        %v1891 = vmax.f32 %v1889, %v1890
        %v1892 = vrot.slane %v1891, 2
        %v1893 = vmax.f32 %v1891, %v1892
        %v1894 = vrot.slane %v1893, 1
        %v1895 = vmax.f32 %v1893, %v1894
        %v1896 = vsel %vm1013, %v882, -inf
        %v1897 = vrot.slane %v1896, 4
        %v1898 = vmax.f32 %v1896, %v1897
        %v1899 = vrot.slane %v1898, 2
        %v1900 = vmax.f32 %v1898, %v1899
        %v1901 = vrot.slane %v1900, 1
        %v1902 = vmax.f32 %v1900, %v1901
        %v1903 = vsel %vm1013, %v884, -inf
        %v1904 = vrot.slane %v1903, 4
        %v1905 = vmax.f32 %v1903, %v1904
        %v1906 = vrot.slane %v1905, 2
        %v1907 = vmax.f32 %v1905, %v1906
        %v1908 = vrot.slane %v1907, 1
        %v1909 = vmax.f32 %v1907, %v1908
        %vm1910 = vcmask 31744
        %v1911 = vsel %vm1910, %v1020, -inf
        %v1912 = vsel %vm1910, %v1076, -inf
        %v1913 = vmax.f32 %v1911, %v1912
        %v1914 = vsel %vm1910, %v1027, -inf
        %v1915 = vsel %vm1910, %v1083, -inf
        %v1916 = vmax.f32 %v1914, %v1915
        %v1917 = vsel %vm1910, %v1034, -inf
        %v1918 = vsel %vm1910, %v1090, -inf
        %v1919 = vmax.f32 %v1917, %v1918
        %v1920 = vsel %vm1910, %v1041, -inf
        %v1921 = vsel %vm1910, %v1097, -inf
        %v1922 = vmax.f32 %v1920, %v1921
        %v1923 = vsel %vm1910, %v1048, -inf
        %v1924 = vsel %vm1910, %v1104, -inf
        %v1925 = vmax.f32 %v1923, %v1924
        %v1926 = vsel %vm1910, %v1055, -inf
        %v1927 = vsel %vm1910, %v1111, -inf
        %v1928 = vmax.f32 %v1926, %v1927
        %v1929 = vsel %vm1910, %v1062, -inf
        %v1930 = vsel %vm1910, %v1118, -inf
        %v1931 = vmax.f32 %v1929, %v1930
        %v1932 = vsel %vm1910, %v1069, -inf
        %v1933 = vsel %vm1910, %v1125, -inf
        %v1934 = vmax.f32 %v1932, %v1933
        %v1935 = vsel %vm1910, %v1132, -inf
        %v1936 = vsel %vm1910, %v1188, -inf
        %v1937 = vmax.f32 %v1935, %v1936
        %v1938 = vsel %vm1910, %v1139, -inf
        %v1939 = vsel %vm1910, %v1195, -inf
        %v1940 = vmax.f32 %v1938, %v1939
        %v1941 = vsel %vm1910, %v1146, -inf
        %v1942 = vsel %vm1910, %v1202, -inf
        %v1943 = vmax.f32 %v1941, %v1942
        %v1944 = vsel %vm1910, %v1153, -inf
        %v1945 = vsel %vm1910, %v1209, -inf
        %v1946 = vmax.f32 %v1944, %v1945
        %v1947 = vsel %vm1910, %v1160, -inf
        %v1948 = vsel %vm1910, %v1216, -inf
        %v1949 = vmax.f32 %v1947, %v1948
        %v1950 = vsel %vm1910, %v1167, -inf
        %v1951 = vsel %vm1910, %v1223, -inf
        %v1952 = vmax.f32 %v1950, %v1951
        %v1953 = vsel %vm1910, %v1174, -inf
        %v1954 = vsel %vm1910, %v1230, -inf
        %v1955 = vmax.f32 %v1953, %v1954
        %v1956 = vsel %vm1910, %v1181, -inf
        %v1957 = vsel %vm1910, %v1237, -inf
        %v1958 = vmax.f32 %v1956, %v1957
        %v1959 = vsel %vm1910, %v1244, -inf
        %v1960 = vsel %vm1910, %v1300, -inf
        %v1961 = vmax.f32 %v1959, %v1960
        %v1962 = vsel %vm1910, %v1251, -inf
        %v1963 = vsel %vm1910, %v1307, -inf
        %v1964 = vmax.f32 %v1962, %v1963
        %v1965 = vsel %vm1910, %v1258, -inf
        %v1966 = vsel %vm1910, %v1314, -inf
        %v1967 = vmax.f32 %v1965, %v1966
        %v1968 = vsel %vm1910, %v1265, -inf
        %v1969 = vsel %vm1910, %v1321, -inf
        %v1970 = vmax.f32 %v1968, %v1969
        %v1971 = vsel %vm1910, %v1272, -inf
        %v1972 = vsel %vm1910, %v1328, -inf
        %v1973 = vmax.f32 %v1971, %v1972
        %v1974 = vsel %vm1910, %v1279, -inf
        %v1975 = vsel %vm1910, %v1335, -inf
        %v1976 = vmax.f32 %v1974, %v1975
        %v1977 = vsel %vm1910, %v1286, -inf
        %v1978 = vsel %vm1910, %v1342, -inf
        %v1979 = vmax.f32 %v1977, %v1978
        %v1980 = vsel %vm1910, %v1293, -inf
        %v1981 = vsel %vm1910, %v1349, -inf
        %v1982 = vmax.f32 %v1980, %v1981
        %v1983 = vsel %vm1910, %v1356, -inf
        %v1984 = vsel %vm1910, %v1412, -inf
        %v1985 = vmax.f32 %v1983, %v1984
        %v1986 = vsel %vm1910, %v1363, -inf
        %v1987 = vsel %vm1910, %v1419, -inf
        %v1988 = vmax.f32 %v1986, %v1987
        %v1989 = vsel %vm1910, %v1370, -inf
        %v1990 = vsel %vm1910, %v1426, -inf
        %v1991 = vmax.f32 %v1989, %v1990
        %v1992 = vsel %vm1910, %v1377, -inf
        %v1993 = vsel %vm1910, %v1433, -inf
        %v1994 = vmax.f32 %v1992, %v1993
        %v1995 = vsel %vm1910, %v1384, -inf
        %v1996 = vsel %vm1910, %v1440, -inf
        %v1997 = vmax.f32 %v1995, %v1996
        %v1998 = vsel %vm1910, %v1391, -inf
        %v1999 = vsel %vm1910, %v1447, -inf
        %v2000 = vmax.f32 %v1998, %v1999
        %v2001 = vsel %vm1910, %v1398, -inf
        %v2002 = vsel %vm1910, %v1454, -inf
        %v2003 = vmax.f32 %v2001, %v2002
        %v2004 = vsel %vm1910, %v1405, -inf
        %v2005 = vsel %vm1910, %v1461, -inf
        %v2006 = vmax.f32 %v2004, %v2005
        %v2007 = vsel %vm1910, %v1468, -inf
        %v2008 = vsel %vm1910, %v1524, -inf
        %v2009 = vmax.f32 %v2007, %v2008
        %v2010 = vsel %vm1910, %v1475, -inf
        %v2011 = vsel %vm1910, %v1531, -inf
        %v2012 = vmax.f32 %v2010, %v2011
        %v2013 = vsel %vm1910, %v1482, -inf
        %v2014 = vsel %vm1910, %v1538, -inf
        %v2015 = vmax.f32 %v2013, %v2014
        %v2016 = vsel %vm1910, %v1489, -inf
        %v2017 = vsel %vm1910, %v1545, -inf
        %v2018 = vmax.f32 %v2016, %v2017
        %v2019 = vsel %vm1910, %v1496, -inf
        %v2020 = vsel %vm1910, %v1552, -inf
        %v2021 = vmax.f32 %v2019, %v2020
        %v2022 = vsel %vm1910, %v1503, -inf
        %v2023 = vsel %vm1910, %v1559, -inf
        %v2024 = vmax.f32 %v2022, %v2023
        %v2025 = vsel %vm1910, %v1510, -inf
        %v2026 = vsel %vm1910, %v1566, -inf
        %v2027 = vmax.f32 %v2025, %v2026
        %v2028 = vsel %vm1910, %v1517, -inf
        %v2029 = vsel %vm1910, %v1573, -inf
        %v2030 = vmax.f32 %v2028, %v2029
        %v2031 = vsel %vm1910, %v1580, -inf
        %v2032 = vsel %vm1910, %v1636, -inf
        %v2033 = vmax.f32 %v2031, %v2032
        %v2034 = vsel %vm1910, %v1587, -inf
        %v2035 = vsel %vm1910, %v1643, -inf
        %v2036 = vmax.f32 %v2034, %v2035
        %v2037 = vsel %vm1910, %v1594, -inf
        %v2038 = vsel %vm1910, %v1650, -inf
        %v2039 = vmax.f32 %v2037, %v2038
        %v2040 = vsel %vm1910, %v1601, -inf
        %v2041 = vsel %vm1910, %v1657, -inf
        %v2042 = vmax.f32 %v2040, %v2041
        %v2043 = vsel %vm1910, %v1608, -inf
        %v2044 = vsel %vm1910, %v1664, -inf
        %v2045 = vmax.f32 %v2043, %v2044
        %v2046 = vsel %vm1910, %v1615, -inf
        %v2047 = vsel %vm1910, %v1671, -inf
        %v2048 = vmax.f32 %v2046, %v2047
        %v2049 = vsel %vm1910, %v1622, -inf
        %v2050 = vsel %vm1910, %v1678, -inf
        %v2051 = vmax.f32 %v2049, %v2050
        %v2052 = vsel %vm1910, %v1629, -inf
        %v2053 = vsel %vm1910, %v1685, -inf
        %v2054 = vmax.f32 %v2052, %v2053
        %v2055 = vsel %vm1910, %v1692, -inf
        %v2056 = vsel %vm1910, %v1748, -inf
        %v2057 = vmax.f32 %v2055, %v2056
        %v2058 = vsel %vm1910, %v1699, -inf
        %v2059 = vsel %vm1910, %v1755, -inf
        %v2060 = vmax.f32 %v2058, %v2059
        %v2061 = vsel %vm1910, %v1706, -inf
        %v2062 = vsel %vm1910, %v1762, -inf
        %v2063 = vmax.f32 %v2061, %v2062
        %v2064 = vsel %vm1910, %v1713, -inf
        %v2065 = vsel %vm1910, %v1769, -inf
        %v2066 = vmax.f32 %v2064, %v2065
        %v2067 = vsel %vm1910, %v1720, -inf
        %v2068 = vsel %vm1910, %v1776, -inf
        %v2069 = vmax.f32 %v2067, %v2068
        %v2070 = vsel %vm1910, %v1727, -inf
        %v2071 = vsel %vm1910, %v1783, -inf
        %v2072 = vmax.f32 %v2070, %v2071
        %v2073 = vsel %vm1910, %v1734, -inf
        %v2074 = vsel %vm1910, %v1790, -inf
        %v2075 = vmax.f32 %v2073, %v2074
        %v2076 = vsel %vm1910, %v1741, -inf
        %v2077 = vsel %vm1910, %v1797, -inf
        %v2078 = vmax.f32 %v2076, %v2077
        %v2079 = vsel %vm1910, %v1804, -inf
        %v2080 = vsel %vm1910, %v1860, -inf
        %v2081 = vmax.f32 %v2079, %v2080
        %v2082 = vsel %vm1910, %v1811, -inf
        %v2083 = vsel %vm1910, %v1867, -inf
        %v2084 = vmax.f32 %v2082, %v2083
        %v2085 = vsel %vm1910, %v1818, -inf
        %v2086 = vsel %vm1910, %v1874, -inf
        %v2087 = vmax.f32 %v2085, %v2086
        %v2088 = vsel %vm1910, %v1825, -inf
        %v2089 = vsel %vm1910, %v1881, -inf
        %v2090 = vmax.f32 %v2088, %v2089
        %v2091 = vsel %vm1910, %v1832, -inf
        %v2092 = vsel %vm1910, %v1888, -inf
        %v2093 = vmax.f32 %v2091, %v2092
        %v2094 = vsel %vm1910, %v1839, -inf
        %v2095 = vsel %vm1910, %v1895, -inf
        %v2096 = vmax.f32 %v2094, %v2095
        %v2097 = vsel %vm1910, %v1846, -inf
        %v2098 = vsel %vm1910, %v1902, -inf
        %v2099 = vmax.f32 %v2097, %v2098
        %v2100 = vsel %vm1910, %v1853, -inf
        %v2101 = vsel %vm1910, %v1909, -inf
        %v2102 = vmax.f32 %v2100, %v2101
        %2103 = vst.msk [vmem:[#allocation2] sm:$0xff] %vm1910, 0.0
        %2104 = vst.msk [vmem:[#allocation2 + $0x8] sm:$0x3] %vm1013, 0.0
        %s2105 = scalar_lea.vmem [#allocation2], 144
        %2106 = vst.msk [vmem:[%s2105] sm:$0xff] %vm1910, 0.0
        %2107 = vst.msk [vmem:[%s2105 + $0x8] sm:$0x3] %vm1013, 0.0
        %vm2108 = vcmask 24576
        %2109 = vst.msk [vmem:[#allocation2] sm:$0x1] %vm2108, 0.0
        %2110 = vst.msk [vmem:[#allocation2 + $0x10] sm:$0x1] %vm2108, 0.0
        %2111 = vst.msk [vmem:[#allocation2 + $0x20] sm:$0x1] %vm2108, 0.0
        %2112 = vst.msk [vmem:[#allocation2 + $0x30] sm:$0x1] %vm2108, 0.0
        %2113 = vst.msk [vmem:[#allocation2 + $0x40] sm:$0x1] %vm2108, 0.0
        %2114 = vst.msk [vmem:[#allocation2 + $0x50] sm:$0x1] %vm2108, 0.0
        %2115 = vst.msk [vmem:[#allocation2 + $0x60] sm:$0x1] %vm2108, 0.0
        %2116 = vst.msk [vmem:[#allocation2 + $0x70] sm:$0x1] %vm2108, 0.0
        %2117 = vst.msk [vmem:[#allocation2 + $0x80] sm:$0x1] %vm2108, 0.0
        %2118 = vst.msk [vmem:[#allocation2 + $0x90] sm:$0x1] %vm2108, 0.0
        %2119 = vst.msk [vmem:[#allocation2 + $0x9] sm:$0x1] %vm2108, 0.0
        %2120 = vst.msk [vmem:[#allocation2 + $0x19] sm:$0x1] %vm2108, 0.0
        %2121 = vst.msk [vmem:[#allocation2 + $0x29] sm:$0x1] %vm2108, 0.0
        %2122 = vst.msk [vmem:[#allocation2 + $0x39] sm:$0x1] %vm2108, 0.0
        %2123 = vst.msk [vmem:[#allocation2 + $0x49] sm:$0x1] %vm2108, 0.0
        %2124 = vst.msk [vmem:[#allocation2 + $0x59] sm:$0x1] %vm2108, 0.0
        %2125 = vst.msk [vmem:[#allocation2 + $0x69] sm:$0x1] %vm2108, 0.0
        %2126 = vst.msk [vmem:[#allocation2 + $0x79] sm:$0x1] %vm2108, 0.0
        %2127 = vst.msk [vmem:[#allocation2 + $0x89] sm:$0x1] %vm2108, 0.0
        %2128 = vst.msk [vmem:[#allocation2 + $0x99] sm:$0x1] %vm2108, 0.0
        %vm2193 = vcmask 1041409
        %v2194 = vsel %vm2193, %v1916, %v1913
        %vm2195 = vcmask 1042434
        %v2196 = vsel %vm2195, %v1919, %v2194
        %vm2197 = vcmask 1043459
        %v2198 = vsel %vm2197, %v1922, %v2196
        %vm2199 = vcmask 1044484
        %v2200 = vsel %vm2199, %v1925, %v2198
        %vm2201 = vcmask 1045509
        %v2202 = vsel %vm2201, %v1928, %v2200
        %vm2203 = vcmask 1046534
        %v2204 = vsel %vm2203, %v1931, %v2202
        %vm2205 = vcmask 1047559
        %v2206 = vsel %vm2205, %v1934, %v2204
        %v2207 = vsel %vm2193, %v1940, %v1937
        %v2208 = vsel %vm2195, %v1943, %v2207
        %v2209 = vsel %vm2197, %v1946, %v2208
        %v2210 = vsel %vm2199, %v1949, %v2209
        %v2211 = vsel %vm2201, %v1952, %v2210
        %v2212 = vsel %vm2203, %v1955, %v2211
        %v2213 = vsel %vm2205, %v1958, %v2212
        %v2214 = vsel %vm2193, %v1964, %v1961
        %v2215 = vsel %vm2195, %v1967, %v2214
        %v2216 = vsel %vm2197, %v1970, %v2215
        %v2217 = vsel %vm2199, %v1973, %v2216
        %v2218 = vsel %vm2201, %v1976, %v2217
        %v2219 = vsel %vm2203, %v1979, %v2218
        %v2220 = vsel %vm2205, %v1982, %v2219
        %v2221 = vsel %vm2193, %v1988, %v1985
        %v2222 = vsel %vm2195, %v1991, %v2221
        %v2223 = vsel %vm2197, %v1994, %v2222
        %v2224 = vsel %vm2199, %v1997, %v2223
        %v2225 = vsel %vm2201, %v2000, %v2224
        %v2226 = vsel %vm2203, %v2003, %v2225
        %v2227 = vsel %vm2205, %v2006, %v2226
        %v2228 = vsel %vm2193, %v2012, %v2009
        %v2229 = vsel %vm2195, %v2015, %v2228
        %v2230 = vsel %vm2197, %v2018, %v2229
        %v2231 = vsel %vm2199, %v2021, %v2230
        %v2232 = vsel %vm2201, %v2024, %v2231
        %v2233 = vsel %vm2203, %v2027, %v2232
        %v2234 = vsel %vm2205, %v2030, %v2233
        %v2235 = vsel %vm2193, %v2036, %v2033
        %v2236 = vsel %vm2195, %v2039, %v2235
        %v2237 = vsel %vm2197, %v2042, %v2236
        %v2238 = vsel %vm2199, %v2045, %v2237
        %v2239 = vsel %vm2201, %v2048, %v2238
        %v2240 = vsel %vm2203, %v2051, %v2239
        %v2241 = vsel %vm2205, %v2054, %v2240
        %v2242 = vsel %vm2193, %v2060, %v2057
        %v2243 = vsel %vm2195, %v2063, %v2242
        %v2244 = vsel %vm2197, %v2066, %v2243
        %v2245 = vsel %vm2199, %v2069, %v2244
        %v2246 = vsel %vm2201, %v2072, %v2245
        %v2247 = vsel %vm2203, %v2075, %v2246
        %v2248 = vsel %vm2205, %v2078, %v2247
        %v2249 = vsel %vm2193, %v2084, %v2081
        %v2250 = vsel %vm2195, %v2087, %v2249
        %v2251 = vsel %vm2197, %v2090, %v2250
        %v2252 = vsel %vm2199, %v2093, %v2251
        %v2253 = vsel %vm2201, %v2096, %v2252
        %v2254 = vsel %vm2203, %v2099, %v2253
        %v2255 = vsel %vm2205, %v2102, %v2254
        %s2264 = scalar_lea.vmem [#allocation2], 16
        %2265 = vst.msk [vmem:[%s2264 + $0x1] sm:$0xff] %vm1910, %v2206
        %2266 = vst.msk [vmem:[%s2264 + $0x11] sm:$0xff] %vm1910, %v2213
        %2267 = vst.msk [vmem:[%s2264 + $0x21] sm:$0xff] %vm1910, %v2220
        %2268 = vst.msk [vmem:[%s2264 + $0x31] sm:$0xff] %vm1910, %v2227
        %2269 = vst.msk [vmem:[%s2264 + $0x41] sm:$0xff] %vm1910, %v2234
        %2270 = vst.msk [vmem:[%s2264 + $0x51] sm:$0xff] %vm1910, %v2241
        %2271 = vst.msk [vmem:[%s2264 + $0x61] sm:$0xff] %vm1910, %v2248
        %2272 = vst.msk [vmem:[%s2264 + $0x71] sm:$0xff] %vm1910, %v2255
        %v2273 = vld [vmem:[#allocation2] sm:$0xff]
        %v2274 = vld [vmem:[#allocation2 + $0x10] sm:$0xff]
        %v2275 = vld [vmem:[#allocation2 + $0x20] sm:$0xff]
        %v2276 = vld [vmem:[#allocation2 + $0x30] sm:$0xff]
        %v2277 = vld [vmem:[#allocation2 + $0x40] sm:$0xff]
        %v2278 = vld [vmem:[#allocation2 + $0x50] sm:$0xff]
        %v2279 = vld [vmem:[#allocation2 + $0x60] sm:$0xff]
        %v2280 = vld [vmem:[#allocation2 + $0x70] sm:$0xff]
        %v2281 = vld [vmem:[%s1] sm:$0xf]
        %v2282 = vld [vmem:[#allocation2 + $0x1] sm:$0xff]
        %v2283 = vld [vmem:[#allocation2 + $0x11] sm:$0xff]
        %v2284 = vld [vmem:[#allocation2 + $0x21] sm:$0xff]
        %v2285 = vld [vmem:[#allocation2 + $0x31] sm:$0xff]
        %v2286 = vld [vmem:[#allocation2 + $0x41] sm:$0xff]
        %v2287 = vld [vmem:[#allocation2 + $0x51] sm:$0xff]
        %v2288 = vld [vmem:[#allocation2 + $0x61] sm:$0xff]
        %v2289 = vld [vmem:[#allocation2 + $0x71] sm:$0xff]
        %v2290 = vld [vmem:[%s1 + $0x4] sm:$0xf]
        %v2292 = vsel %vm1910, %v2282, 0
        %v2295 = vsel %vm1910, %v2283, 0
        %v2298 = vsel %vm1910, %v2284, 0
        %v2301 = vsel %vm1910, %v2285, 0
        %v2304 = vsel %vm1910, %v2286, 0
        %v2307 = vsel %vm1910, %v2287, 0
        %v2310 = vsel %vm1910, %v2288, 0
        %v2313 = vsel %vm1910, %v2289, 0
        %vm2315 = vcmask 1043456
        %v2317 = vsel %vm2315, %v2290, 0
        %2319 = vmatprep.subr.mxu0 0.0
        %2320 = vmatpush1.msra.mxu0 %v2317
        %2321 = vmatprep.subr.mxu0 0.0
        %2322 = vmatpush1.msra.mxu0 0.0
        %2323 = vmatprep.subr.mxu0 0.0
        %2324 = vmatpush1.msra.mxu0 0.0
        %2325 = vmatprep.subr.mxu0 0.0
        %2326 = vmatpush1.msra.mxu0 0.0
        %2327 = vmatprep.subr.mxu0 0.0
        %2328 = vmatpush1.msra.mxu0 0.0
        %2329 = vmatprep.subr.mxu0 0.0
        %2330 = vmatpush1.msra.mxu0 0.0
        %2331 = vmatprep.subr.mxu0 0.0
        %2332 = vmatpush1.msra.mxu0 0.0
        %2333 = vmatprep.subr.mxu0 0.0
        %2334 = vmatpush1.msra.mxu0 0.0
        %2335 = vmatprep.subr.mxu0 0.0
        %2336 = vmatpush1.msra.mxu0 0.0
        %2337 = vmatprep.subr.mxu0 0.0
        %2338 = vmatpush1.msra.mxu0 0.0
        %2339 = vmatprep.subr.mxu0 0.0
        %2340 = vmatpush1.msra.mxu0 0.0
        %2341 = vmatprep.subr.mxu0 0.0
        %2342 = vmatpush1.msra.mxu0 0.0
        %2343 = vmatprep.subr.mxu0 0.0
        %2344 = vmatpush1.msra.mxu0 0.0
        %2345 = vmatprep.subr.mxu0 0.0
        %2346 = vmatpush1.msra.mxu0 0.0
        %2347 = vmatprep.subr.mxu0 0.0
        %2348 = vmatpush1.msra.mxu0 0.0
        %2349 = vmatprep.subr.mxu0 0.0
        %2350 = vmatpush1.msra.mxu0 0.0
        %2351 = vmatprep.subr.mxu0 0.0
        %2352 = vmatpush1.msra.mxu0 0.0
        %2353 = vmatprep.subr.mxu0 0.0
        %2354 = vmatpush1.msra.mxu0 0.0
        %2355 = vmatprep.subr.mxu0 0.0
        %2356 = vmatpush1.msra.mxu0 0.0
        %2357 = vmatprep.subr.mxu0 0.0
        %2358 = vmatpush1.msra.mxu0 0.0
        %2359 = vmatprep.subr.mxu0 0.0
        %2360 = vmatpush1.msra.mxu0 0.0
        %2361 = vmatprep.subr.mxu0 0.0
        %2362 = vmatpush1.msra.mxu0 0.0
        %2363 = vmatprep.subr.mxu0 0.0
        %2364 = vmatpush1.msra.mxu0 0.0
        %2365 = vmatprep.subr.mxu0 0.0
        %2366 = vmatpush1.msra.mxu0 0.0
        %2367 = vmatprep.subr.mxu0 0.0
        %2368 = vmatpush1.msra.mxu0 0.0
        %2369 = vmatprep.subr.mxu0 0.0
        %2370 = vmatpush1.msra.mxu0 0.0
        %2371 = vmatprep.subr.mxu0 0.0
        %2372 = vmatpush1.msra.mxu0 0.0
        %2373 = vmatprep.subr.mxu0 0.0
        %2374 = vmatpush1.msra.mxu0 0.0
        %2375 = vmatprep.subr.mxu0 0.0
        %2376 = vmatpush1.msra.mxu0 0.0
        %2377 = vmatprep.subr.mxu0 0.0
        %2378 = vmatpush1.msra.mxu0 0.0
        %2379 = vmatprep.subr.mxu0 0.0
        %2380 = vmatpush1.msra.mxu0 0.0
        %2381 = vmatprep.subr.mxu0 0.0
        %2382 = vmatpush1.msra.mxu0 0.0
        %2383 = vmatprep.mubr.f32.mxu0 0.0
        %2384 = vmatmul.mubr.f32.gmra.mrb[0].mxu0 %v2292
        %v2385 = vpop.f32.mrb[0].mxu0
        %v2386 = vadd.f32 0.0, %v2385
        %v2387 = vpop.f32.mrb[0].mxu0
        %2388 = vmatprep.mubr.f32.mxu0 0.0
        %2389 = vmatmul.mubr.f32.gmra.mrb[0].mxu0 %v2295
        %v2390 = vpop.f32.mrb[0].mxu0
        %v2391 = vadd.f32 0.0, %v2390
        %v2392 = vpop.f32.mrb[0].mxu0
        %2393 = vmatprep.mubr.f32.mxu0 0.0
        %2394 = vmatmul.mubr.f32.gmra.mrb[0].mxu0 %v2298
        %v2395 = vpop.f32.mrb[0].mxu0
        %v2396 = vadd.f32 0.0, %v2395
        %v2397 = vpop.f32.mrb[0].mxu0
        %2398 = vmatprep.mubr.f32.mxu0 0.0
        %2399 = vmatmul.mubr.f32.gmra.mrb[0].mxu0 %v2301
        %v2400 = vpop.f32.mrb[0].mxu0
        %v2401 = vadd.f32 0.0, %v2400
        %v2402 = vpop.f32.mrb[0].mxu0
        %2403 = vmatprep.mubr.f32.mxu0 0.0
        %2404 = vmatmul.mubr.f32.gmra.mrb[0].mxu0 %v2304
        %v2405 = vpop.f32.mrb[0].mxu0
        %v2406 = vadd.f32 0.0, %v2405
        %v2407 = vpop.f32.mrb[0].mxu0
        %2408 = vmatprep.mubr.f32.mxu0 0.0
        %2409 = vmatmul.mubr.f32.gmra.mrb[0].mxu0 %v2307
        %v2410 = vpop.f32.mrb[0].mxu0
        %v2411 = vadd.f32 0.0, %v2410
        %v2412 = vpop.f32.mrb[0].mxu0
        %2413 = vmatprep.mubr.f32.mxu0 0.0
        %2414 = vmatmul.mubr.f32.gmra.mrb[0].mxu0 %v2310
        %v2415 = vpop.f32.mrb[0].mxu0
        %v2416 = vadd.f32 0.0, %v2415
        %v2417 = vpop.f32.mrb[0].mxu0
        %2418 = vmatprep.mubr.f32.mxu0 0.0
        %2419 = vmatmul.mubr.f32.gmra.mrb[0].mxu0 %v2313
        %v2420 = vpop.f32.mrb[0].mxu0
        %v2421 = vadd.f32 0.0, %v2420
        %v2422 = vpop.f32.mrb[0].mxu0
        %2423 = vdwg.mxu0
        %v2425 = vsel %vm1910, %v2273, 0
        %v2428 = vsel %vm1910, %v2274, 0
        %v2431 = vsel %vm1910, %v2275, 0
        %v2434 = vsel %vm1910, %v2276, 0
        %v2437 = vsel %vm1910, %v2277, 0
        %v2440 = vsel %vm1910, %v2278, 0
        %v2443 = vsel %vm1910, %v2279, 0
        %v2446 = vsel %vm1910, %v2280, 0
        %v2449 = vsel %vm2315, %v2281, 0
        %2451 = vmatprep.subr.mxu0 0.0
        %2452 = vmatpush1.msra.mxu0 %v2449
        %2453 = vmatprep.subr.mxu0 0.0
        %2454 = vmatpush1.msra.mxu0 0.0
        %2455 = vmatprep.subr.mxu0 0.0
        %2456 = vmatpush1.msra.mxu0 0.0
        %2457 = vmatprep.subr.mxu0 0.0
        %2458 = vmatpush1.msra.mxu0 0.0
        %2459 = vmatprep.subr.mxu0 0.0
        %2460 = vmatpush1.msra.mxu0 0.0
        %2461 = vmatprep.subr.mxu0 0.0
        %2462 = vmatpush1.msra.mxu0 0.0
        %2463 = vmatprep.subr.mxu0 0.0
        %2464 = vmatpush1.msra.mxu0 0.0
        %2465 = vmatprep.subr.mxu0 0.0
        %2466 = vmatpush1.msra.mxu0 0.0
        %2467 = vmatprep.subr.mxu0 0.0
        %2468 = vmatpush1.msra.mxu0 0.0
        %2469 = vmatprep.subr.mxu0 0.0
        %2470 = vmatpush1.msra.mxu0 0.0
        %2471 = vmatprep.subr.mxu0 0.0
        %2472 = vmatpush1.msra.mxu0 0.0
        %2473 = vmatprep.subr.mxu0 0.0
        %2474 = vmatpush1.msra.mxu0 0.0
        %2475 = vmatprep.subr.mxu0 0.0
        %2476 = vmatpush1.msra.mxu0 0.0
        %2477 = vmatprep.subr.mxu0 0.0
        %2478 = vmatpush1.msra.mxu0 0.0
        %2479 = vmatprep.subr.mxu0 0.0
        %2480 = vmatpush1.msra.mxu0 0.0
        %2481 = vmatprep.subr.mxu0 0.0
        %2482 = vmatpush1.msra.mxu0 0.0
        %2483 = vmatprep.subr.mxu0 0.0
        %2484 = vmatpush1.msra.mxu0 0.0
        %2485 = vmatprep.subr.mxu0 0.0
        %2486 = vmatpush1.msra.mxu0 0.0
        %2487 = vmatprep.subr.mxu0 0.0
        %2488 = vmatpush1.msra.mxu0 0.0
        %2489 = vmatprep.subr.mxu0 0.0
        %2490 = vmatpush1.msra.mxu0 0.0
        %2491 = vmatprep.subr.mxu0 0.0
        %2492 = vmatpush1.msra.mxu0 0.0
        %2493 = vmatprep.subr.mxu0 0.0
        %2494 = vmatpush1.msra.mxu0 0.0
        %2495 = vmatprep.subr.mxu0 0.0
        %2496 = vmatpush1.msra.mxu0 0.0
        %2497 = vmatprep.subr.mxu0 0.0
        %2498 = vmatpush1.msra.mxu0 0.0
        %2499 = vmatprep.subr.mxu0 0.0
        %2500 = vmatpush1.msra.mxu0 0.0
        %2501 = vmatprep.subr.mxu0 0.0
        %2502 = vmatpush1.msra.mxu0 0.0
        %2503 = vmatprep.subr.mxu0 0.0
        %2504 = vmatpush1.msra.mxu0 0.0
        %2505 = vmatprep.subr.mxu0 0.0
        %2506 = vmatpush1.msra.mxu0 0.0
        %2507 = vmatprep.subr.mxu0 0.0
        %2508 = vmatpush1.msra.mxu0 0.0
        %2509 = vmatprep.subr.mxu0 0.0
        %2510 = vmatpush1.msra.mxu0 0.0
        %2511 = vmatprep.subr.mxu0 0.0
        %2512 = vmatpush1.msra.mxu0 0.0
        %2513 = vmatprep.subr.mxu0 0.0
        %2514 = vmatpush1.msra.mxu0 0.0
        %2515 = vmatprep.mubr.f32.mxu0 0.0
        %2516 = vmatmul.mubr.f32.gmra.mrb[0].mxu0 %v2425
        %v2517 = vpop.f32.mrb[0].mxu0
        %v2518 = vadd.f32 %v2386, %v2517
        %v2519 = vpop.f32.mrb[0].mxu0
        %2520 = vmatprep.mubr.f32.mxu0 0.0
        %2521 = vmatmul.mubr.f32.gmra.mrb[0].mxu0 %v2428
        %v2522 = vpop.f32.mrb[0].mxu0
        %v2523 = vadd.f32 %v2391, %v2522
        %v2524 = vpop.f32.mrb[0].mxu0
        %2525 = vmatprep.mubr.f32.mxu0 0.0
        %2526 = vmatmul.mubr.f32.gmra.mrb[0].mxu0 %v2431
        %v2527 = vpop.f32.mrb[0].mxu0
        %v2528 = vadd.f32 %v2396, %v2527
        %v2529 = vpop.f32.mrb[0].mxu0
        %2530 = vmatprep.mubr.f32.mxu0 0.0
        %2531 = vmatmul.mubr.f32.gmra.mrb[0].mxu0 %v2434
        %v2532 = vpop.f32.mrb[0].mxu0
        %v2533 = vadd.f32 %v2401, %v2532
        %v2534 = vpop.f32.mrb[0].mxu0
        %2535 = vmatprep.mubr.f32.mxu0 0.0
        %2536 = vmatmul.mubr.f32.gmra.mrb[0].mxu0 %v2437
        %v2537 = vpop.f32.mrb[0].mxu0
        %v2538 = vadd.f32 %v2406, %v2537
        %v2539 = vpop.f32.mrb[0].mxu0
        %2540 = vmatprep.mubr.f32.mxu0 0.0
        %2541 = vmatmul.mubr.f32.gmra.mrb[0].mxu0 %v2440
        %v2542 = vpop.f32.mrb[0].mxu0
        %v2543 = vadd.f32 %v2411, %v2542
        %v2544 = vpop.f32.mrb[0].mxu0
        %2545 = vmatprep.mubr.f32.mxu0 0.0
        %2546 = vmatmul.mubr.f32.gmra.mrb[0].mxu0 %v2443
        %v2547 = vpop.f32.mrb[0].mxu0
        %v2548 = vadd.f32 %v2416, %v2547
        %v2549 = vpop.f32.mrb[0].mxu0
        %2550 = vmatprep.mubr.f32.mxu0 0.0
        %2551 = vmatmul.mubr.f32.gmra.mrb[0].mxu0 %v2446
        %v2552 = vpop.f32.mrb[0].mxu0
        %v2553 = vadd.f32 %v2421, %v2552
        %v2554 = vpop.f32.mrb[0].mxu0
        %2555 = vdwg.mxu0
        %v2556 = vld [vmem:[#allocation2 + $0x2] sm:$0xff]
        %v2557 = vld [vmem:[#allocation2 + $0x12] sm:$0xff]
        %v2558 = vld [vmem:[#allocation2 + $0x22] sm:$0xff]
        %v2559 = vld [vmem:[#allocation2 + $0x32] sm:$0xff]
        %v2560 = vld [vmem:[#allocation2 + $0x42] sm:$0xff]
        %v2561 = vld [vmem:[#allocation2 + $0x52] sm:$0xff]
        %v2562 = vld [vmem:[#allocation2 + $0x62] sm:$0xff]
        %v2563 = vld [vmem:[#allocation2 + $0x72] sm:$0xff]
        %v2564 = vld [vmem:[%s1 + $0x8] sm:$0xf]
        %v2566 = vsel %vm1910, %v2556, 0
        %v2569 = vsel %vm1910, %v2557, 0
        %v2572 = vsel %vm1910, %v2558, 0
        %v2575 = vsel %vm1910, %v2559, 0
        %v2578 = vsel %vm1910, %v2560, 0
        %v2581 = vsel %vm1910, %v2561, 0
        %v2584 = vsel %vm1910, %v2562, 0
        %v2587 = vsel %vm1910, %v2563, 0
        %v2590 = vsel %vm2315, %v2564, 0
        %2592 = vmatprep.subr.mxu0 0.0
        %2593 = vmatpush1.msra.mxu0 %v2590
        %2594 = vmatprep.subr.mxu0 0.0
        %2595 = vmatpush1.msra.mxu0 0.0
        %2596 = vmatprep.subr.mxu0 0.0
        %2597 = vmatpush1.msra.mxu0 0.0
        %2598 = vmatprep.subr.mxu0 0.0
        %2599 = vmatpush1.msra.mxu0 0.0
        %2600 = vmatprep.subr.mxu0 0.0
        %2601 = vmatpush1.msra.mxu0 0.0
        %2602 = vmatprep.subr.mxu0 0.0
        %2603 = vmatpush1.msra.mxu0 0.0
        %2604 = vmatprep.subr.mxu0 0.0
        %2605 = vmatpush1.msra.mxu0 0.0
        %2606 = vmatprep.subr.mxu0 0.0
        %2607 = vmatpush1.msra.mxu0 0.0
        %2608 = vmatprep.subr.mxu0 0.0
        %2609 = vmatpush1.msra.mxu0 0.0
        %2610 = vmatprep.subr.mxu0 0.0
        %2611 = vmatpush1.msra.mxu0 0.0
        %2612 = vmatprep.subr.mxu0 0.0
        %2613 = vmatpush1.msra.mxu0 0.0
        %2614 = vmatprep.subr.mxu0 0.0
        %2615 = vmatpush1.msra.mxu0 0.0
        %2616 = vmatprep.subr.mxu0 0.0
        %2617 = vmatpush1.msra.mxu0 0.0
        %2618 = vmatprep.subr.mxu0 0.0
        %2619 = vmatpush1.msra.mxu0 0.0
        %2620 = vmatprep.subr.mxu0 0.0
        %2621 = vmatpush1.msra.mxu0 0.0
        %2622 = vmatprep.subr.mxu0 0.0
        %2623 = vmatpush1.msra.mxu0 0.0
        %2624 = vmatprep.subr.mxu0 0.0
        %2625 = vmatpush1.msra.mxu0 0.0
        %2626 = vmatprep.subr.mxu0 0.0
        %2627 = vmatpush1.msra.mxu0 0.0
        %2628 = vmatprep.subr.mxu0 0.0
        %2629 = vmatpush1.msra.mxu0 0.0
        %2630 = vmatprep.subr.mxu0 0.0
        %2631 = vmatpush1.msra.mxu0 0.0
        %2632 = vmatprep.subr.mxu0 0.0
        %2633 = vmatpush1.msra.mxu0 0.0
        %2634 = vmatprep.subr.mxu0 0.0
        %2635 = vmatpush1.msra.mxu0 0.0
        %2636 = vmatprep.subr.mxu0 0.0
        %2637 = vmatpush1.msra.mxu0 0.0
        %2638 = vmatprep.subr.mxu0 0.0
        %2639 = vmatpush1.msra.mxu0 0.0
        %2640 = vmatprep.subr.mxu0 0.0
        %2641 = vmatpush1.msra.mxu0 0.0
        %2642 = vmatprep.subr.mxu0 0.0
        %2643 = vmatpush1.msra.mxu0 0.0
        %2644 = vmatprep.subr.mxu0 0.0
        %2645 = vmatpush1.msra.mxu0 0.0
        %2646 = vmatprep.subr.mxu0 0.0
        %2647 = vmatpush1.msra.mxu0 0.0
        %2648 = vmatprep.subr.mxu0 0.0
        %2649 = vmatpush1.msra.mxu0 0.0
        %2650 = vmatprep.subr.mxu0 0.0
        %2651 = vmatpush1.msra.mxu0 0.0
        %2652 = vmatprep.subr.mxu0 0.0
        %2653 = vmatpush1.msra.mxu0 0.0
        %2654 = vmatprep.subr.mxu0 0.0
        %2655 = vmatpush1.msra.mxu0 0.0
        %2656 = vmatprep.mubr.f32.mxu0 0.0
        %2657 = vmatmul.mubr.f32.gmra.mrb[0].mxu0 %v2566
        %v2658 = vpop.f32.mrb[0].mxu0
        %v2659 = vadd.f32 0.0, %v2658
        %v2660 = vpop.f32.mrb[0].mxu0
        %2661 = vmatprep.mubr.f32.mxu0 0.0
        %2662 = vmatmul.mubr.f32.gmra.mrb[0].mxu0 %v2569
        %v2663 = vpop.f32.mrb[0].mxu0
        %v2664 = vadd.f32 0.0, %v2663
        %v2665 = vpop.f32.mrb[0].mxu0
        %2666 = vmatprep.mubr.f32.mxu0 0.0
        %2667 = vmatmul.mubr.f32.gmra.mrb[0].mxu0 %v2572
        %v2668 = vpop.f32.mrb[0].mxu0
        %v2669 = vadd.f32 0.0, %v2668
        %v2670 = vpop.f32.mrb[0].mxu0
        %2671 = vmatprep.mubr.f32.mxu0 0.0
        %2672 = vmatmul.mubr.f32.gmra.mrb[0].mxu0 %v2575
        %v2673 = vpop.f32.mrb[0].mxu0
        %v2674 = vadd.f32 0.0, %v2673
        %v2675 = vpop.f32.mrb[0].mxu0
        %2676 = vmatprep.mubr.f32.mxu0 0.0
        %2677 = vmatmul.mubr.f32.gmra.mrb[0].mxu0 %v2578
        %v2678 = vpop.f32.mrb[0].mxu0
        %v2679 = vadd.f32 0.0, %v2678
        %v2680 = vpop.f32.mrb[0].mxu0
        %2681 = vmatprep.mubr.f32.mxu0 0.0
        %2682 = vmatmul.mubr.f32.gmra.mrb[0].mxu0 %v2581
        %v2683 = vpop.f32.mrb[0].mxu0
        %v2684 = vadd.f32 0.0, %v2683
        %v2685 = vpop.f32.mrb[0].mxu0
        %2686 = vmatprep.mubr.f32.mxu0 0.0
        %2687 = vmatmul.mubr.f32.gmra.mrb[0].mxu0 %v2584
        %v2688 = vpop.f32.mrb[0].mxu0
        %v2689 = vadd.f32 0.0, %v2688
        %v2690 = vpop.f32.mrb[0].mxu0
        %2691 = vmatprep.mubr.f32.mxu0 0.0
        %2692 = vmatmul.mubr.f32.gmra.mrb[0].mxu0 %v2587
        %v2693 = vpop.f32.mrb[0].mxu0
        %v2694 = vadd.f32 0.0, %v2693
        %v2695 = vpop.f32.mrb[0].mxu0
        %2696 = vdwg.mxu0
        %v2697 = vadd.f32 %v2518, %v2659
        %v2698 = vadd.f32 %v2523, %v2664
        %v2699 = vadd.f32 %v2528, %v2669
        %v2700 = vadd.f32 %v2533, %v2674
        %v2701 = vadd.f32 %v2538, %v2679
        %v2702 = vadd.f32 %v2543, %v2684
        %v2703 = vadd.f32 %v2548, %v2689
        %v2704 = vadd.f32 %v2553, %v2694
        %v2705 = vld [vmem:[%s2264] sm:$0xff]
        %v2706 = vld [vmem:[%s2264 + $0x10] sm:$0xff]
        %v2707 = vld [vmem:[%s2264 + $0x20] sm:$0xff]
        %v2708 = vld [vmem:[%s2264 + $0x30] sm:$0xff]
        %v2709 = vld [vmem:[%s2264 + $0x40] sm:$0xff]
        %v2710 = vld [vmem:[%s2264 + $0x50] sm:$0xff]
        %v2711 = vld [vmem:[%s2264 + $0x60] sm:$0xff]
        %v2712 = vld [vmem:[%s2264 + $0x70] sm:$0xff]
        %v2713 = vld [vmem:[%s1 + $0xc] sm:$0xf]
        %v2715 = vsel %vm1910, %v2705, 0
        %v2718 = vsel %vm1910, %v2706, 0
        %v2721 = vsel %vm1910, %v2707, 0
        %v2724 = vsel %vm1910, %v2708, 0
        %v2727 = vsel %vm1910, %v2709, 0
        %v2730 = vsel %vm1910, %v2710, 0
        %v2733 = vsel %vm1910, %v2711, 0
        %v2736 = vsel %vm1910, %v2712, 0
        %v2739 = vsel %vm2315, %v2713, 0
        %2741 = vmatprep.subr.mxu0 0.0
        %2742 = vmatpush1.msra.mxu0 %v2739
        %2743 = vmatprep.subr.mxu0 0.0
        %2744 = vmatpush1.msra.mxu0 0.0
        %2745 = vmatprep.subr.mxu0 0.0
        %2746 = vmatpush1.msra.mxu0 0.0
        %2747 = vmatprep.subr.mxu0 0.0
        %2748 = vmatpush1.msra.mxu0 0.0
        %2749 = vmatprep.subr.mxu0 0.0
        %2750 = vmatpush1.msra.mxu0 0.0
        %2751 = vmatprep.subr.mxu0 0.0
        %2752 = vmatpush1.msra.mxu0 0.0
        %2753 = vmatprep.subr.mxu0 0.0
        %2754 = vmatpush1.msra.mxu0 0.0
        %2755 = vmatprep.subr.mxu0 0.0
        %2756 = vmatpush1.msra.mxu0 0.0
        %2757 = vmatprep.subr.mxu0 0.0
        %2758 = vmatpush1.msra.mxu0 0.0
        %2759 = vmatprep.subr.mxu0 0.0
        %2760 = vmatpush1.msra.mxu0 0.0
        %2761 = vmatprep.subr.mxu0 0.0
        %2762 = vmatpush1.msra.mxu0 0.0
        %2763 = vmatprep.subr.mxu0 0.0
        %2764 = vmatpush1.msra.mxu0 0.0
        %2765 = vmatprep.subr.mxu0 0.0
        %2766 = vmatpush1.msra.mxu0 0.0
        %2767 = vmatprep.subr.mxu0 0.0
        %2768 = vmatpush1.msra.mxu0 0.0
        %2769 = vmatprep.subr.mxu0 0.0
        %2770 = vmatpush1.msra.mxu0 0.0
        %2771 = vmatprep.subr.mxu0 0.0
        %2772 = vmatpush1.msra.mxu0 0.0
        %2773 = vmatprep.subr.mxu0 0.0
        %2774 = vmatpush1.msra.mxu0 0.0
        %2775 = vmatprep.subr.mxu0 0.0
        %2776 = vmatpush1.msra.mxu0 0.0
        %2777 = vmatprep.subr.mxu0 0.0
        %2778 = vmatpush1.msra.mxu0 0.0
        %2779 = vmatprep.subr.mxu0 0.0
        %2780 = vmatpush1.msra.mxu0 0.0
        %2781 = vmatprep.subr.mxu0 0.0
        %2782 = vmatpush1.msra.mxu0 0.0
        %2783 = vmatprep.subr.mxu0 0.0
        %2784 = vmatpush1.msra.mxu0 0.0
        %2785 = vmatprep.subr.mxu0 0.0
        %2786 = vmatpush1.msra.mxu0 0.0
        %2787 = vmatprep.subr.mxu0 0.0
        %2788 = vmatpush1.msra.mxu0 0.0
        %2789 = vmatprep.subr.mxu0 0.0
        %2790 = vmatpush1.msra.mxu0 0.0
        %2791 = vmatprep.subr.mxu0 0.0
        %2792 = vmatpush1.msra.mxu0 0.0
        %2793 = vmatprep.subr.mxu0 0.0
        %2794 = vmatpush1.msra.mxu0 0.0
        %2795 = vmatprep.subr.mxu0 0.0
        %2796 = vmatpush1.msra.mxu0 0.0
        %2797 = vmatprep.subr.mxu0 0.0
        %2798 = vmatpush1.msra.mxu0 0.0
        %2799 = vmatprep.subr.mxu0 0.0
        %2800 = vmatpush1.msra.mxu0 0.0
        %2801 = vmatprep.subr.mxu0 0.0
        %2802 = vmatpush1.msra.mxu0 0.0
        %2803 = vmatprep.subr.mxu0 0.0
        %2804 = vmatpush1.msra.mxu0 0.0
        %2805 = vmatprep.mubr.f32.mxu0 0.0
        %2806 = vmatmul.mubr.f32.gmra.mrb[0].mxu0 %v2715
        %v2807 = vpop.f32.mrb[0].mxu0
        %v2808 = vadd.f32 0.0, %v2807
        %v2809 = vpop.f32.mrb[0].mxu0
        %2810 = vmatprep.mubr.f32.mxu0 0.0
        %2811 = vmatmul.mubr.f32.gmra.mrb[0].mxu0 %v2718
        %v2812 = vpop.f32.mrb[0].mxu0
        %v2813 = vadd.f32 0.0, %v2812
        %v2814 = vpop.f32.mrb[0].mxu0
        %2815 = vmatprep.mubr.f32.mxu0 0.0
        %2816 = vmatmul.mubr.f32.gmra.mrb[0].mxu0 %v2721
        %v2817 = vpop.f32.mrb[0].mxu0
        %v2818 = vadd.f32 0.0, %v2817
        %v2819 = vpop.f32.mrb[0].mxu0
        %2820 = vmatprep.mubr.f32.mxu0 0.0
        %2821 = vmatmul.mubr.f32.gmra.mrb[0].mxu0 %v2724
        %v2822 = vpop.f32.mrb[0].mxu0
        %v2823 = vadd.f32 0.0, %v2822
        %v2824 = vpop.f32.mrb[0].mxu0
        %2825 = vmatprep.mubr.f32.mxu0 0.0
        %2826 = vmatmul.mubr.f32.gmra.mrb[0].mxu0 %v2727
        %v2827 = vpop.f32.mrb[0].mxu0
        %v2828 = vadd.f32 0.0, %v2827
        %v2829 = vpop.f32.mrb[0].mxu0
        %2830 = vmatprep.mubr.f32.mxu0 0.0
        %2831 = vmatmul.mubr.f32.gmra.mrb[0].mxu0 %v2730
        %v2832 = vpop.f32.mrb[0].mxu0
        %v2833 = vadd.f32 0.0, %v2832
        %v2834 = vpop.f32.mrb[0].mxu0
        %2835 = vmatprep.mubr.f32.mxu0 0.0
        %2836 = vmatmul.mubr.f32.gmra.mrb[0].mxu0 %v2733
        %v2837 = vpop.f32.mrb[0].mxu0
        %v2838 = vadd.f32 0.0, %v2837
        %v2839 = vpop.f32.mrb[0].mxu0
        %2840 = vmatprep.mubr.f32.mxu0 0.0
        %2841 = vmatmul.mubr.f32.gmra.mrb[0].mxu0 %v2736
        %v2842 = vpop.f32.mrb[0].mxu0
        %v2843 = vadd.f32 0.0, %v2842
        %v2844 = vpop.f32.mrb[0].mxu0
        %2845 = vdwg.mxu0
        %v2846 = vadd.f32 %v2697, %v2808
        %v2847 = vadd.f32 %v2698, %v2813
        %v2848 = vadd.f32 %v2699, %v2818
        %v2849 = vadd.f32 %v2700, %v2823
        %v2850 = vadd.f32 %v2701, %v2828
        %v2851 = vadd.f32 %v2702, %v2833
        %v2852 = vadd.f32 %v2703, %v2838
        %v2853 = vadd.f32 %v2704, %v2843
        %v2854 = vld [vmem:[%s2264 + $0x1] sm:$0xff]
        %v2855 = vld [vmem:[%s2264 + $0x11] sm:$0xff]
        %v2856 = vld [vmem:[%s2264 + $0x21] sm:$0xff]
        %v2857 = vld [vmem:[%s2264 + $0x31] sm:$0xff]
        %v2858 = vld [vmem:[%s2264 + $0x41] sm:$0xff]
        %v2859 = vld [vmem:[%s2264 + $0x51] sm:$0xff]
        %v2860 = vld [vmem:[%s2264 + $0x61] sm:$0xff]
        %v2861 = vld [vmem:[%s2264 + $0x71] sm:$0xff]
        %v2862 = vld [vmem:[%s1 + $0x10] sm:$0xf]
        %v2864 = vsel %vm1910, %v2854, 0
        %v2867 = vsel %vm1910, %v2855, 0
        %v2870 = vsel %vm1910, %v2856, 0
        %v2873 = vsel %vm1910, %v2857, 0
        %v2876 = vsel %vm1910, %v2858, 0
        %v2879 = vsel %vm1910, %v2859, 0
        %v2882 = vsel %vm1910, %v2860, 0
        %v2885 = vsel %vm1910, %v2861, 0
        %v2888 = vsel %vm2315, %v2862, 0
        %2890 = vmatprep.subr.mxu0 0.0
        %2891 = vmatpush1.msra.mxu0 %v2888
        %2892 = vmatprep.subr.mxu0 0.0
        %2893 = vmatpush1.msra.mxu0 0.0
        %2894 = vmatprep.subr.mxu0 0.0
        %2895 = vmatpush1.msra.mxu0 0.0
        %2896 = vmatprep.subr.mxu0 0.0
        %2897 = vmatpush1.msra.mxu0 0.0
        %2898 = vmatprep.subr.mxu0 0.0
        %2899 = vmatpush1.msra.mxu0 0.0
        %2900 = vmatprep.subr.mxu0 0.0
        %2901 = vmatpush1.msra.mxu0 0.0
        %2902 = vmatprep.subr.mxu0 0.0
        %2903 = vmatpush1.msra.mxu0 0.0
        %2904 = vmatprep.subr.mxu0 0.0
        %2905 = vmatpush1.msra.mxu0 0.0
        %2906 = vmatprep.subr.mxu0 0.0
        %2907 = vmatpush1.msra.mxu0 0.0
        %2908 = vmatprep.subr.mxu0 0.0
        %2909 = vmatpush1.msra.mxu0 0.0
        %2910 = vmatprep.subr.mxu0 0.0
        %2911 = vmatpush1.msra.mxu0 0.0
        %2912 = vmatprep.subr.mxu0 0.0
        %2913 = vmatpush1.msra.mxu0 0.0
        %2914 = vmatprep.subr.mxu0 0.0
        %2915 = vmatpush1.msra.mxu0 0.0
        %2916 = vmatprep.subr.mxu0 0.0
        %2917 = vmatpush1.msra.mxu0 0.0
        %2918 = vmatprep.subr.mxu0 0.0
        %2919 = vmatpush1.msra.mxu0 0.0
        %2920 = vmatprep.subr.mxu0 0.0
        %2921 = vmatpush1.msra.mxu0 0.0
        %2922 = vmatprep.subr.mxu0 0.0
        %2923 = vmatpush1.msra.mxu0 0.0
        %2924 = vmatprep.subr.mxu0 0.0
        %2925 = vmatpush1.msra.mxu0 0.0
        %2926 = vmatprep.subr.mxu0 0.0
        %2927 = vmatpush1.msra.mxu0 0.0
        %2928 = vmatprep.subr.mxu0 0.0
        %2929 = vmatpush1.msra.mxu0 0.0
        %2930 = vmatprep.subr.mxu0 0.0
        %2931 = vmatpush1.msra.mxu0 0.0
        %2932 = vmatprep.subr.mxu0 0.0
        %2933 = vmatpush1.msra.mxu0 0.0
        %2934 = vmatprep.subr.mxu0 0.0
        %2935 = vmatpush1.msra.mxu0 0.0
        %2936 = vmatprep.subr.mxu0 0.0
        %2937 = vmatpush1.msra.mxu0 0.0
        %2938 = vmatprep.subr.mxu0 0.0
        %2939 = vmatpush1.msra.mxu0 0.0
        %2940 = vmatprep.subr.mxu0 0.0
        %2941 = vmatpush1.msra.mxu0 0.0
        %2942 = vmatprep.subr.mxu0 0.0
        %2943 = vmatpush1.msra.mxu0 0.0
        %2944 = vmatprep.subr.mxu0 0.0
        %2945 = vmatpush1.msra.mxu0 0.0
        %2946 = vmatprep.subr.mxu0 0.0
        %2947 = vmatpush1.msra.mxu0 0.0
        %2948 = vmatprep.subr.mxu0 0.0
        %2949 = vmatpush1.msra.mxu0 0.0
        %2950 = vmatprep.subr.mxu0 0.0
        %2951 = vmatpush1.msra.mxu0 0.0
        %2952 = vmatprep.subr.mxu0 0.0
        %2953 = vmatpush1.msra.mxu0 0.0
        %2954 = vmatprep.mubr.f32.mxu0 0.0
        %2955 = vmatmul.mubr.f32.gmra.mrb[0].mxu0 %v2864
        %v2956 = vpop.f32.mrb[0].mxu0
        %v2957 = vadd.f32 0.0, %v2956
        %v2958 = vpop.f32.mrb[0].mxu0
        %2959 = vmatprep.mubr.f32.mxu0 0.0
        %2960 = vmatmul.mubr.f32.gmra.mrb[0].mxu0 %v2867
        %v2961 = vpop.f32.mrb[0].mxu0
        %v2962 = vadd.f32 0.0, %v2961
        %v2963 = vpop.f32.mrb[0].mxu0
        %2964 = vmatprep.mubr.f32.mxu0 0.0
        %2965 = vmatmul.mubr.f32.gmra.mrb[0].mxu0 %v2870
        %v2966 = vpop.f32.mrb[0].mxu0
        %v2967 = vadd.f32 0.0, %v2966
        %v2968 = vpop.f32.mrb[0].mxu0
        %2969 = vmatprep.mubr.f32.mxu0 0.0
        %2970 = vmatmul.mubr.f32.gmra.mrb[0].mxu0 %v2873
        %v2971 = vpop.f32.mrb[0].mxu0
        %v2972 = vadd.f32 0.0, %v2971
        %v2973 = vpop.f32.mrb[0].mxu0
        %2974 = vmatprep.mubr.f32.mxu0 0.0
        %2975 = vmatmul.mubr.f32.gmra.mrb[0].mxu0 %v2876
        %v2976 = vpop.f32.mrb[0].mxu0
        %v2977 = vadd.f32 0.0, %v2976
        %v2978 = vpop.f32.mrb[0].mxu0
        %2979 = vmatprep.mubr.f32.mxu0 0.0
        %2980 = vmatmul.mubr.f32.gmra.mrb[0].mxu0 %v2879
        %v2981 = vpop.f32.mrb[0].mxu0
        %v2982 = vadd.f32 0.0, %v2981
        %v2983 = vpop.f32.mrb[0].mxu0
        %2984 = vmatprep.mubr.f32.mxu0 0.0
        %2985 = vmatmul.mubr.f32.gmra.mrb[0].mxu0 %v2882
        %v2986 = vpop.f32.mrb[0].mxu0
        %v2987 = vadd.f32 0.0, %v2986
        %v2988 = vpop.f32.mrb[0].mxu0
        %2989 = vmatprep.mubr.f32.mxu0 0.0
        %2990 = vmatmul.mubr.f32.gmra.mrb[0].mxu0 %v2885
        %v2991 = vpop.f32.mrb[0].mxu0
        %v2992 = vadd.f32 0.0, %v2991
        %v2993 = vpop.f32.mrb[0].mxu0
        %2994 = vdwg.mxu0
        %v2995 = vadd.f32 %v2846, %v2957
        %v2996 = vadd.f32 %v2847, %v2962
        %v2997 = vadd.f32 %v2848, %v2967
        %v2998 = vadd.f32 %v2849, %v2972
        %v2999 = vadd.f32 %v2850, %v2977
        %v3000 = vadd.f32 %v2851, %v2982
        %v3001 = vadd.f32 %v2852, %v2987
        %v3002 = vadd.f32 %v2853, %v2992
        %v3003 = vld [vmem:[%s2264 + $0x2] sm:$0xff]
        %v3004 = vld [vmem:[%s2264 + $0x12] sm:$0xff]
        %v3005 = vld [vmem:[%s2264 + $0x22] sm:$0xff]
        %v3006 = vld [vmem:[%s2264 + $0x32] sm:$0xff]
        %v3007 = vld [vmem:[%s2264 + $0x42] sm:$0xff]
        %v3008 = vld [vmem:[%s2264 + $0x52] sm:$0xff]
        %v3009 = vld [vmem:[%s2264 + $0x62] sm:$0xff]
        %v3010 = vld [vmem:[%s2264 + $0x72] sm:$0xff]
        %v3011 = vld [vmem:[%s1 + $0x14] sm:$0xf]
        %v3013 = vsel %vm1910, %v3003, 0
        %v3016 = vsel %vm1910, %v3004, 0
        %v3019 = vsel %vm1910, %v3005, 0
        %v3022 = vsel %vm1910, %v3006, 0
        %v3025 = vsel %vm1910, %v3007, 0
        %v3028 = vsel %vm1910, %v3008, 0
        %v3031 = vsel %vm1910, %v3009, 0
        %v3034 = vsel %vm1910, %v3010, 0
        %v3037 = vsel %vm2315, %v3011, 0
        %3039 = vmatprep.subr.mxu0 0.0
        %3040 = vmatpush1.msra.mxu0 %v3037
        %3041 = vmatprep.subr.mxu0 0.0
        %3042 = vmatpush1.msra.mxu0 0.0
        %3043 = vmatprep.subr.mxu0 0.0
        %3044 = vmatpush1.msra.mxu0 0.0
        %3045 = vmatprep.subr.mxu0 0.0
        %3046 = vmatpush1.msra.mxu0 0.0
        %3047 = vmatprep.subr.mxu0 0.0
        %3048 = vmatpush1.msra.mxu0 0.0
        %3049 = vmatprep.subr.mxu0 0.0
        %3050 = vmatpush1.msra.mxu0 0.0
        %3051 = vmatprep.subr.mxu0 0.0
        %3052 = vmatpush1.msra.mxu0 0.0
        %3053 = vmatprep.subr.mxu0 0.0
        %3054 = vmatpush1.msra.mxu0 0.0
        %3055 = vmatprep.subr.mxu0 0.0
        %3056 = vmatpush1.msra.mxu0 0.0
        %3057 = vmatprep.subr.mxu0 0.0
        %3058 = vmatpush1.msra.mxu0 0.0
        %3059 = vmatprep.subr.mxu0 0.0
        %3060 = vmatpush1.msra.mxu0 0.0
        %3061 = vmatprep.subr.mxu0 0.0
        %3062 = vmatpush1.msra.mxu0 0.0
        %3063 = vmatprep.subr.mxu0 0.0
        %3064 = vmatpush1.msra.mxu0 0.0
        %3065 = vmatprep.subr.mxu0 0.0
        %3066 = vmatpush1.msra.mxu0 0.0
        %3067 = vmatprep.subr.mxu0 0.0
        %3068 = vmatpush1.msra.mxu0 0.0
        %3069 = vmatprep.subr.mxu0 0.0
        %3070 = vmatpush1.msra.mxu0 0.0
        %3071 = vmatprep.subr.mxu0 0.0
        %3072 = vmatpush1.msra.mxu0 0.0
        %3073 = vmatprep.subr.mxu0 0.0
        %3074 = vmatpush1.msra.mxu0 0.0
        %3075 = vmatprep.subr.mxu0 0.0
        %3076 = vmatpush1.msra.mxu0 0.0
        %3077 = vmatprep.subr.mxu0 0.0
        %3078 = vmatpush1.msra.mxu0 0.0
        %3079 = vmatprep.subr.mxu0 0.0
        %3080 = vmatpush1.msra.mxu0 0.0
        %3081 = vmatprep.subr.mxu0 0.0
        %3082 = vmatpush1.msra.mxu0 0.0
        %3083 = vmatprep.subr.mxu0 0.0
        %3084 = vmatpush1.msra.mxu0 0.0
        %3085 = vmatprep.subr.mxu0 0.0
        %3086 = vmatpush1.msra.mxu0 0.0
        %3087 = vmatprep.subr.mxu0 0.0
        %3088 = vmatpush1.msra.mxu0 0.0
        %3089 = vmatprep.subr.mxu0 0.0
        %3090 = vmatpush1.msra.mxu0 0.0
        %3091 = vmatprep.subr.mxu0 0.0
        %3092 = vmatpush1.msra.mxu0 0.0
        %3093 = vmatprep.subr.mxu0 0.0
        %3094 = vmatpush1.msra.mxu0 0.0
        %3095 = vmatprep.subr.mxu0 0.0
        %3096 = vmatpush1.msra.mxu0 0.0
        %3097 = vmatprep.subr.mxu0 0.0
        %3098 = vmatpush1.msra.mxu0 0.0
        %3099 = vmatprep.subr.mxu0 0.0
        %3100 = vmatpush1.msra.mxu0 0.0
        %3101 = vmatprep.subr.mxu0 0.0
        %3102 = vmatpush1.msra.mxu0 0.0
        %3103 = vmatprep.mubr.f32.mxu0 0.0
        %3104 = vmatmul.mubr.f32.gmra.mrb[0].mxu0 %v3013
        %v3105 = vpop.f32.mrb[0].mxu0
        %v3106 = vadd.f32 0.0, %v3105
        %v3107 = vpop.f32.mrb[0].mxu0
        %3108 = vmatprep.mubr.f32.mxu0 0.0
        %3109 = vmatmul.mubr.f32.gmra.mrb[0].mxu0 %v3016
        %v3110 = vpop.f32.mrb[0].mxu0
        %v3111 = vadd.f32 0.0, %v3110
        %v3112 = vpop.f32.mrb[0].mxu0
        %3113 = vmatprep.mubr.f32.mxu0 0.0
        %3114 = vmatmul.mubr.f32.gmra.mrb[0].mxu0 %v3019
        %v3115 = vpop.f32.mrb[0].mxu0
        %v3116 = vadd.f32 0.0, %v3115
        %v3117 = vpop.f32.mrb[0].mxu0
        %3118 = vmatprep.mubr.f32.mxu0 0.0
        %3119 = vmatmul.mubr.f32.gmra.mrb[0].mxu0 %v3022
        %v3120 = vpop.f32.mrb[0].mxu0
        %v3121 = vadd.f32 0.0, %v3120
        %v3122 = vpop.f32.mrb[0].mxu0
        %3123 = vmatprep.mubr.f32.mxu0 0.0
        %3124 = vmatmul.mubr.f32.gmra.mrb[0].mxu0 %v3025
        %v3125 = vpop.f32.mrb[0].mxu0
        %v3126 = vadd.f32 0.0, %v3125
        %v3127 = vpop.f32.mrb[0].mxu0
        %3128 = vmatprep.mubr.f32.mxu0 0.0
        %3129 = vmatmul.mubr.f32.gmra.mrb[0].mxu0 %v3028
        %v3130 = vpop.f32.mrb[0].mxu0
        %v3131 = vadd.f32 0.0, %v3130
        %v3132 = vpop.f32.mrb[0].mxu0
        %3133 = vmatprep.mubr.f32.mxu0 0.0
        %3134 = vmatmul.mubr.f32.gmra.mrb[0].mxu0 %v3031
        %v3135 = vpop.f32.mrb[0].mxu0
        %v3136 = vadd.f32 0.0, %v3135
        %v3137 = vpop.f32.mrb[0].mxu0
        %3138 = vmatprep.mubr.f32.mxu0 0.0
        %3139 = vmatmul.mubr.f32.gmra.mrb[0].mxu0 %v3034
        %v3140 = vpop.f32.mrb[0].mxu0
        %v3141 = vadd.f32 0.0, %v3140
        %v3142 = vpop.f32.mrb[0].mxu0
        %3143 = vdwg.mxu0
        %v3144 = vadd.f32 %v2995, %v3106
        %v3145 = vadd.f32 %v2996, %v3111
        %v3146 = vadd.f32 %v2997, %v3116
        %v3147 = vadd.f32 %v2998, %v3121
        %v3148 = vadd.f32 %v2999, %v3126
        %v3149 = vadd.f32 %v3000, %v3131
        %v3150 = vadd.f32 %v3001, %v3136
        %v3151 = vadd.f32 %v3002, %v3141
        %s3152 = scalar_lea.vmem [#allocation2], 32
        %v3153 = vld [vmem:[%s3152] sm:$0xff]
        %v3154 = vld [vmem:[%s3152 + $0x10] sm:$0xff]
        %v3155 = vld [vmem:[%s3152 + $0x20] sm:$0xff]
        %v3156 = vld [vmem:[%s3152 + $0x30] sm:$0xff]
        %v3157 = vld [vmem:[%s3152 + $0x40] sm:$0xff]
        %v3158 = vld [vmem:[%s3152 + $0x50] sm:$0xff]
        %v3159 = vld [vmem:[%s3152 + $0x60] sm:$0xff]
        %v3160 = vld [vmem:[%s3152 + $0x70] sm:$0xff]
        %v3161 = vld [vmem:[%s1 + $0x18] sm:$0xf]
        %v3163 = vsel %vm1910, %v3153, 0
        %v3166 = vsel %vm1910, %v3154, 0
        %v3169 = vsel %vm1910, %v3155, 0
        %v3172 = vsel %vm1910, %v3156, 0
        %v3175 = vsel %vm1910, %v3157, 0
        %v3178 = vsel %vm1910, %v3158, 0
        %v3181 = vsel %vm1910, %v3159, 0
        %v3184 = vsel %vm1910, %v3160, 0
        %v3187 = vsel %vm2315, %v3161, 0
        %3189 = vmatprep.subr.mxu0 0.0
        %3190 = vmatpush1.msra.mxu0 %v3187
        %3191 = vmatprep.subr.mxu0 0.0
        %3192 = vmatpush1.msra.mxu0 0.0
        %3193 = vmatprep.subr.mxu0 0.0
        %3194 = vmatpush1.msra.mxu0 0.0
        %3195 = vmatprep.subr.mxu0 0.0
        %3196 = vmatpush1.msra.mxu0 0.0
        %3197 = vmatprep.subr.mxu0 0.0
        %3198 = vmatpush1.msra.mxu0 0.0
        %3199 = vmatprep.subr.mxu0 0.0
        %3200 = vmatpush1.msra.mxu0 0.0
        %3201 = vmatprep.subr.mxu0 0.0
        %3202 = vmatpush1.msra.mxu0 0.0
        %3203 = vmatprep.subr.mxu0 0.0
        %3204 = vmatpush1.msra.mxu0 0.0
        %3205 = vmatprep.subr.mxu0 0.0
        %3206 = vmatpush1.msra.mxu0 0.0
        %3207 = vmatprep.subr.mxu0 0.0
        %3208 = vmatpush1.msra.mxu0 0.0
        %3209 = vmatprep.subr.mxu0 0.0
        %3210 = vmatpush1.msra.mxu0 0.0
        %3211 = vmatprep.subr.mxu0 0.0
        %3212 = vmatpush1.msra.mxu0 0.0
        %3213 = vmatprep.subr.mxu0 0.0
        %3214 = vmatpush1.msra.mxu0 0.0
        %3215 = vmatprep.subr.mxu0 0.0
        %3216 = vmatpush1.msra.mxu0 0.0
        %3217 = vmatprep.subr.mxu0 0.0
        %3218 = vmatpush1.msra.mxu0 0.0
        %3219 = vmatprep.subr.mxu0 0.0
        %3220 = vmatpush1.msra.mxu0 0.0
        %3221 = vmatprep.subr.mxu0 0.0
        %3222 = vmatpush1.msra.mxu0 0.0
        %3223 = vmatprep.subr.mxu0 0.0
        %3224 = vmatpush1.msra.mxu0 0.0
        %3225 = vmatprep.subr.mxu0 0.0
        %3226 = vmatpush1.msra.mxu0 0.0
        %3227 = vmatprep.subr.mxu0 0.0
        %3228 = vmatpush1.msra.mxu0 0.0
        %3229 = vmatprep.subr.mxu0 0.0
        %3230 = vmatpush1.msra.mxu0 0.0
        %3231 = vmatprep.subr.mxu0 0.0
        %3232 = vmatpush1.msra.mxu0 0.0
        %3233 = vmatprep.subr.mxu0 0.0
        %3234 = vmatpush1.msra.mxu0 0.0
        %3235 = vmatprep.subr.mxu0 0.0
        %3236 = vmatpush1.msra.mxu0 0.0
        %3237 = vmatprep.subr.mxu0 0.0
        %3238 = vmatpush1.msra.mxu0 0.0
        %3239 = vmatprep.subr.mxu0 0.0
        %3240 = vmatpush1.msra.mxu0 0.0
        %3241 = vmatprep.subr.mxu0 0.0
        %3242 = vmatpush1.msra.mxu0 0.0
        %3243 = vmatprep.subr.mxu0 0.0
        %3244 = vmatpush1.msra.mxu0 0.0
        %3245 = vmatprep.subr.mxu0 0.0
        %3246 = vmatpush1.msra.mxu0 0.0
        %3247 = vmatprep.subr.mxu0 0.0
        %3248 = vmatpush1.msra.mxu0 0.0
        %3249 = vmatprep.subr.mxu0 0.0
        %3250 = vmatpush1.msra.mxu0 0.0
        %3251 = vmatprep.subr.mxu0 0.0
        %3252 = vmatpush1.msra.mxu0 0.0
        %3253 = vmatprep.mubr.f32.mxu0 0.0
        %3254 = vmatmul.mubr.f32.gmra.mrb[0].mxu0 %v3163
        %v3255 = vpop.f32.mrb[0].mxu0
        %v3256 = vadd.f32 0.0, %v3255
        %v3257 = vpop.f32.mrb[0].mxu0
        %3258 = vmatprep.mubr.f32.mxu0 0.0
        %3259 = vmatmul.mubr.f32.gmra.mrb[0].mxu0 %v3166
        %v3260 = vpop.f32.mrb[0].mxu0
        %v3261 = vadd.f32 0.0, %v3260
        %v3262 = vpop.f32.mrb[0].mxu0
        %3263 = vmatprep.mubr.f32.mxu0 0.0
        %3264 = vmatmul.mubr.f32.gmra.mrb[0].mxu0 %v3169
        %v3265 = vpop.f32.mrb[0].mxu0
        %v3266 = vadd.f32 0.0, %v3265
        %v3267 = vpop.f32.mrb[0].mxu0
        %3268 = vmatprep.mubr.f32.mxu0 0.0
        %3269 = vmatmul.mubr.f32.gmra.mrb[0].mxu0 %v3172
        %v3270 = vpop.f32.mrb[0].mxu0
        %v3271 = vadd.f32 0.0, %v3270
        %v3272 = vpop.f32.mrb[0].mxu0
        %3273 = vmatprep.mubr.f32.mxu0 0.0
        %3274 = vmatmul.mubr.f32.gmra.mrb[0].mxu0 %v3175
        %v3275 = vpop.f32.mrb[0].mxu0
        %v3276 = vadd.f32 0.0, %v3275
        %v3277 = vpop.f32.mrb[0].mxu0
        %3278 = vmatprep.mubr.f32.mxu0 0.0
        %3279 = vmatmul.mubr.f32.gmra.mrb[0].mxu0 %v3178
        %v3280 = vpop.f32.mrb[0].mxu0
        %v3281 = vadd.f32 0.0, %v3280
        %v3282 = vpop.f32.mrb[0].mxu0
        %3283 = vmatprep.mubr.f32.mxu0 0.0
        %3284 = vmatmul.mubr.f32.gmra.mrb[0].mxu0 %v3181
        %v3285 = vpop.f32.mrb[0].mxu0
        %v3286 = vadd.f32 0.0, %v3285
        %v3287 = vpop.f32.mrb[0].mxu0
        %3288 = vmatprep.mubr.f32.mxu0 0.0
        %3289 = vmatmul.mubr.f32.gmra.mrb[0].mxu0 %v3184
        %v3290 = vpop.f32.mrb[0].mxu0
        %v3291 = vadd.f32 0.0, %v3290
        %v3292 = vpop.f32.mrb[0].mxu0
        %3293 = vdwg.mxu0
        %v3294 = vadd.f32 %v3144, %v3256
        %v3295 = vadd.f32 %v3145, %v3261
        %v3296 = vadd.f32 %v3146, %v3266
        %v3297 = vadd.f32 %v3147, %v3271
        %v3298 = vadd.f32 %v3148, %v3276
        %v3299 = vadd.f32 %v3149, %v3281
        %v3300 = vadd.f32 %v3150, %v3286
        %v3301 = vadd.f32 %v3151, %v3291
        %v3302 = vld [vmem:[%s3152 + $0x1] sm:$0xff]
        %v3303 = vld [vmem:[%s3152 + $0x11] sm:$0xff]
        %v3304 = vld [vmem:[%s3152 + $0x21] sm:$0xff]
        %v3305 = vld [vmem:[%s3152 + $0x31] sm:$0xff]
        %v3306 = vld [vmem:[%s3152 + $0x41] sm:$0xff]
        %v3307 = vld [vmem:[%s3152 + $0x51] sm:$0xff]
        %v3308 = vld [vmem:[%s3152 + $0x61] sm:$0xff]
        %v3309 = vld [vmem:[%s3152 + $0x71] sm:$0xff]
        %v3310 = vld [vmem:[%s1 + $0x1c] sm:$0xf]
        %v3312 = vsel %vm1910, %v3302, 0
        %v3315 = vsel %vm1910, %v3303, 0
        %v3318 = vsel %vm1910, %v3304, 0
        %v3321 = vsel %vm1910, %v3305, 0
        %v3324 = vsel %vm1910, %v3306, 0
        %v3327 = vsel %vm1910, %v3307, 0
        %v3330 = vsel %vm1910, %v3308, 0
        %v3333 = vsel %vm1910, %v3309, 0
        %v3336 = vsel %vm2315, %v3310, 0
        %3338 = vmatprep.subr.mxu0 0.0
        %3339 = vmatpush1.msra.mxu0 %v3336
        %3340 = vmatprep.subr.mxu0 0.0
        %3341 = vmatpush1.msra.mxu0 0.0
        %3342 = vmatprep.subr.mxu0 0.0
        %3343 = vmatpush1.msra.mxu0 0.0
        %3344 = vmatprep.subr.mxu0 0.0
        %3345 = vmatpush1.msra.mxu0 0.0
        %3346 = vmatprep.subr.mxu0 0.0
        %3347 = vmatpush1.msra.mxu0 0.0
        %3348 = vmatprep.subr.mxu0 0.0
        %3349 = vmatpush1.msra.mxu0 0.0
        %3350 = vmatprep.subr.mxu0 0.0
        %3351 = vmatpush1.msra.mxu0 0.0
        %3352 = vmatprep.subr.mxu0 0.0
        %3353 = vmatpush1.msra.mxu0 0.0
        %3354 = vmatprep.subr.mxu0 0.0
        %3355 = vmatpush1.msra.mxu0 0.0
        %3356 = vmatprep.subr.mxu0 0.0
        %3357 = vmatpush1.msra.mxu0 0.0
        %3358 = vmatprep.subr.mxu0 0.0
        %3359 = vmatpush1.msra.mxu0 0.0
        %3360 = vmatprep.subr.mxu0 0.0
        %3361 = vmatpush1.msra.mxu0 0.0
        %3362 = vmatprep.subr.mxu0 0.0
        %3363 = vmatpush1.msra.mxu0 0.0
        %3364 = vmatprep.subr.mxu0 0.0
        %3365 = vmatpush1.msra.mxu0 0.0
        %3366 = vmatprep.subr.mxu0 0.0
        %3367 = vmatpush1.msra.mxu0 0.0
        %3368 = vmatprep.subr.mxu0 0.0
        %3369 = vmatpush1.msra.mxu0 0.0
        %3370 = vmatprep.subr.mxu0 0.0
        %3371 = vmatpush1.msra.mxu0 0.0
        %3372 = vmatprep.subr.mxu0 0.0
        %3373 = vmatpush1.msra.mxu0 0.0
        %3374 = vmatprep.subr.mxu0 0.0
        %3375 = vmatpush1.msra.mxu0 0.0
        %3376 = vmatprep.subr.mxu0 0.0
        %3377 = vmatpush1.msra.mxu0 0.0
        %3378 = vmatprep.subr.mxu0 0.0
        %3379 = vmatpush1.msra.mxu0 0.0
        %3380 = vmatprep.subr.mxu0 0.0
        %3381 = vmatpush1.msra.mxu0 0.0
        %3382 = vmatprep.subr.mxu0 0.0
        %3383 = vmatpush1.msra.mxu0 0.0
        %3384 = vmatprep.subr.mxu0 0.0
        %3385 = vmatpush1.msra.mxu0 0.0
        %3386 = vmatprep.subr.mxu0 0.0
        %3387 = vmatpush1.msra.mxu0 0.0
        %3388 = vmatprep.subr.mxu0 0.0
        %3389 = vmatpush1.msra.mxu0 0.0
        %3390 = vmatprep.subr.mxu0 0.0
        %3391 = vmatpush1.msra.mxu0 0.0
        %3392 = vmatprep.subr.mxu0 0.0
        %3393 = vmatpush1.msra.mxu0 0.0
        %3394 = vmatprep.subr.mxu0 0.0
        %3395 = vmatpush1.msra.mxu0 0.0
        %3396 = vmatprep.subr.mxu0 0.0
        %3397 = vmatpush1.msra.mxu0 0.0
        %3398 = vmatprep.subr.mxu0 0.0
        %3399 = vmatpush1.msra.mxu0 0.0
        %3400 = vmatprep.subr.mxu0 0.0
        %3401 = vmatpush1.msra.mxu0 0.0
        %3402 = vmatprep.mubr.f32.mxu0 0.0
        %3403 = vmatmul.mubr.f32.gmra.mrb[0].mxu0 %v3312
        %v3404 = vpop.f32.mrb[0].mxu0
        %v3405 = vadd.f32 0.0, %v3404
        %v3406 = vpop.f32.mrb[0].mxu0
        %3407 = vmatprep.mubr.f32.mxu0 0.0
        %3408 = vmatmul.mubr.f32.gmra.mrb[0].mxu0 %v3315
        %v3409 = vpop.f32.mrb[0].mxu0
        %v3410 = vadd.f32 0.0, %v3409
        %v3411 = vpop.f32.mrb[0].mxu0
        %3412 = vmatprep.mubr.f32.mxu0 0.0
        %3413 = vmatmul.mubr.f32.gmra.mrb[0].mxu0 %v3318
        %v3414 = vpop.f32.mrb[0].mxu0
        %v3415 = vadd.f32 0.0, %v3414
        %v3416 = vpop.f32.mrb[0].mxu0
        %3417 = vmatprep.mubr.f32.mxu0 0.0
        %3418 = vmatmul.mubr.f32.gmra.mrb[0].mxu0 %v3321
        %v3419 = vpop.f32.mrb[0].mxu0
        %v3420 = vadd.f32 0.0, %v3419
        %v3421 = vpop.f32.mrb[0].mxu0
        %3422 = vmatprep.mubr.f32.mxu0 0.0
        %3423 = vmatmul.mubr.f32.gmra.mrb[0].mxu0 %v3324
        %v3424 = vpop.f32.mrb[0].mxu0
        %v3425 = vadd.f32 0.0, %v3424
        %v3426 = vpop.f32.mrb[0].mxu0
        %3427 = vmatprep.mubr.f32.mxu0 0.0
        %3428 = vmatmul.mubr.f32.gmra.mrb[0].mxu0 %v3327
        %v3429 = vpop.f32.mrb[0].mxu0
        %v3430 = vadd.f32 0.0, %v3429
        %v3431 = vpop.f32.mrb[0].mxu0
        %3432 = vmatprep.mubr.f32.mxu0 0.0
        %3433 = vmatmul.mubr.f32.gmra.mrb[0].mxu0 %v3330
        %v3434 = vpop.f32.mrb[0].mxu0
        %v3435 = vadd.f32 0.0, %v3434
        %v3436 = vpop.f32.mrb[0].mxu0
        %3437 = vmatprep.mubr.f32.mxu0 0.0
        %3438 = vmatmul.mubr.f32.gmra.mrb[0].mxu0 %v3333
        %v3439 = vpop.f32.mrb[0].mxu0
        %v3440 = vadd.f32 0.0, %v3439
        %v3441 = vpop.f32.mrb[0].mxu0
        %3442 = vdwg.mxu0
        %v3443 = vadd.f32 %v3294, %v3405
        %v3444 = vadd.f32 %v3295, %v3410
        %v3445 = vadd.f32 %v3296, %v3415
        %v3446 = vadd.f32 %v3297, %v3420
        %v3447 = vadd.f32 %v3298, %v3425
        %v3448 = vadd.f32 %v3299, %v3430
        %v3449 = vadd.f32 %v3300, %v3435
        %v3450 = vadd.f32 %v3301, %v3440
        %v3451 = vld [vmem:[%s3152 + $0x2] sm:$0xff]
        %v3452 = vld [vmem:[%s3152 + $0x12] sm:$0xff]
        %v3453 = vld [vmem:[%s3152 + $0x22] sm:$0xff]
        %v3454 = vld [vmem:[%s3152 + $0x32] sm:$0xff]
        %v3455 = vld [vmem:[%s3152 + $0x42] sm:$0xff]
        %v3456 = vld [vmem:[%s3152 + $0x52] sm:$0xff]
        %v3457 = vld [vmem:[%s3152 + $0x62] sm:$0xff]
        %v3458 = vld [vmem:[%s3152 + $0x72] sm:$0xff]
        %v3459 = vld [vmem:[%s1 + $0x20] sm:$0xf]
        %v3461 = vsel %vm1910, %v3451, 0
        %v3464 = vsel %vm1910, %v3452, 0
        %v3467 = vsel %vm1910, %v3453, 0
        %v3470 = vsel %vm1910, %v3454, 0
        %v3473 = vsel %vm1910, %v3455, 0
        %v3476 = vsel %vm1910, %v3456, 0
        %v3479 = vsel %vm1910, %v3457, 0
        %v3482 = vsel %vm1910, %v3458, 0
        %v3485 = vsel %vm2315, %v3459, 0
        %3487 = vmatprep.subr.mxu0 0.0
        %3488 = vmatpush1.msra.mxu0 %v3485
        %3489 = vmatprep.subr.mxu0 0.0
        %3490 = vmatpush1.msra.mxu0 0.0
        %3491 = vmatprep.subr.mxu0 0.0
        %3492 = vmatpush1.msra.mxu0 0.0
        %3493 = vmatprep.subr.mxu0 0.0
        %3494 = vmatpush1.msra.mxu0 0.0
        %3495 = vmatprep.subr.mxu0 0.0
        %3496 = vmatpush1.msra.mxu0 0.0
        %3497 = vmatprep.subr.mxu0 0.0
        %3498 = vmatpush1.msra.mxu0 0.0
        %3499 = vmatprep.subr.mxu0 0.0
        %3500 = vmatpush1.msra.mxu0 0.0
        %3501 = vmatprep.subr.mxu0 0.0
        %3502 = vmatpush1.msra.mxu0 0.0
        %3503 = vmatprep.subr.mxu0 0.0
        %3504 = vmatpush1.msra.mxu0 0.0
        %3505 = vmatprep.subr.mxu0 0.0
        %3506 = vmatpush1.msra.mxu0 0.0
        %3507 = vmatprep.subr.mxu0 0.0
        %3508 = vmatpush1.msra.mxu0 0.0
        %3509 = vmatprep.subr.mxu0 0.0
        %3510 = vmatpush1.msra.mxu0 0.0
        %3511 = vmatprep.subr.mxu0 0.0
        %3512 = vmatpush1.msra.mxu0 0.0
        %3513 = vmatprep.subr.mxu0 0.0
        %3514 = vmatpush1.msra.mxu0 0.0
        %3515 = vmatprep.subr.mxu0 0.0
        %3516 = vmatpush1.msra.mxu0 0.0
        %3517 = vmatprep.subr.mxu0 0.0
        %3518 = vmatpush1.msra.mxu0 0.0
        %3519 = vmatprep.subr.mxu0 0.0
        %3520 = vmatpush1.msra.mxu0 0.0
        %3521 = vmatprep.subr.mxu0 0.0
        %3522 = vmatpush1.msra.mxu0 0.0
        %3523 = vmatprep.subr.mxu0 0.0
        %3524 = vmatpush1.msra.mxu0 0.0
        %3525 = vmatprep.subr.mxu0 0.0
        %3526 = vmatpush1.msra.mxu0 0.0
        %3527 = vmatprep.subr.mxu0 0.0
        %3528 = vmatpush1.msra.mxu0 0.0
        %3529 = vmatprep.subr.mxu0 0.0
        %3530 = vmatpush1.msra.mxu0 0.0
        %3531 = vmatprep.subr.mxu0 0.0
        %3532 = vmatpush1.msra.mxu0 0.0
        %3533 = vmatprep.subr.mxu0 0.0
        %3534 = vmatpush1.msra.mxu0 0.0
        %3535 = vmatprep.subr.mxu0 0.0
        %3536 = vmatpush1.msra.mxu0 0.0
        %3537 = vmatprep.subr.mxu0 0.0
        %3538 = vmatpush1.msra.mxu0 0.0
        %3539 = vmatprep.subr.mxu0 0.0
        %3540 = vmatpush1.msra.mxu0 0.0
        %3541 = vmatprep.subr.mxu0 0.0
        %3542 = vmatpush1.msra.mxu0 0.0
        %3543 = vmatprep.subr.mxu0 0.0
        %3544 = vmatpush1.msra.mxu0 0.0
        %3545 = vmatprep.subr.mxu0 0.0
        %3546 = vmatpush1.msra.mxu0 0.0
        %3547 = vmatprep.subr.mxu0 0.0
        %3548 = vmatpush1.msra.mxu0 0.0
        %3549 = vmatprep.subr.mxu0 0.0
        %3550 = vmatpush1.msra.mxu0 0.0
        %3551 = vmatprep.mubr.f32.mxu0 0.0
        %3552 = vmatmul.mubr.f32.gmra.mrb[0].mxu0 %v3461
        %v3553 = vpop.f32.mrb[0].mxu0
        %v3554 = vadd.f32 0.0, %v3553
        %v3555 = vpop.f32.mrb[0].mxu0
        %3556 = vmatprep.mubr.f32.mxu0 0.0
        %3557 = vmatmul.mubr.f32.gmra.mrb[0].mxu0 %v3464
        %v3558 = vpop.f32.mrb[0].mxu0
        %v3559 = vadd.f32 0.0, %v3558
        %v3560 = vpop.f32.mrb[0].mxu0
        %3561 = vmatprep.mubr.f32.mxu0 0.0
        %3562 = vmatmul.mubr.f32.gmra.mrb[0].mxu0 %v3467
        %v3563 = vpop.f32.mrb[0].mxu0
        %v3564 = vadd.f32 0.0, %v3563
        %v3565 = vpop.f32.mrb[0].mxu0
        %3566 = vmatprep.mubr.f32.mxu0 0.0
        %3567 = vmatmul.mubr.f32.gmra.mrb[0].mxu0 %v3470
        %v3568 = vpop.f32.mrb[0].mxu0
        %v3569 = vadd.f32 0.0, %v3568
        %v3570 = vpop.f32.mrb[0].mxu0
        %3571 = vmatprep.mubr.f32.mxu0 0.0
        %3572 = vmatmul.mubr.f32.gmra.mrb[0].mxu0 %v3473
        %v3573 = vpop.f32.mrb[0].mxu0
        %v3574 = vadd.f32 0.0, %v3573
        %v3575 = vpop.f32.mrb[0].mxu0
        %3576 = vmatprep.mubr.f32.mxu0 0.0
        %3577 = vmatmul.mubr.f32.gmra.mrb[0].mxu0 %v3476
        %v3578 = vpop.f32.mrb[0].mxu0
        %v3579 = vadd.f32 0.0, %v3578
        %v3580 = vpop.f32.mrb[0].mxu0
        %3581 = vmatprep.mubr.f32.mxu0 0.0
        %3582 = vmatmul.mubr.f32.gmra.mrb[0].mxu0 %v3479
        %v3583 = vpop.f32.mrb[0].mxu0
        %v3584 = vadd.f32 0.0, %v3583
        %v3585 = vpop.f32.mrb[0].mxu0
        %3586 = vmatprep.mubr.f32.mxu0 0.0
        %3587 = vmatmul.mubr.f32.gmra.mrb[0].mxu0 %v3482
        %v3588 = vpop.f32.mrb[0].mxu0
        %v3589 = vadd.f32 0.0, %v3588
        %v3590 = vpop.f32.mrb[0].mxu0
        %3591 = vdwg.mxu0
        %v3592 = vadd.f32 %v3443, %v3554
        %v3593 = vadd.f32 %v3444, %v3559
        %v3594 = vadd.f32 %v3445, %v3564
        %v3595 = vadd.f32 %v3446, %v3569
        %v3596 = vadd.f32 %v3447, %v3574
        %v3597 = vadd.f32 %v3448, %v3579
        %v3598 = vadd.f32 %v3449, %v3584
        %v3599 = vadd.f32 %v3450, %v3589
        %v3600 = vld [vmem:[%s2] sm:$0x1]
        %v3602 = vlaneseq
        %v3603 = vshrl.u32 %v3602, 7
        %v3604 = vsub.s32 0, %v3603
        %v3605 = vrot.slane %v3600, %v3604
        %v3607 = vmul.f32 %v3592, %v3605
        %v3608 = vmul.f32 %v3593, %v3605
        %v3609 = vmul.f32 %v3594, %v3605
        %v3610 = vmul.f32 %v3595, %v3605
        %v3611 = vmul.f32 %v3596, %v3605
        %v3612 = vmul.f32 %v3597, %v3605
        %v3613 = vmul.f32 %v3598, %v3605
        %v3614 = vmul.f32 %v3599, %v3605
        %v3615 = vld [vmem:[%s3] sm:$0x1]
        %v3617 = vlaneseq
        %v3618 = vshrl.u32 %v3617, 7
        %v3619 = vsub.s32 0, %v3618
        %v3620 = vrot.slane %v3615, %v3619
        %v3622 = vadd.f32 %v3607, %v3620
        %v3623 = vadd.f32 %v3608, %v3620
        %v3624 = vadd.f32 %v3609, %v3620
        %v3625 = vadd.f32 %v3610, %v3620
        %v3626 = vadd.f32 %v3611, %v3620
        %v3627 = vadd.f32 %v3612, %v3620
        %v3628 = vadd.f32 %v3613, %v3620
        %v3629 = vadd.f32 %v3614, %v3620
        %v3630 = vmax.f32 %v3622, 0.0
        %v3631 = vmax.f32 %v3623, 0.0
        %v3632 = vmax.f32 %v3624, 0.0
        %v3633 = vmax.f32 %v3625, 0.0
        %v3634 = vmax.f32 %v3626, 0.0
        %v3635 = vmax.f32 %v3627, 0.0
        %v3636 = vmax.f32 %v3628, 0.0
        %v3637 = vmax.f32 %v3629, 0.0
        %vm3638 = vcmask 64512
        %3639 = vst.msk [vmem:[#allocation3] sm:$0xff] %vm3638, 0.0
        %vm3640 = vcmask 58368
        %3641 = vst.msk [vmem:[#allocation3 + $0x8] sm:$0x3] %vm3640, 0.0
        %s3642 = scalar_lea.vmem [#allocation3], 144
        %3643 = vst.msk [vmem:[%s3642] sm:$0xff] %vm3638, 0.0
        %3644 = vst.msk [vmem:[%s3642 + $0x8] sm:$0x3] %vm3640, 0.0
        %vm3645 = vcmask 57344
        %3646 = vst.msk [vmem:[#allocation3] sm:$0x1] %vm3645, 0.0
        %3647 = vst.msk [vmem:[#allocation3 + $0x10] sm:$0x1] %vm3645, 0.0
        %3648 = vst.msk [vmem:[#allocation3 + $0x20] sm:$0x1] %vm3645, 0.0
        %3649 = vst.msk [vmem:[#allocation3 + $0x30] sm:$0x1] %vm3645, 0.0
        %3650 = vst.msk [vmem:[#allocation3 + $0x40] sm:$0x1] %vm3645, 0.0
        %3651 = vst.msk [vmem:[#allocation3 + $0x50] sm:$0x1] %vm3645, 0.0
        %3652 = vst.msk [vmem:[#allocation3 + $0x60] sm:$0x1] %vm3645, 0.0
        %3653 = vst.msk [vmem:[#allocation3 + $0x70] sm:$0x1] %vm3645, 0.0
        %3654 = vst.msk [vmem:[#allocation3 + $0x80] sm:$0x1] %vm3645, 0.0
        %3655 = vst.msk [vmem:[#allocation3 + $0x90] sm:$0x1] %vm3645, 0.0
        %3656 = vst.msk [vmem:[#allocation3 + $0x9] sm:$0x1] %vm3645, 0.0
        %3657 = vst.msk [vmem:[#allocation3 + $0x19] sm:$0x1] %vm3645, 0.0
        %3658 = vst.msk [vmem:[#allocation3 + $0x29] sm:$0x1] %vm3645, 0.0
        %3659 = vst.msk [vmem:[#allocation3 + $0x39] sm:$0x1] %vm3645, 0.0
        %3660 = vst.msk [vmem:[#allocation3 + $0x49] sm:$0x1] %vm3645, 0.0
        %3661 = vst.msk [vmem:[#allocation3 + $0x59] sm:$0x1] %vm3645, 0.0
        %3662 = vst.msk [vmem:[#allocation3 + $0x69] sm:$0x1] %vm3645, 0.0
        %3663 = vst.msk [vmem:[#allocation3 + $0x79] sm:$0x1] %vm3645, 0.0
        %3664 = vst.msk [vmem:[#allocation3 + $0x89] sm:$0x1] %vm3645, 0.0
        %3665 = vst.msk [vmem:[#allocation3 + $0x99] sm:$0x1] %vm3645, 0.0
        %s3666 = scalar_lea.vmem [#allocation3], 16
        %3667 = vst.msk [vmem:[%s3666 + $0x1] sm:$0xff] %vm3638, %v3630
        %3668 = vst.msk [vmem:[%s3666 + $0x11] sm:$0xff] %vm3638, %v3631
        %3669 = vst.msk [vmem:[%s3666 + $0x21] sm:$0xff] %vm3638, %v3632
        %3670 = vst.msk [vmem:[%s3666 + $0x31] sm:$0xff] %vm3638, %v3633
        %3671 = vst.msk [vmem:[%s3666 + $0x41] sm:$0xff] %vm3638, %v3634
        %3672 = vst.msk [vmem:[%s3666 + $0x51] sm:$0xff] %vm3638, %v3635
        %3673 = vst.msk [vmem:[%s3666 + $0x61] sm:$0xff] %vm3638, %v3636
        %3674 = vst.msk [vmem:[%s3666 + $0x71] sm:$0xff] %vm3638, %v3637
        %v3675 = vld [vmem:[#allocation3] sm:$0xff]
        %v3676 = vld [vmem:[#allocation3 + $0x10] sm:$0xff]
        %v3677 = vld [vmem:[#allocation3 + $0x20] sm:$0xff]
        %v3678 = vld [vmem:[#allocation3 + $0x30] sm:$0xff]
        %v3679 = vld [vmem:[#allocation3 + $0x40] sm:$0xff]
        %v3680 = vld [vmem:[#allocation3 + $0x50] sm:$0xff]
        %v3681 = vld [vmem:[#allocation3 + $0x60] sm:$0xff]
        %v3682 = vld [vmem:[#allocation3 + $0x70] sm:$0xff]
        %v3683 = vld [vmem:[%s4] sm:$0xff]
        %v3684 = vld [vmem:[#allocation3 + $0x1] sm:$0xff]
        %v3685 = vld [vmem:[#allocation3 + $0x11] sm:$0xff]
        %v3686 = vld [vmem:[#allocation3 + $0x21] sm:$0xff]
        %v3687 = vld [vmem:[#allocation3 + $0x31] sm:$0xff]
        %v3688 = vld [vmem:[#allocation3 + $0x41] sm:$0xff]
        %v3689 = vld [vmem:[#allocation3 + $0x51] sm:$0xff]
        %v3690 = vld [vmem:[#allocation3 + $0x61] sm:$0xff]
        %v3691 = vld [vmem:[#allocation3 + $0x71] sm:$0xff]
        %v3692 = vld [vmem:[%s4 + $0x8] sm:$0xff]
        %v3694 = vsel %vm3638, %v3684, 0
        %v3697 = vsel %vm3638, %v3685, 0
        %v3700 = vsel %vm3638, %v3686, 0
        %v3703 = vsel %vm3638, %v3687, 0
        %v3706 = vsel %vm3638, %v3688, 0
        %v3709 = vsel %vm3638, %v3689, 0
        %v3712 = vsel %vm3638, %v3690, 0
        %v3715 = vsel %vm3638, %v3691, 0
        %3717 = vmatprep.subr.mxu0 0.0
        %3718 = vmatpush1.msra.mxu0 %v3692
        %3719 = vmatprep.subr.mxu0 0.0
        %3720 = vmatpush1.msra.mxu0 0.0
        %3721 = vmatprep.subr.mxu0 0.0
        %3722 = vmatpush1.msra.mxu0 0.0
        %3723 = vmatprep.subr.mxu0 0.0
        %3724 = vmatpush1.msra.mxu0 0.0
        %3725 = vmatprep.subr.mxu0 0.0
        %3726 = vmatpush1.msra.mxu0 0.0
        %3727 = vmatprep.subr.mxu0 0.0
        %3728 = vmatpush1.msra.mxu0 0.0
        %3729 = vmatprep.subr.mxu0 0.0
        %3730 = vmatpush1.msra.mxu0 0.0
        %3731 = vmatprep.subr.mxu0 0.0
        %3732 = vmatpush1.msra.mxu0 0.0
        %3733 = vmatprep.subr.mxu0 0.0
        %3734 = vmatpush1.msra.mxu0 0.0
        %3735 = vmatprep.subr.mxu0 0.0
        %3736 = vmatpush1.msra.mxu0 0.0
        %3737 = vmatprep.subr.mxu0 0.0
        %3738 = vmatpush1.msra.mxu0 0.0
        %3739 = vmatprep.subr.mxu0 0.0
        %3740 = vmatpush1.msra.mxu0 0.0
        %3741 = vmatprep.subr.mxu0 0.0
        %3742 = vmatpush1.msra.mxu0 0.0
        %3743 = vmatprep.subr.mxu0 0.0
        %3744 = vmatpush1.msra.mxu0 0.0
        %3745 = vmatprep.subr.mxu0 0.0
        %3746 = vmatpush1.msra.mxu0 0.0
        %3747 = vmatprep.subr.mxu0 0.0
        %3748 = vmatpush1.msra.mxu0 0.0
        %3749 = vmatprep.subr.mxu0 0.0
        %3750 = vmatpush1.msra.mxu0 0.0
        %3751 = vmatprep.subr.mxu0 0.0
        %3752 = vmatpush1.msra.mxu0 0.0
        %3753 = vmatprep.subr.mxu0 0.0
        %3754 = vmatpush1.msra.mxu0 0.0
        %3755 = vmatprep.subr.mxu0 0.0
        %3756 = vmatpush1.msra.mxu0 0.0
        %3757 = vmatprep.subr.mxu0 0.0
        %3758 = vmatpush1.msra.mxu0 0.0
        %3759 = vmatprep.subr.mxu0 0.0
        %3760 = vmatpush1.msra.mxu0 0.0
        %3761 = vmatprep.subr.mxu0 0.0
        %3762 = vmatpush1.msra.mxu0 0.0
        %3763 = vmatprep.subr.mxu0 0.0
        %3764 = vmatpush1.msra.mxu0 0.0
        %3765 = vmatprep.subr.mxu0 0.0
        %3766 = vmatpush1.msra.mxu0 0.0
        %3767 = vmatprep.subr.mxu0 0.0
        %3768 = vmatpush1.msra.mxu0 0.0
        %3769 = vmatprep.subr.mxu0 0.0
        %3770 = vmatpush1.msra.mxu0 0.0
        %3771 = vmatprep.subr.mxu0 0.0
        %3772 = vmatpush1.msra.mxu0 0.0
        %3773 = vmatprep.subr.mxu0 0.0
        %3774 = vmatpush1.msra.mxu0 0.0
        %3775 = vmatprep.subr.mxu0 0.0
        %3776 = vmatpush1.msra.mxu0 0.0
        %3777 = vmatprep.subr.mxu0 0.0
        %3778 = vmatpush1.msra.mxu0 0.0
        %3779 = vmatprep.subr.mxu0 0.0
        %3780 = vmatpush1.msra.mxu0 0.0
        %3781 = vmatprep.mubr.f32.mxu0 0.0
        %3782 = vmatmul.mubr.f32.gmra.mrb[0].mxu0 %v3694
        %v3783 = vpop.f32.mrb[0].mxu0
        %v3784 = vadd.f32 0.0, %v3783
        %v3785 = vpop.f32.mrb[0].mxu0
        %3786 = vmatprep.mubr.f32.mxu0 0.0
        %3787 = vmatmul.mubr.f32.gmra.mrb[0].mxu0 %v3697
        %v3788 = vpop.f32.mrb[0].mxu0
        %v3789 = vadd.f32 0.0, %v3788
        %v3790 = vpop.f32.mrb[0].mxu0
        %3791 = vmatprep.mubr.f32.mxu0 0.0
        %3792 = vmatmul.mubr.f32.gmra.mrb[0].mxu0 %v3700
        %v3793 = vpop.f32.mrb[0].mxu0
        %v3794 = vadd.f32 0.0, %v3793
        %v3795 = vpop.f32.mrb[0].mxu0
        %3796 = vmatprep.mubr.f32.mxu0 0.0
        %3797 = vmatmul.mubr.f32.gmra.mrb[0].mxu0 %v3703
        %v3798 = vpop.f32.mrb[0].mxu0
        %v3799 = vadd.f32 0.0, %v3798
        %v3800 = vpop.f32.mrb[0].mxu0
        %3801 = vmatprep.mubr.f32.mxu0 0.0
        %3802 = vmatmul.mubr.f32.gmra.mrb[0].mxu0 %v3706
        %v3803 = vpop.f32.mrb[0].mxu0
        %v3804 = vadd.f32 0.0, %v3803
        %v3805 = vpop.f32.mrb[0].mxu0
        %3806 = vmatprep.mubr.f32.mxu0 0.0
        %3807 = vmatmul.mubr.f32.gmra.mrb[0].mxu0 %v3709
        %v3808 = vpop.f32.mrb[0].mxu0
        %v3809 = vadd.f32 0.0, %v3808
        %v3810 = vpop.f32.mrb[0].mxu0
        %3811 = vmatprep.mubr.f32.mxu0 0.0
        %3812 = vmatmul.mubr.f32.gmra.mrb[0].mxu0 %v3712
        %v3813 = vpop.f32.mrb[0].mxu0
        %v3814 = vadd.f32 0.0, %v3813
        %v3815 = vpop.f32.mrb[0].mxu0
        %3816 = vmatprep.mubr.f32.mxu0 0.0
        %3817 = vmatmul.mubr.f32.gmra.mrb[0].mxu0 %v3715
        %v3818 = vpop.f32.mrb[0].mxu0
        %v3819 = vadd.f32 0.0, %v3818
        %v3820 = vpop.f32.mrb[0].mxu0
        %3821 = vdwg.mxu0
        %v3823 = vsel %vm3638, %v3675, 0
        %v3826 = vsel %vm3638, %v3676, 0
        %v3829 = vsel %vm3638, %v3677, 0
        %v3832 = vsel %vm3638, %v3678, 0
        %v3835 = vsel %vm3638, %v3679, 0
        %v3838 = vsel %vm3638, %v3680, 0
        %v3841 = vsel %vm3638, %v3681, 0
        %v3844 = vsel %vm3638, %v3682, 0
        %3846 = vmatprep.subr.mxu0 0.0
        %3847 = vmatpush1.msra.mxu0 %v3683
        %3848 = vmatprep.subr.mxu0 0.0
        %3849 = vmatpush1.msra.mxu0 0.0
        %3850 = vmatprep.subr.mxu0 0.0
        %3851 = vmatpush1.msra.mxu0 0.0
        %3852 = vmatprep.subr.mxu0 0.0
        %3853 = vmatpush1.msra.mxu0 0.0
        %3854 = vmatprep.subr.mxu0 0.0
        %3855 = vmatpush1.msra.mxu0 0.0
        %3856 = vmatprep.subr.mxu0 0.0
        %3857 = vmatpush1.msra.mxu0 0.0
        %3858 = vmatprep.subr.mxu0 0.0
        %3859 = vmatpush1.msra.mxu0 0.0
        %3860 = vmatprep.subr.mxu0 0.0
        %3861 = vmatpush1.msra.mxu0 0.0
        %3862 = vmatprep.subr.mxu0 0.0
        %3863 = vmatpush1.msra.mxu0 0.0
        %3864 = vmatprep.subr.mxu0 0.0
        %3865 = vmatpush1.msra.mxu0 0.0
        %3866 = vmatprep.subr.mxu0 0.0
        %3867 = vmatpush1.msra.mxu0 0.0
        %3868 = vmatprep.subr.mxu0 0.0
        %3869 = vmatpush1.msra.mxu0 0.0
        %3870 = vmatprep.subr.mxu0 0.0
        %3871 = vmatpush1.msra.mxu0 0.0
        %3872 = vmatprep.subr.mxu0 0.0
        %3873 = vmatpush1.msra.mxu0 0.0
        %3874 = vmatprep.subr.mxu0 0.0
        %3875 = vmatpush1.msra.mxu0 0.0
        %3876 = vmatprep.subr.mxu0 0.0
        %3877 = vmatpush1.msra.mxu0 0.0
        %3878 = vmatprep.subr.mxu0 0.0
        %3879 = vmatpush1.msra.mxu0 0.0
        %3880 = vmatprep.subr.mxu0 0.0
        %3881 = vmatpush1.msra.mxu0 0.0
        %3882 = vmatprep.subr.mxu0 0.0
        %3883 = vmatpush1.msra.mxu0 0.0
        %3884 = vmatprep.subr.mxu0 0.0
        %3885 = vmatpush1.msra.mxu0 0.0
        %3886 = vmatprep.subr.mxu0 0.0
        %3887 = vmatpush1.msra.mxu0 0.0
        %3888 = vmatprep.subr.mxu0 0.0
        %3889 = vmatpush1.msra.mxu0 0.0
        %3890 = vmatprep.subr.mxu0 0.0
        %3891 = vmatpush1.msra.mxu0 0.0
        %3892 = vmatprep.subr.mxu0 0.0
        %3893 = vmatpush1.msra.mxu0 0.0
        %3894 = vmatprep.subr.mxu0 0.0
        %3895 = vmatpush1.msra.mxu0 0.0
        %3896 = vmatprep.subr.mxu0 0.0
        %3897 = vmatpush1.msra.mxu0 0.0
        %3898 = vmatprep.subr.mxu0 0.0
        %3899 = vmatpush1.msra.mxu0 0.0
        %3900 = vmatprep.subr.mxu0 0.0
        %3901 = vmatpush1.msra.mxu0 0.0
        %3902 = vmatprep.subr.mxu0 0.0
        %3903 = vmatpush1.msra.mxu0 0.0
        %3904 = vmatprep.subr.mxu0 0.0
        %3905 = vmatpush1.msra.mxu0 0.0
        %3906 = vmatprep.subr.mxu0 0.0
        %3907 = vmatpush1.msra.mxu0 0.0
        %3908 = vmatprep.subr.mxu0 0.0
        %3909 = vmatpush1.msra.mxu0 0.0
        %3910 = vmatprep.mubr.f32.mxu0 0.0
        %3911 = vmatmul.mubr.f32.gmra.mrb[0].mxu0 %v3823
        %v3912 = vpop.f32.mrb[0].mxu0
        %v3913 = vadd.f32 %v3784, %v3912
        %v3914 = vpop.f32.mrb[0].mxu0
        %3915 = vmatprep.mubr.f32.mxu0 0.0
        %3916 = vmatmul.mubr.f32.gmra.mrb[0].mxu0 %v3826
        %v3917 = vpop.f32.mrb[0].mxu0
        %v3918 = vadd.f32 %v3789, %v3917
        %v3919 = vpop.f32.mrb[0].mxu0
        %3920 = vmatprep.mubr.f32.mxu0 0.0
        %3921 = vmatmul.mubr.f32.gmra.mrb[0].mxu0 %v3829
        %v3922 = vpop.f32.mrb[0].mxu0
        %v3923 = vadd.f32 %v3794, %v3922
        %v3924 = vpop.f32.mrb[0].mxu0
        %3925 = vmatprep.mubr.f32.mxu0 0.0
        %3926 = vmatmul.mubr.f32.gmra.mrb[0].mxu0 %v3832
        %v3927 = vpop.f32.mrb[0].mxu0
        %v3928 = vadd.f32 %v3799, %v3927
        %v3929 = vpop.f32.mrb[0].mxu0
        %3930 = vmatprep.mubr.f32.mxu0 0.0
        %3931 = vmatmul.mubr.f32.gmra.mrb[0].mxu0 %v3835
        %v3932 = vpop.f32.mrb[0].mxu0
        %v3933 = vadd.f32 %v3804, %v3932
        %v3934 = vpop.f32.mrb[0].mxu0
        %3935 = vmatprep.mubr.f32.mxu0 0.0
        %3936 = vmatmul.mubr.f32.gmra.mrb[0].mxu0 %v3838
        %v3937 = vpop.f32.mrb[0].mxu0
        %v3938 = vadd.f32 %v3809, %v3937
        %v3939 = vpop.f32.mrb[0].mxu0
        %3940 = vmatprep.mubr.f32.mxu0 0.0
        %3941 = vmatmul.mubr.f32.gmra.mrb[0].mxu0 %v3841
        %v3942 = vpop.f32.mrb[0].mxu0
        %v3943 = vadd.f32 %v3814, %v3942
        %v3944 = vpop.f32.mrb[0].mxu0
        %3945 = vmatprep.mubr.f32.mxu0 0.0
        %3946 = vmatmul.mubr.f32.gmra.mrb[0].mxu0 %v3844
        %v3947 = vpop.f32.mrb[0].mxu0
        %v3948 = vadd.f32 %v3819, %v3947
        %v3949 = vpop.f32.mrb[0].mxu0
        %3950 = vdwg.mxu0
        %v3951 = vld [vmem:[#allocation3 + $0x2] sm:$0xff]
        %v3952 = vld [vmem:[#allocation3 + $0x12] sm:$0xff]
        %v3953 = vld [vmem:[#allocation3 + $0x22] sm:$0xff]
        %v3954 = vld [vmem:[#allocation3 + $0x32] sm:$0xff]
        %v3955 = vld [vmem:[#allocation3 + $0x42] sm:$0xff]
        %v3956 = vld [vmem:[#allocation3 + $0x52] sm:$0xff]
        %v3957 = vld [vmem:[#allocation3 + $0x62] sm:$0xff]
        %v3958 = vld [vmem:[#allocation3 + $0x72] sm:$0xff]
        %v3959 = vld [vmem:[%s4 + $0x10] sm:$0xff]
        %v3961 = vsel %vm3638, %v3951, 0
        %v3964 = vsel %vm3638, %v3952, 0
        %v3967 = vsel %vm3638, %v3953, 0
        %v3970 = vsel %vm3638, %v3954, 0
        %v3973 = vsel %vm3638, %v3955, 0
        %v3976 = vsel %vm3638, %v3956, 0
        %v3979 = vsel %vm3638, %v3957, 0
        %v3982 = vsel %vm3638, %v3958, 0
        %3984 = vmatprep.subr.mxu0 0.0
        %3985 = vmatpush1.msra.mxu0 %v3959
        %3986 = vmatprep.subr.mxu0 0.0
        %3987 = vmatpush1.msra.mxu0 0.0
        %3988 = vmatprep.subr.mxu0 0.0
        %3989 = vmatpush1.msra.mxu0 0.0
        %3990 = vmatprep.subr.mxu0 0.0
        %3991 = vmatpush1.msra.mxu0 0.0
        %3992 = vmatprep.subr.mxu0 0.0
        %3993 = vmatpush1.msra.mxu0 0.0
        %3994 = vmatprep.subr.mxu0 0.0
        %3995 = vmatpush1.msra.mxu0 0.0
        %3996 = vmatprep.subr.mxu0 0.0
        %3997 = vmatpush1.msra.mxu0 0.0
        %3998 = vmatprep.subr.mxu0 0.0
        %3999 = vmatpush1.msra.mxu0 0.0
        %4000 = vmatprep.subr.mxu0 0.0
        %4001 = vmatpush1.msra.mxu0 0.0
        %4002 = vmatprep.subr.mxu0 0.0
        %4003 = vmatpush1.msra.mxu0 0.0
        %4004 = vmatprep.subr.mxu0 0.0
        %4005 = vmatpush1.msra.mxu0 0.0
        %4006 = vmatprep.subr.mxu0 0.0
        %4007 = vmatpush1.msra.mxu0 0.0
        %4008 = vmatprep.subr.mxu0 0.0
        %4009 = vmatpush1.msra.mxu0 0.0
        %4010 = vmatprep.subr.mxu0 0.0
        %4011 = vmatpush1.msra.mxu0 0.0
        %4012 = vmatprep.subr.mxu0 0.0
        %4013 = vmatpush1.msra.mxu0 0.0
        %4014 = vmatprep.subr.mxu0 0.0
        %4015 = vmatpush1.msra.mxu0 0.0
        %4016 = vmatprep.subr.mxu0 0.0
        %4017 = vmatpush1.msra.mxu0 0.0
        %4018 = vmatprep.subr.mxu0 0.0
        %4019 = vmatpush1.msra.mxu0 0.0
        %4020 = vmatprep.subr.mxu0 0.0
        %4021 = vmatpush1.msra.mxu0 0.0
        %4022 = vmatprep.subr.mxu0 0.0
        %4023 = vmatpush1.msra.mxu0 0.0
        %4024 = vmatprep.subr.mxu0 0.0
        %4025 = vmatpush1.msra.mxu0 0.0
        %4026 = vmatprep.subr.mxu0 0.0
        %4027 = vmatpush1.msra.mxu0 0.0
        %4028 = vmatprep.subr.mxu0 0.0
        %4029 = vmatpush1.msra.mxu0 0.0
        %4030 = vmatprep.subr.mxu0 0.0
        %4031 = vmatpush1.msra.mxu0 0.0
        %4032 = vmatprep.subr.mxu0 0.0
        %4033 = vmatpush1.msra.mxu0 0.0
        %4034 = vmatprep.subr.mxu0 0.0
        %4035 = vmatpush1.msra.mxu0 0.0
        %4036 = vmatprep.subr.mxu0 0.0
        %4037 = vmatpush1.msra.mxu0 0.0
        %4038 = vmatprep.subr.mxu0 0.0
        %4039 = vmatpush1.msra.mxu0 0.0
        %4040 = vmatprep.subr.mxu0 0.0
        %4041 = vmatpush1.msra.mxu0 0.0
        %4042 = vmatprep.subr.mxu0 0.0
        %4043 = vmatpush1.msra.mxu0 0.0
        %4044 = vmatprep.subr.mxu0 0.0
        %4045 = vmatpush1.msra.mxu0 0.0
        %4046 = vmatprep.subr.mxu0 0.0
        %4047 = vmatpush1.msra.mxu0 0.0
        %4048 = vmatprep.mubr.f32.mxu0 0.0
        %4049 = vmatmul.mubr.f32.gmra.mrb[0].mxu0 %v3961
        %v4050 = vpop.f32.mrb[0].mxu0
        %v4051 = vadd.f32 0.0, %v4050
        %v4052 = vpop.f32.mrb[0].mxu0
        %4053 = vmatprep.mubr.f32.mxu0 0.0
        %4054 = vmatmul.mubr.f32.gmra.mrb[0].mxu0 %v3964
        %v4055 = vpop.f32.mrb[0].mxu0
        %v4056 = vadd.f32 0.0, %v4055
        %v4057 = vpop.f32.mrb[0].mxu0
        %4058 = vmatprep.mubr.f32.mxu0 0.0
        %4059 = vmatmul.mubr.f32.gmra.mrb[0].mxu0 %v3967
        %v4060 = vpop.f32.mrb[0].mxu0
        %v4061 = vadd.f32 0.0, %v4060
        %v4062 = vpop.f32.mrb[0].mxu0
        %4063 = vmatprep.mubr.f32.mxu0 0.0
        %4064 = vmatmul.mubr.f32.gmra.mrb[0].mxu0 %v3970
        %v4065 = vpop.f32.mrb[0].mxu0
        %v4066 = vadd.f32 0.0, %v4065
        %v4067 = vpop.f32.mrb[0].mxu0
        %4068 = vmatprep.mubr.f32.mxu0 0.0
        %4069 = vmatmul.mubr.f32.gmra.mrb[0].mxu0 %v3973
        %v4070 = vpop.f32.mrb[0].mxu0
        %v4071 = vadd.f32 0.0, %v4070
        %v4072 = vpop.f32.mrb[0].mxu0
        %4073 = vmatprep.mubr.f32.mxu0 0.0
        %4074 = vmatmul.mubr.f32.gmra.mrb[0].mxu0 %v3976
        %v4075 = vpop.f32.mrb[0].mxu0
        %v4076 = vadd.f32 0.0, %v4075
        %v4077 = vpop.f32.mrb[0].mxu0
        %4078 = vmatprep.mubr.f32.mxu0 0.0
        %4079 = vmatmul.mubr.f32.gmra.mrb[0].mxu0 %v3979
        %v4080 = vpop.f32.mrb[0].mxu0
        %v4081 = vadd.f32 0.0, %v4080
        %v4082 = vpop.f32.mrb[0].mxu0
        %4083 = vmatprep.mubr.f32.mxu0 0.0
        %4084 = vmatmul.mubr.f32.gmra.mrb[0].mxu0 %v3982
        %v4085 = vpop.f32.mrb[0].mxu0
        %v4086 = vadd.f32 0.0, %v4085
        %v4087 = vpop.f32.mrb[0].mxu0
        %4088 = vdwg.mxu0
        %v4089 = vadd.f32 %v3913, %v4051
        %v4090 = vadd.f32 %v3918, %v4056
        %v4091 = vadd.f32 %v3923, %v4061
        %v4092 = vadd.f32 %v3928, %v4066
        %v4093 = vadd.f32 %v3933, %v4071
        %v4094 = vadd.f32 %v3938, %v4076
        %v4095 = vadd.f32 %v3943, %v4081
        %v4096 = vadd.f32 %v3948, %v4086
        %v4097 = vld [vmem:[%s3666] sm:$0xff]
        %v4098 = vld [vmem:[%s3666 + $0x10] sm:$0xff]
        %v4099 = vld [vmem:[%s3666 + $0x20] sm:$0xff]
        %v4100 = vld [vmem:[%s3666 + $0x30] sm:$0xff]
        %v4101 = vld [vmem:[%s3666 + $0x40] sm:$0xff]
        %v4102 = vld [vmem:[%s3666 + $0x50] sm:$0xff]
        %v4103 = vld [vmem:[%s3666 + $0x60] sm:$0xff]
        %v4104 = vld [vmem:[%s3666 + $0x70] sm:$0xff]
        %v4105 = vld [vmem:[%s4 + $0x18] sm:$0xff]
        %v4107 = vsel %vm3638, %v4097, 0
        %v4110 = vsel %vm3638, %v4098, 0
        %v4113 = vsel %vm3638, %v4099, 0
        %v4116 = vsel %vm3638, %v4100, 0
        %v4119 = vsel %vm3638, %v4101, 0
        %v4122 = vsel %vm3638, %v4102, 0
        %v4125 = vsel %vm3638, %v4103, 0
        %v4128 = vsel %vm3638, %v4104, 0
        %4130 = vmatprep.subr.mxu0 0.0
        %4131 = vmatpush1.msra.mxu0 %v4105
        %4132 = vmatprep.subr.mxu0 0.0
        %4133 = vmatpush1.msra.mxu0 0.0
        %4134 = vmatprep.subr.mxu0 0.0
        %4135 = vmatpush1.msra.mxu0 0.0
        %4136 = vmatprep.subr.mxu0 0.0
        %4137 = vmatpush1.msra.mxu0 0.0
        %4138 = vmatprep.subr.mxu0 0.0
        %4139 = vmatpush1.msra.mxu0 0.0
        %4140 = vmatprep.subr.mxu0 0.0
        %4141 = vmatpush1.msra.mxu0 0.0
        %4142 = vmatprep.subr.mxu0 0.0
        %4143 = vmatpush1.msra.mxu0 0.0
        %4144 = vmatprep.subr.mxu0 0.0
        %4145 = vmatpush1.msra.mxu0 0.0
        %4146 = vmatprep.subr.mxu0 0.0
        %4147 = vmatpush1.msra.mxu0 0.0
        %4148 = vmatprep.subr.mxu0 0.0
        %4149 = vmatpush1.msra.mxu0 0.0
        %4150 = vmatprep.subr.mxu0 0.0
        %4151 = vmatpush1.msra.mxu0 0.0
        %4152 = vmatprep.subr.mxu0 0.0
        %4153 = vmatpush1.msra.mxu0 0.0
        %4154 = vmatprep.subr.mxu0 0.0
        %4155 = vmatpush1.msra.mxu0 0.0
        %4156 = vmatprep.subr.mxu0 0.0
        %4157 = vmatpush1.msra.mxu0 0.0
        %4158 = vmatprep.subr.mxu0 0.0
        %4159 = vmatpush1.msra.mxu0 0.0
        %4160 = vmatprep.subr.mxu0 0.0
        %4161 = vmatpush1.msra.mxu0 0.0
        %4162 = vmatprep.subr.mxu0 0.0
        %4163 = vmatpush1.msra.mxu0 0.0
        %4164 = vmatprep.subr.mxu0 0.0
        %4165 = vmatpush1.msra.mxu0 0.0
        %4166 = vmatprep.subr.mxu0 0.0
        %4167 = vmatpush1.msra.mxu0 0.0
        %4168 = vmatprep.subr.mxu0 0.0
        %4169 = vmatpush1.msra.mxu0 0.0
        %4170 = vmatprep.subr.mxu0 0.0
        %4171 = vmatpush1.msra.mxu0 0.0
        %4172 = vmatprep.subr.mxu0 0.0
        %4173 = vmatpush1.msra.mxu0 0.0
        %4174 = vmatprep.subr.mxu0 0.0
        %4175 = vmatpush1.msra.mxu0 0.0
        %4176 = vmatprep.subr.mxu0 0.0
        %4177 = vmatpush1.msra.mxu0 0.0
        %4178 = vmatprep.subr.mxu0 0.0
        %4179 = vmatpush1.msra.mxu0 0.0
        %4180 = vmatprep.subr.mxu0 0.0
        %4181 = vmatpush1.msra.mxu0 0.0
        %4182 = vmatprep.subr.mxu0 0.0
        %4183 = vmatpush1.msra.mxu0 0.0
        %4184 = vmatprep.subr.mxu0 0.0
        %4185 = vmatpush1.msra.mxu0 0.0
        %4186 = vmatprep.subr.mxu0 0.0
        %4187 = vmatpush1.msra.mxu0 0.0
        %4188 = vmatprep.subr.mxu0 0.0
        %4189 = vmatpush1.msra.mxu0 0.0
        %4190 = vmatprep.subr.mxu0 0.0
        %4191 = vmatpush1.msra.mxu0 0.0
        %4192 = vmatprep.subr.mxu0 0.0
        %4193 = vmatpush1.msra.mxu0 0.0
        %4194 = vmatprep.mubr.f32.mxu0 0.0
        %4195 = vmatmul.mubr.f32.gmra.mrb[0].mxu0 %v4107
        %v4196 = vpop.f32.mrb[0].mxu0
        %v4197 = vadd.f32 0.0, %v4196
        %v4198 = vpop.f32.mrb[0].mxu0
        %4199 = vmatprep.mubr.f32.mxu0 0.0
        %4200 = vmatmul.mubr.f32.gmra.mrb[0].mxu0 %v4110
        %v4201 = vpop.f32.mrb[0].mxu0
        %v4202 = vadd.f32 0.0, %v4201
        %v4203 = vpop.f32.mrb[0].mxu0
        %4204 = vmatprep.mubr.f32.mxu0 0.0
        %4205 = vmatmul.mubr.f32.gmra.mrb[0].mxu0 %v4113
        %v4206 = vpop.f32.mrb[0].mxu0
        %v4207 = vadd.f32 0.0, %v4206
        %v4208 = vpop.f32.mrb[0].mxu0
        %4209 = vmatprep.mubr.f32.mxu0 0.0
        %4210 = vmatmul.mubr.f32.gmra.mrb[0].mxu0 %v4116
        %v4211 = vpop.f32.mrb[0].mxu0
        %v4212 = vadd.f32 0.0, %v4211
        %v4213 = vpop.f32.mrb[0].mxu0
        %4214 = vmatprep.mubr.f32.mxu0 0.0
        %4215 = vmatmul.mubr.f32.gmra.mrb[0].mxu0 %v4119
        %v4216 = vpop.f32.mrb[0].mxu0
        %v4217 = vadd.f32 0.0, %v4216
        %v4218 = vpop.f32.mrb[0].mxu0
        %4219 = vmatprep.mubr.f32.mxu0 0.0
        %4220 = vmatmul.mubr.f32.gmra.mrb[0].mxu0 %v4122
        %v4221 = vpop.f32.mrb[0].mxu0
        %v4222 = vadd.f32 0.0, %v4221
        %v4223 = vpop.f32.mrb[0].mxu0
        %4224 = vmatprep.mubr.f32.mxu0 0.0
        %4225 = vmatmul.mubr.f32.gmra.mrb[0].mxu0 %v4125
        %v4226 = vpop.f32.mrb[0].mxu0
        %v4227 = vadd.f32 0.0, %v4226
        %v4228 = vpop.f32.mrb[0].mxu0
        %4229 = vmatprep.mubr.f32.mxu0 0.0
        %4230 = vmatmul.mubr.f32.gmra.mrb[0].mxu0 %v4128
        %v4231 = vpop.f32.mrb[0].mxu0
        %v4232 = vadd.f32 0.0, %v4231
        %v4233 = vpop.f32.mrb[0].mxu0
        %4234 = vdwg.mxu0
        %v4235 = vadd.f32 %v4089, %v4197
        %v4236 = vadd.f32 %v4090, %v4202
        %v4237 = vadd.f32 %v4091, %v4207
        %v4238 = vadd.f32 %v4092, %v4212
        %v4239 = vadd.f32 %v4093, %v4217
        %v4240 = vadd.f32 %v4094, %v4222
        %v4241 = vadd.f32 %v4095, %v4227
        %v4242 = vadd.f32 %v4096, %v4232
        %v4243 = vld [vmem:[%s3666 + $0x1] sm:$0xff]
        %v4244 = vld [vmem:[%s3666 + $0x11] sm:$0xff]
        %v4245 = vld [vmem:[%s3666 + $0x21] sm:$0xff]
        %v4246 = vld [vmem:[%s3666 + $0x31] sm:$0xff]
        %v4247 = vld [vmem:[%s3666 + $0x41] sm:$0xff]
        %v4248 = vld [vmem:[%s3666 + $0x51] sm:$0xff]
        %v4249 = vld [vmem:[%s3666 + $0x61] sm:$0xff]
        %v4250 = vld [vmem:[%s3666 + $0x71] sm:$0xff]
        %v4251 = vld [vmem:[%s4 + $0x20] sm:$0xff]
        %v4253 = vsel %vm3638, %v4243, 0
        %v4256 = vsel %vm3638, %v4244, 0
        %v4259 = vsel %vm3638, %v4245, 0
        %v4262 = vsel %vm3638, %v4246, 0
        %v4265 = vsel %vm3638, %v4247, 0
        %v4268 = vsel %vm3638, %v4248, 0
        %v4271 = vsel %vm3638, %v4249, 0
        %v4274 = vsel %vm3638, %v4250, 0
        %4276 = vmatprep.subr.mxu0 0.0
        %4277 = vmatpush1.msra.mxu0 %v4251
        %4278 = vmatprep.subr.mxu0 0.0
        %4279 = vmatpush1.msra.mxu0 0.0
        %4280 = vmatprep.subr.mxu0 0.0
        %4281 = vmatpush1.msra.mxu0 0.0
        %4282 = vmatprep.subr.mxu0 0.0
        %4283 = vmatpush1.msra.mxu0 0.0
        %4284 = vmatprep.subr.mxu0 0.0
        %4285 = vmatpush1.msra.mxu0 0.0
        %4286 = vmatprep.subr.mxu0 0.0
        %4287 = vmatpush1.msra.mxu0 0.0
        %4288 = vmatprep.subr.mxu0 0.0
        %4289 = vmatpush1.msra.mxu0 0.0
        %4290 = vmatprep.subr.mxu0 0.0
        %4291 = vmatpush1.msra.mxu0 0.0
        %4292 = vmatprep.subr.mxu0 0.0
        %4293 = vmatpush1.msra.mxu0 0.0
        %4294 = vmatprep.subr.mxu0 0.0
        %4295 = vmatpush1.msra.mxu0 0.0
        %4296 = vmatprep.subr.mxu0 0.0
        %4297 = vmatpush1.msra.mxu0 0.0
        %4298 = vmatprep.subr.mxu0 0.0
        %4299 = vmatpush1.msra.mxu0 0.0
        %4300 = vmatprep.subr.mxu0 0.0
        %4301 = vmatpush1.msra.mxu0 0.0
        %4302 = vmatprep.subr.mxu0 0.0
        %4303 = vmatpush1.msra.mxu0 0.0
        %4304 = vmatprep.subr.mxu0 0.0
        %4305 = vmatpush1.msra.mxu0 0.0
        %4306 = vmatprep.subr.mxu0 0.0
        %4307 = vmatpush1.msra.mxu0 0.0
        %4308 = vmatprep.subr.mxu0 0.0
        %4309 = vmatpush1.msra.mxu0 0.0
        %4310 = vmatprep.subr.mxu0 0.0
        %4311 = vmatpush1.msra.mxu0 0.0
        %4312 = vmatprep.subr.mxu0 0.0
        %4313 = vmatpush1.msra.mxu0 0.0
        %4314 = vmatprep.subr.mxu0 0.0
        %4315 = vmatpush1.msra.mxu0 0.0
        %4316 = vmatprep.subr.mxu0 0.0
        %4317 = vmatpush1.msra.mxu0 0.0
        %4318 = vmatprep.subr.mxu0 0.0
        %4319 = vmatpush1.msra.mxu0 0.0
        %4320 = vmatprep.subr.mxu0 0.0
        %4321 = vmatpush1.msra.mxu0 0.0
        %4322 = vmatprep.subr.mxu0 0.0
        %4323 = vmatpush1.msra.mxu0 0.0
        %4324 = vmatprep.subr.mxu0 0.0
        %4325 = vmatpush1.msra.mxu0 0.0
        %4326 = vmatprep.subr.mxu0 0.0
        %4327 = vmatpush1.msra.mxu0 0.0
        %4328 = vmatprep.subr.mxu0 0.0
        %4329 = vmatpush1.msra.mxu0 0.0
        %4330 = vmatprep.subr.mxu0 0.0
        %4331 = vmatpush1.msra.mxu0 0.0
        %4332 = vmatprep.subr.mxu0 0.0
        %4333 = vmatpush1.msra.mxu0 0.0
        %4334 = vmatprep.subr.mxu0 0.0
        %4335 = vmatpush1.msra.mxu0 0.0
        %4336 = vmatprep.subr.mxu0 0.0
        %4337 = vmatpush1.msra.mxu0 0.0
        %4338 = vmatprep.subr.mxu0 0.0
        %4339 = vmatpush1.msra.mxu0 0.0
        %4340 = vmatprep.mubr.f32.mxu0 0.0
        %4341 = vmatmul.mubr.f32.gmra.mrb[0].mxu0 %v4253
        %v4342 = vpop.f32.mrb[0].mxu0
        %v4343 = vadd.f32 0.0, %v4342
        %v4344 = vpop.f32.mrb[0].mxu0
        %4345 = vmatprep.mubr.f32.mxu0 0.0
        %4346 = vmatmul.mubr.f32.gmra.mrb[0].mxu0 %v4256
        %v4347 = vpop.f32.mrb[0].mxu0
        %v4348 = vadd.f32 0.0, %v4347
        %v4349 = vpop.f32.mrb[0].mxu0
        %4350 = vmatprep.mubr.f32.mxu0 0.0
        %4351 = vmatmul.mubr.f32.gmra.mrb[0].mxu0 %v4259
        %v4352 = vpop.f32.mrb[0].mxu0
        %v4353 = vadd.f32 0.0, %v4352
        %v4354 = vpop.f32.mrb[0].mxu0
        %4355 = vmatprep.mubr.f32.mxu0 0.0
        %4356 = vmatmul.mubr.f32.gmra.mrb[0].mxu0 %v4262
        %v4357 = vpop.f32.mrb[0].mxu0
        %v4358 = vadd.f32 0.0, %v4357
        %v4359 = vpop.f32.mrb[0].mxu0
        %4360 = vmatprep.mubr.f32.mxu0 0.0
        %4361 = vmatmul.mubr.f32.gmra.mrb[0].mxu0 %v4265
        %v4362 = vpop.f32.mrb[0].mxu0
        %v4363 = vadd.f32 0.0, %v4362
        %v4364 = vpop.f32.mrb[0].mxu0
        %4365 = vmatprep.mubr.f32.mxu0 0.0
        %4366 = vmatmul.mubr.f32.gmra.mrb[0].mxu0 %v4268
        %v4367 = vpop.f32.mrb[0].mxu0
        %v4368 = vadd.f32 0.0, %v4367
        %v4369 = vpop.f32.mrb[0].mxu0
        %4370 = vmatprep.mubr.f32.mxu0 0.0
        %4371 = vmatmul.mubr.f32.gmra.mrb[0].mxu0 %v4271
        %v4372 = vpop.f32.mrb[0].mxu0
        %v4373 = vadd.f32 0.0, %v4372
        %v4374 = vpop.f32.mrb[0].mxu0
        %4375 = vmatprep.mubr.f32.mxu0 0.0
        %4376 = vmatmul.mubr.f32.gmra.mrb[0].mxu0 %v4274
        %v4377 = vpop.f32.mrb[0].mxu0
        %v4378 = vadd.f32 0.0, %v4377
        %v4379 = vpop.f32.mrb[0].mxu0
        %4380 = vdwg.mxu0
        %v4381 = vadd.f32 %v4235, %v4343
        %v4382 = vadd.f32 %v4236, %v4348
        %v4383 = vadd.f32 %v4237, %v4353
        %v4384 = vadd.f32 %v4238, %v4358
        %v4385 = vadd.f32 %v4239, %v4363
        %v4386 = vadd.f32 %v4240, %v4368
        %v4387 = vadd.f32 %v4241, %v4373
        %v4388 = vadd.f32 %v4242, %v4378
        %v4389 = vld [vmem:[%s3666 + $0x2] sm:$0xff]
        %v4390 = vld [vmem:[%s3666 + $0x12] sm:$0xff]
        %v4391 = vld [vmem:[%s3666 + $0x22] sm:$0xff]
        %v4392 = vld [vmem:[%s3666 + $0x32] sm:$0xff]
        %v4393 = vld [vmem:[%s3666 + $0x42] sm:$0xff]
        %v4394 = vld [vmem:[%s3666 + $0x52] sm:$0xff]
        %v4395 = vld [vmem:[%s3666 + $0x62] sm:$0xff]
        %v4396 = vld [vmem:[%s3666 + $0x72] sm:$0xff]
        %v4397 = vld [vmem:[%s4 + $0x28] sm:$0xff]
        %v4399 = vsel %vm3638, %v4389, 0
        %v4402 = vsel %vm3638, %v4390, 0
        %v4405 = vsel %vm3638, %v4391, 0
        %v4408 = vsel %vm3638, %v4392, 0
        %v4411 = vsel %vm3638, %v4393, 0
        %v4414 = vsel %vm3638, %v4394, 0
        %v4417 = vsel %vm3638, %v4395, 0
        %v4420 = vsel %vm3638, %v4396, 0
        %4422 = vmatprep.subr.mxu0 0.0
        %4423 = vmatpush1.msra.mxu0 %v4397
        %4424 = vmatprep.subr.mxu0 0.0
        %4425 = vmatpush1.msra.mxu0 0.0
        %4426 = vmatprep.subr.mxu0 0.0
        %4427 = vmatpush1.msra.mxu0 0.0
        %4428 = vmatprep.subr.mxu0 0.0
        %4429 = vmatpush1.msra.mxu0 0.0
        %4430 = vmatprep.subr.mxu0 0.0
        %4431 = vmatpush1.msra.mxu0 0.0
        %4432 = vmatprep.subr.mxu0 0.0
        %4433 = vmatpush1.msra.mxu0 0.0
        %4434 = vmatprep.subr.mxu0 0.0
        %4435 = vmatpush1.msra.mxu0 0.0
        %4436 = vmatprep.subr.mxu0 0.0
        %4437 = vmatpush1.msra.mxu0 0.0
        %4438 = vmatprep.subr.mxu0 0.0
        %4439 = vmatpush1.msra.mxu0 0.0
        %4440 = vmatprep.subr.mxu0 0.0
        %4441 = vmatpush1.msra.mxu0 0.0
        %4442 = vmatprep.subr.mxu0 0.0
        %4443 = vmatpush1.msra.mxu0 0.0
        %4444 = vmatprep.subr.mxu0 0.0
        %4445 = vmatpush1.msra.mxu0 0.0
        %4446 = vmatprep.subr.mxu0 0.0
        %4447 = vmatpush1.msra.mxu0 0.0
        %4448 = vmatprep.subr.mxu0 0.0
        %4449 = vmatpush1.msra.mxu0 0.0
        %4450 = vmatprep.subr.mxu0 0.0
        %4451 = vmatpush1.msra.mxu0 0.0
        %4452 = vmatprep.subr.mxu0 0.0
        %4453 = vmatpush1.msra.mxu0 0.0
        %4454 = vmatprep.subr.mxu0 0.0
        %4455 = vmatpush1.msra.mxu0 0.0
        %4456 = vmatprep.subr.mxu0 0.0
        %4457 = vmatpush1.msra.mxu0 0.0
        %4458 = vmatprep.subr.mxu0 0.0
        %4459 = vmatpush1.msra.mxu0 0.0
        %4460 = vmatprep.subr.mxu0 0.0
        %4461 = vmatpush1.msra.mxu0 0.0
        %4462 = vmatprep.subr.mxu0 0.0
        %4463 = vmatpush1.msra.mxu0 0.0
        %4464 = vmatprep.subr.mxu0 0.0
        %4465 = vmatpush1.msra.mxu0 0.0
        %4466 = vmatprep.subr.mxu0 0.0
        %4467 = vmatpush1.msra.mxu0 0.0
        %4468 = vmatprep.subr.mxu0 0.0
        %4469 = vmatpush1.msra.mxu0 0.0
        %4470 = vmatprep.subr.mxu0 0.0
        %4471 = vmatpush1.msra.mxu0 0.0
        %4472 = vmatprep.subr.mxu0 0.0
        %4473 = vmatpush1.msra.mxu0 0.0
        %4474 = vmatprep.subr.mxu0 0.0
        %4475 = vmatpush1.msra.mxu0 0.0
        %4476 = vmatprep.subr.mxu0 0.0
        %4477 = vmatpush1.msra.mxu0 0.0
        %4478 = vmatprep.subr.mxu0 0.0
        %4479 = vmatpush1.msra.mxu0 0.0
        %4480 = vmatprep.subr.mxu0 0.0
        %4481 = vmatpush1.msra.mxu0 0.0
        %4482 = vmatprep.subr.mxu0 0.0
        %4483 = vmatpush1.msra.mxu0 0.0
        %4484 = vmatprep.subr.mxu0 0.0
        %4485 = vmatpush1.msra.mxu0 0.0
        %4486 = vmatprep.mubr.f32.mxu0 0.0
        %4487 = vmatmul.mubr.f32.gmra.mrb[0].mxu0 %v4399
        %v4488 = vpop.f32.mrb[0].mxu0
        %v4489 = vadd.f32 0.0, %v4488
        %v4490 = vpop.f32.mrb[0].mxu0
        %4491 = vmatprep.mubr.f32.mxu0 0.0
        %4492 = vmatmul.mubr.f32.gmra.mrb[0].mxu0 %v4402
        %v4493 = vpop.f32.mrb[0].mxu0
        %v4494 = vadd.f32 0.0, %v4493
        %v4495 = vpop.f32.mrb[0].mxu0
        %4496 = vmatprep.mubr.f32.mxu0 0.0
        %4497 = vmatmul.mubr.f32.gmra.mrb[0].mxu0 %v4405
        %v4498 = vpop.f32.mrb[0].mxu0
        %v4499 = vadd.f32 0.0, %v4498
        %v4500 = vpop.f32.mrb[0].mxu0
        %4501 = vmatprep.mubr.f32.mxu0 0.0
        %4502 = vmatmul.mubr.f32.gmra.mrb[0].mxu0 %v4408
        %v4503 = vpop.f32.mrb[0].mxu0
        %v4504 = vadd.f32 0.0, %v4503
        %v4505 = vpop.f32.mrb[0].mxu0
        %4506 = vmatprep.mubr.f32.mxu0 0.0
        %4507 = vmatmul.mubr.f32.gmra.mrb[0].mxu0 %v4411
        %v4508 = vpop.f32.mrb[0].mxu0
        %v4509 = vadd.f32 0.0, %v4508
        %v4510 = vpop.f32.mrb[0].mxu0
        %4511 = vmatprep.mubr.f32.mxu0 0.0
        %4512 = vmatmul.mubr.f32.gmra.mrb[0].mxu0 %v4414
        %v4513 = vpop.f32.mrb[0].mxu0
        %v4514 = vadd.f32 0.0, %v4513
        %v4515 = vpop.f32.mrb[0].mxu0
        %4516 = vmatprep.mubr.f32.mxu0 0.0
        %4517 = vmatmul.mubr.f32.gmra.mrb[0].mxu0 %v4417
        %v4518 = vpop.f32.mrb[0].mxu0
        %v4519 = vadd.f32 0.0, %v4518
        %v4520 = vpop.f32.mrb[0].mxu0
        %4521 = vmatprep.mubr.f32.mxu0 0.0
        %4522 = vmatmul.mubr.f32.gmra.mrb[0].mxu0 %v4420
        %v4523 = vpop.f32.mrb[0].mxu0
        %v4524 = vadd.f32 0.0, %v4523
        %v4525 = vpop.f32.mrb[0].mxu0
        %4526 = vdwg.mxu0
        %v4527 = vadd.f32 %v4381, %v4489
        %v4528 = vadd.f32 %v4382, %v4494
        %v4529 = vadd.f32 %v4383, %v4499
        %v4530 = vadd.f32 %v4384, %v4504
        %v4531 = vadd.f32 %v4385, %v4509
        %v4532 = vadd.f32 %v4386, %v4514
        %v4533 = vadd.f32 %v4387, %v4519
        %v4534 = vadd.f32 %v4388, %v4524
        %s4535 = scalar_lea.vmem [#allocation3], 32
        %v4536 = vld [vmem:[%s4535] sm:$0xff]
        %v4537 = vld [vmem:[%s4535 + $0x10] sm:$0xff]
        %v4538 = vld [vmem:[%s4535 + $0x20] sm:$0xff]
        %v4539 = vld [vmem:[%s4535 + $0x30] sm:$0xff]
        %v4540 = vld [vmem:[%s4535 + $0x40] sm:$0xff]
        %v4541 = vld [vmem:[%s4535 + $0x50] sm:$0xff]
        %v4542 = vld [vmem:[%s4535 + $0x60] sm:$0xff]
        %v4543 = vld [vmem:[%s4535 + $0x70] sm:$0xff]
        %v4544 = vld [vmem:[%s4 + $0x30] sm:$0xff]
        %v4546 = vsel %vm3638, %v4536, 0
        %v4549 = vsel %vm3638, %v4537, 0
        %v4552 = vsel %vm3638, %v4538, 0
        %v4555 = vsel %vm3638, %v4539, 0
        %v4558 = vsel %vm3638, %v4540, 0
        %v4561 = vsel %vm3638, %v4541, 0
        %v4564 = vsel %vm3638, %v4542, 0
        %v4567 = vsel %vm3638, %v4543, 0
        %4569 = vmatprep.subr.mxu0 0.0
        %4570 = vmatpush1.msra.mxu0 %v4544
        %4571 = vmatprep.subr.mxu0 0.0
        %4572 = vmatpush1.msra.mxu0 0.0
        %4573 = vmatprep.subr.mxu0 0.0
        %4574 = vmatpush1.msra.mxu0 0.0
        %4575 = vmatprep.subr.mxu0 0.0
        %4576 = vmatpush1.msra.mxu0 0.0
        %4577 = vmatprep.subr.mxu0 0.0
        %4578 = vmatpush1.msra.mxu0 0.0
        %4579 = vmatprep.subr.mxu0 0.0
        %4580 = vmatpush1.msra.mxu0 0.0
        %4581 = vmatprep.subr.mxu0 0.0
        %4582 = vmatpush1.msra.mxu0 0.0
        %4583 = vmatprep.subr.mxu0 0.0
        %4584 = vmatpush1.msra.mxu0 0.0
        %4585 = vmatprep.subr.mxu0 0.0
        %4586 = vmatpush1.msra.mxu0 0.0
        %4587 = vmatprep.subr.mxu0 0.0
        %4588 = vmatpush1.msra.mxu0 0.0
        %4589 = vmatprep.subr.mxu0 0.0
        %4590 = vmatpush1.msra.mxu0 0.0
        %4591 = vmatprep.subr.mxu0 0.0
        %4592 = vmatpush1.msra.mxu0 0.0
        %4593 = vmatprep.subr.mxu0 0.0
        %4594 = vmatpush1.msra.mxu0 0.0
        %4595 = vmatprep.subr.mxu0 0.0
        %4596 = vmatpush1.msra.mxu0 0.0
        %4597 = vmatprep.subr.mxu0 0.0
        %4598 = vmatpush1.msra.mxu0 0.0
        %4599 = vmatprep.subr.mxu0 0.0
        %4600 = vmatpush1.msra.mxu0 0.0
        %4601 = vmatprep.subr.mxu0 0.0
        %4602 = vmatpush1.msra.mxu0 0.0
        %4603 = vmatprep.subr.mxu0 0.0
        %4604 = vmatpush1.msra.mxu0 0.0
        %4605 = vmatprep.subr.mxu0 0.0
        %4606 = vmatpush1.msra.mxu0 0.0
        %4607 = vmatprep.subr.mxu0 0.0
        %4608 = vmatpush1.msra.mxu0 0.0
        %4609 = vmatprep.subr.mxu0 0.0
        %4610 = vmatpush1.msra.mxu0 0.0
        %4611 = vmatprep.subr.mxu0 0.0
        %4612 = vmatpush1.msra.mxu0 0.0
        %4613 = vmatprep.subr.mxu0 0.0
        %4614 = vmatpush1.msra.mxu0 0.0
        %4615 = vmatprep.subr.mxu0 0.0
        %4616 = vmatpush1.msra.mxu0 0.0
        %4617 = vmatprep.subr.mxu0 0.0
        %4618 = vmatpush1.msra.mxu0 0.0
        %4619 = vmatprep.subr.mxu0 0.0
        %4620 = vmatpush1.msra.mxu0 0.0
        %4621 = vmatprep.subr.mxu0 0.0
        %4622 = vmatpush1.msra.mxu0 0.0
        %4623 = vmatprep.subr.mxu0 0.0
        %4624 = vmatpush1.msra.mxu0 0.0
        %4625 = vmatprep.subr.mxu0 0.0
        %4626 = vmatpush1.msra.mxu0 0.0
        %4627 = vmatprep.subr.mxu0 0.0
        %4628 = vmatpush1.msra.mxu0 0.0
        %4629 = vmatprep.subr.mxu0 0.0
        %4630 = vmatpush1.msra.mxu0 0.0
        %4631 = vmatprep.subr.mxu0 0.0
        %4632 = vmatpush1.msra.mxu0 0.0
        %4633 = vmatprep.mubr.f32.mxu0 0.0
        %4634 = vmatmul.mubr.f32.gmra.mrb[0].mxu0 %v4546
        %v4635 = vpop.f32.mrb[0].mxu0
        %v4636 = vadd.f32 0.0, %v4635
        %v4637 = vpop.f32.mrb[0].mxu0
        %4638 = vmatprep.mubr.f32.mxu0 0.0
        %4639 = vmatmul.mubr.f32.gmra.mrb[0].mxu0 %v4549
        %v4640 = vpop.f32.mrb[0].mxu0
        %v4641 = vadd.f32 0.0, %v4640
        %v4642 = vpop.f32.mrb[0].mxu0
        %4643 = vmatprep.mubr.f32.mxu0 0.0
        %4644 = vmatmul.mubr.f32.gmra.mrb[0].mxu0 %v4552
        %v4645 = vpop.f32.mrb[0].mxu0
        %v4646 = vadd.f32 0.0, %v4645
        %v4647 = vpop.f32.mrb[0].mxu0
        %4648 = vmatprep.mubr.f32.mxu0 0.0
        %4649 = vmatmul.mubr.f32.gmra.mrb[0].mxu0 %v4555
        %v4650 = vpop.f32.mrb[0].mxu0
        %v4651 = vadd.f32 0.0, %v4650
        %v4652 = vpop.f32.mrb[0].mxu0
        %4653 = vmatprep.mubr.f32.mxu0 0.0
        %4654 = vmatmul.mubr.f32.gmra.mrb[0].mxu0 %v4558
        %v4655 = vpop.f32.mrb[0].mxu0
        %v4656 = vadd.f32 0.0, %v4655
        %v4657 = vpop.f32.mrb[0].mxu0
        %4658 = vmatprep.mubr.f32.mxu0 0.0
        %4659 = vmatmul.mubr.f32.gmra.mrb[0].mxu0 %v4561
        %v4660 = vpop.f32.mrb[0].mxu0
        %v4661 = vadd.f32 0.0, %v4660
        %v4662 = vpop.f32.mrb[0].mxu0
        %4663 = vmatprep.mubr.f32.mxu0 0.0
        %4664 = vmatmul.mubr.f32.gmra.mrb[0].mxu0 %v4564
        %v4665 = vpop.f32.mrb[0].mxu0
        %v4666 = vadd.f32 0.0, %v4665
        %v4667 = vpop.f32.mrb[0].mxu0
        %4668 = vmatprep.mubr.f32.mxu0 0.0
        %4669 = vmatmul.mubr.f32.gmra.mrb[0].mxu0 %v4567
        %v4670 = vpop.f32.mrb[0].mxu0
        %v4671 = vadd.f32 0.0, %v4670
        %v4672 = vpop.f32.mrb[0].mxu0
        %4673 = vdwg.mxu0
        %v4674 = vadd.f32 %v4527, %v4636
        %v4675 = vadd.f32 %v4528, %v4641
        %v4676 = vadd.f32 %v4529, %v4646
        %v4677 = vadd.f32 %v4530, %v4651
        %v4678 = vadd.f32 %v4531, %v4656
        %v4679 = vadd.f32 %v4532, %v4661
        %v4680 = vadd.f32 %v4533, %v4666
        %v4681 = vadd.f32 %v4534, %v4671
        %v4682 = vld [vmem:[%s4535 + $0x1] sm:$0xff]
        %v4683 = vld [vmem:[%s4535 + $0x11] sm:$0xff]
        %v4684 = vld [vmem:[%s4535 + $0x21] sm:$0xff]
        %v4685 = vld [vmem:[%s4535 + $0x31] sm:$0xff]
        %v4686 = vld [vmem:[%s4535 + $0x41] sm:$0xff]
        %v4687 = vld [vmem:[%s4535 + $0x51] sm:$0xff]
        %v4688 = vld [vmem:[%s4535 + $0x61] sm:$0xff]
        %v4689 = vld [vmem:[%s4535 + $0x71] sm:$0xff]
        %v4690 = vld [vmem:[%s4 + $0x38] sm:$0xff]
        %v4692 = vsel %vm3638, %v4682, 0
        %v4695 = vsel %vm3638, %v4683, 0
        %v4698 = vsel %vm3638, %v4684, 0
        %v4701 = vsel %vm3638, %v4685, 0
        %v4704 = vsel %vm3638, %v4686, 0
        %v4707 = vsel %vm3638, %v4687, 0
        %v4710 = vsel %vm3638, %v4688, 0
        %v4713 = vsel %vm3638, %v4689, 0
        %4715 = vmatprep.subr.mxu0 0.0
        %4716 = vmatpush1.msra.mxu0 %v4690
        %4717 = vmatprep.subr.mxu0 0.0
        %4718 = vmatpush1.msra.mxu0 0.0
        %4719 = vmatprep.subr.mxu0 0.0
        %4720 = vmatpush1.msra.mxu0 0.0
        %4721 = vmatprep.subr.mxu0 0.0
        %4722 = vmatpush1.msra.mxu0 0.0
        %4723 = vmatprep.subr.mxu0 0.0
        %4724 = vmatpush1.msra.mxu0 0.0
        %4725 = vmatprep.subr.mxu0 0.0
        %4726 = vmatpush1.msra.mxu0 0.0
        %4727 = vmatprep.subr.mxu0 0.0
        %4728 = vmatpush1.msra.mxu0 0.0
        %4729 = vmatprep.subr.mxu0 0.0
        %4730 = vmatpush1.msra.mxu0 0.0
        %4731 = vmatprep.subr.mxu0 0.0
        %4732 = vmatpush1.msra.mxu0 0.0
        %4733 = vmatprep.subr.mxu0 0.0
        %4734 = vmatpush1.msra.mxu0 0.0
        %4735 = vmatprep.subr.mxu0 0.0
        %4736 = vmatpush1.msra.mxu0 0.0
        %4737 = vmatprep.subr.mxu0 0.0
        %4738 = vmatpush1.msra.mxu0 0.0
        %4739 = vmatprep.subr.mxu0 0.0
        %4740 = vmatpush1.msra.mxu0 0.0
        %4741 = vmatprep.subr.mxu0 0.0
        %4742 = vmatpush1.msra.mxu0 0.0
        %4743 = vmatprep.subr.mxu0 0.0
        %4744 = vmatpush1.msra.mxu0 0.0
        %4745 = vmatprep.subr.mxu0 0.0
        %4746 = vmatpush1.msra.mxu0 0.0
        %4747 = vmatprep.subr.mxu0 0.0
        %4748 = vmatpush1.msra.mxu0 0.0
        %4749 = vmatprep.subr.mxu0 0.0
        %4750 = vmatpush1.msra.mxu0 0.0
        %4751 = vmatprep.subr.mxu0 0.0
        %4752 = vmatpush1.msra.mxu0 0.0
        %4753 = vmatprep.subr.mxu0 0.0
        %4754 = vmatpush1.msra.mxu0 0.0
        %4755 = vmatprep.subr.mxu0 0.0
        %4756 = vmatpush1.msra.mxu0 0.0
        %4757 = vmatprep.subr.mxu0 0.0
        %4758 = vmatpush1.msra.mxu0 0.0
        %4759 = vmatprep.subr.mxu0 0.0
        %4760 = vmatpush1.msra.mxu0 0.0
        %4761 = vmatprep.subr.mxu0 0.0
        %4762 = vmatpush1.msra.mxu0 0.0
        %4763 = vmatprep.subr.mxu0 0.0
        %4764 = vmatpush1.msra.mxu0 0.0
        %4765 = vmatprep.subr.mxu0 0.0
        %4766 = vmatpush1.msra.mxu0 0.0
        %4767 = vmatprep.subr.mxu0 0.0
        %4768 = vmatpush1.msra.mxu0 0.0
        %4769 = vmatprep.subr.mxu0 0.0
        %4770 = vmatpush1.msra.mxu0 0.0
        %4771 = vmatprep.subr.mxu0 0.0
        %4772 = vmatpush1.msra.mxu0 0.0
        %4773 = vmatprep.subr.mxu0 0.0
        %4774 = vmatpush1.msra.mxu0 0.0
        %4775 = vmatprep.subr.mxu0 0.0
        %4776 = vmatpush1.msra.mxu0 0.0
        %4777 = vmatprep.subr.mxu0 0.0
        %4778 = vmatpush1.msra.mxu0 0.0
        %4779 = vmatprep.mubr.f32.mxu0 0.0
        %4780 = vmatmul.mubr.f32.gmra.mrb[0].mxu0 %v4692
        %v4781 = vpop.f32.mrb[0].mxu0
        %v4782 = vadd.f32 0.0, %v4781
        %v4783 = vpop.f32.mrb[0].mxu0
        %4784 = vmatprep.mubr.f32.mxu0 0.0
        %4785 = vmatmul.mubr.f32.gmra.mrb[0].mxu0 %v4695
        %v4786 = vpop.f32.mrb[0].mxu0
        %v4787 = vadd.f32 0.0, %v4786
        %v4788 = vpop.f32.mrb[0].mxu0
        %4789 = vmatprep.mubr.f32.mxu0 0.0
        %4790 = vmatmul.mubr.f32.gmra.mrb[0].mxu0 %v4698
        %v4791 = vpop.f32.mrb[0].mxu0
        %v4792 = vadd.f32 0.0, %v4791
        %v4793 = vpop.f32.mrb[0].mxu0
        %4794 = vmatprep.mubr.f32.mxu0 0.0
        %4795 = vmatmul.mubr.f32.gmra.mrb[0].mxu0 %v4701
        %v4796 = vpop.f32.mrb[0].mxu0
        %v4797 = vadd.f32 0.0, %v4796
        %v4798 = vpop.f32.mrb[0].mxu0
        %4799 = vmatprep.mubr.f32.mxu0 0.0
        %4800 = vmatmul.mubr.f32.gmra.mrb[0].mxu0 %v4704
        %v4801 = vpop.f32.mrb[0].mxu0
        %v4802 = vadd.f32 0.0, %v4801
        %v4803 = vpop.f32.mrb[0].mxu0
        %4804 = vmatprep.mubr.f32.mxu0 0.0
        %4805 = vmatmul.mubr.f32.gmra.mrb[0].mxu0 %v4707
        %v4806 = vpop.f32.mrb[0].mxu0
        %v4807 = vadd.f32 0.0, %v4806
        %v4808 = vpop.f32.mrb[0].mxu0
        %4809 = vmatprep.mubr.f32.mxu0 0.0
        %4810 = vmatmul.mubr.f32.gmra.mrb[0].mxu0 %v4710
        %v4811 = vpop.f32.mrb[0].mxu0
        %v4812 = vadd.f32 0.0, %v4811
        %v4813 = vpop.f32.mrb[0].mxu0
        %4814 = vmatprep.mubr.f32.mxu0 0.0
        %4815 = vmatmul.mubr.f32.gmra.mrb[0].mxu0 %v4713
        %v4816 = vpop.f32.mrb[0].mxu0
        %v4817 = vadd.f32 0.0, %v4816
        %v4818 = vpop.f32.mrb[0].mxu0
        %4819 = vdwg.mxu0
        %v4820 = vadd.f32 %v4674, %v4782
        %v4821 = vadd.f32 %v4675, %v4787
        %v4822 = vadd.f32 %v4676, %v4792
        %v4823 = vadd.f32 %v4677, %v4797
        %v4824 = vadd.f32 %v4678, %v4802
        %v4825 = vadd.f32 %v4679, %v4807
        %v4826 = vadd.f32 %v4680, %v4812
        %v4827 = vadd.f32 %v4681, %v4817
        %v4828 = vld [vmem:[%s4535 + $0x2] sm:$0xff]
        %v4829 = vld [vmem:[%s4535 + $0x12] sm:$0xff]
        %v4830 = vld [vmem:[%s4535 + $0x22] sm:$0xff]
        %v4831 = vld [vmem:[%s4535 + $0x32] sm:$0xff]
        %v4832 = vld [vmem:[%s4535 + $0x42] sm:$0xff]
        %v4833 = vld [vmem:[%s4535 + $0x52] sm:$0xff]
        %v4834 = vld [vmem:[%s4535 + $0x62] sm:$0xff]
        %v4835 = vld [vmem:[%s4535 + $0x72] sm:$0xff]
        %v4836 = vld [vmem:[%s4 + $0x40] sm:$0xff]
        %v4838 = vsel %vm3638, %v4828, 0
        %v4841 = vsel %vm3638, %v4829, 0
        %v4844 = vsel %vm3638, %v4830, 0
        %v4847 = vsel %vm3638, %v4831, 0
        %v4850 = vsel %vm3638, %v4832, 0
        %v4853 = vsel %vm3638, %v4833, 0
        %v4856 = vsel %vm3638, %v4834, 0
        %v4859 = vsel %vm3638, %v4835, 0
        %4861 = vmatprep.subr.mxu0 0.0
        %4862 = vmatpush1.msra.mxu0 %v4836
        %4863 = vmatprep.subr.mxu0 0.0
        %4864 = vmatpush1.msra.mxu0 0.0
        %4865 = vmatprep.subr.mxu0 0.0
        %4866 = vmatpush1.msra.mxu0 0.0
        %4867 = vmatprep.subr.mxu0 0.0
        %4868 = vmatpush1.msra.mxu0 0.0
        %4869 = vmatprep.subr.mxu0 0.0
        %4870 = vmatpush1.msra.mxu0 0.0
        %4871 = vmatprep.subr.mxu0 0.0
        %4872 = vmatpush1.msra.mxu0 0.0
        %4873 = vmatprep.subr.mxu0 0.0
        %4874 = vmatpush1.msra.mxu0 0.0
        %4875 = vmatprep.subr.mxu0 0.0
        %4876 = vmatpush1.msra.mxu0 0.0
        %4877 = vmatprep.subr.mxu0 0.0
        %4878 = vmatpush1.msra.mxu0 0.0
        %4879 = vmatprep.subr.mxu0 0.0
        %4880 = vmatpush1.msra.mxu0 0.0
        %4881 = vmatprep.subr.mxu0 0.0
        %4882 = vmatpush1.msra.mxu0 0.0
        %4883 = vmatprep.subr.mxu0 0.0
        %4884 = vmatpush1.msra.mxu0 0.0
        %4885 = vmatprep.subr.mxu0 0.0
        %4886 = vmatpush1.msra.mxu0 0.0
        %4887 = vmatprep.subr.mxu0 0.0
        %4888 = vmatpush1.msra.mxu0 0.0
        %4889 = vmatprep.subr.mxu0 0.0
        %4890 = vmatpush1.msra.mxu0 0.0
        %4891 = vmatprep.subr.mxu0 0.0
        %4892 = vmatpush1.msra.mxu0 0.0
        %4893 = vmatprep.subr.mxu0 0.0
        %4894 = vmatpush1.msra.mxu0 0.0
        %4895 = vmatprep.subr.mxu0 0.0
        %4896 = vmatpush1.msra.mxu0 0.0
        %4897 = vmatprep.subr.mxu0 0.0
        %4898 = vmatpush1.msra.mxu0 0.0
        %4899 = vmatprep.subr.mxu0 0.0
        %4900 = vmatpush1.msra.mxu0 0.0
        %4901 = vmatprep.subr.mxu0 0.0
        %4902 = vmatpush1.msra.mxu0 0.0
        %4903 = vmatprep.subr.mxu0 0.0
        %4904 = vmatpush1.msra.mxu0 0.0
        %4905 = vmatprep.subr.mxu0 0.0
        %4906 = vmatpush1.msra.mxu0 0.0
        %4907 = vmatprep.subr.mxu0 0.0
        %4908 = vmatpush1.msra.mxu0 0.0
        %4909 = vmatprep.subr.mxu0 0.0
        %4910 = vmatpush1.msra.mxu0 0.0
        %4911 = vmatprep.subr.mxu0 0.0
        %4912 = vmatpush1.msra.mxu0 0.0
        %4913 = vmatprep.subr.mxu0 0.0
        %4914 = vmatpush1.msra.mxu0 0.0
        %4915 = vmatprep.subr.mxu0 0.0
        %4916 = vmatpush1.msra.mxu0 0.0
        %4917 = vmatprep.subr.mxu0 0.0
        %4918 = vmatpush1.msra.mxu0 0.0
        %4919 = vmatprep.subr.mxu0 0.0
        %4920 = vmatpush1.msra.mxu0 0.0
        %4921 = vmatprep.subr.mxu0 0.0
        %4922 = vmatpush1.msra.mxu0 0.0
        %4923 = vmatprep.subr.mxu0 0.0
        %4924 = vmatpush1.msra.mxu0 0.0
        %4925 = vmatprep.mubr.f32.mxu0 0.0
        %4926 = vmatmul.mubr.f32.gmra.mrb[0].mxu0 %v4838
        %v4927 = vpop.f32.mrb[0].mxu0
        %v4928 = vadd.f32 0.0, %v4927
        %v4929 = vpop.f32.mrb[0].mxu0
        %4930 = vmatprep.mubr.f32.mxu0 0.0
        %4931 = vmatmul.mubr.f32.gmra.mrb[0].mxu0 %v4841
        %v4932 = vpop.f32.mrb[0].mxu0
        %v4933 = vadd.f32 0.0, %v4932
        %v4934 = vpop.f32.mrb[0].mxu0
        %4935 = vmatprep.mubr.f32.mxu0 0.0
        %4936 = vmatmul.mubr.f32.gmra.mrb[0].mxu0 %v4844
        %v4937 = vpop.f32.mrb[0].mxu0
        %v4938 = vadd.f32 0.0, %v4937
        %v4939 = vpop.f32.mrb[0].mxu0
        %4940 = vmatprep.mubr.f32.mxu0 0.0
        %4941 = vmatmul.mubr.f32.gmra.mrb[0].mxu0 %v4847
        %v4942 = vpop.f32.mrb[0].mxu0
        %v4943 = vadd.f32 0.0, %v4942
        %v4944 = vpop.f32.mrb[0].mxu0
        %4945 = vmatprep.mubr.f32.mxu0 0.0
        %4946 = vmatmul.mubr.f32.gmra.mrb[0].mxu0 %v4850
        %v4947 = vpop.f32.mrb[0].mxu0
        %v4948 = vadd.f32 0.0, %v4947
        %v4949 = vpop.f32.mrb[0].mxu0
        %4950 = vmatprep.mubr.f32.mxu0 0.0
        %4951 = vmatmul.mubr.f32.gmra.mrb[0].mxu0 %v4853
        %v4952 = vpop.f32.mrb[0].mxu0
        %v4953 = vadd.f32 0.0, %v4952
        %v4954 = vpop.f32.mrb[0].mxu0
        %4955 = vmatprep.mubr.f32.mxu0 0.0
        %4956 = vmatmul.mubr.f32.gmra.mrb[0].mxu0 %v4856
        %v4957 = vpop.f32.mrb[0].mxu0
        %v4958 = vadd.f32 0.0, %v4957
        %v4959 = vpop.f32.mrb[0].mxu0
        %4960 = vmatprep.mubr.f32.mxu0 0.0
        %4961 = vmatmul.mubr.f32.gmra.mrb[0].mxu0 %v4859
        %v4962 = vpop.f32.mrb[0].mxu0
        %v4963 = vadd.f32 0.0, %v4962
        %v4964 = vpop.f32.mrb[0].mxu0
        %4965 = vdwg.mxu0
        %v4966 = vadd.f32 %v4820, %v4928
        %v4967 = vadd.f32 %v4821, %v4933
        %v4968 = vadd.f32 %v4822, %v4938
        %v4969 = vadd.f32 %v4823, %v4943
        %v4970 = vadd.f32 %v4824, %v4948
        %v4971 = vadd.f32 %v4825, %v4953
        %v4972 = vadd.f32 %v4826, %v4958
        %v4973 = vadd.f32 %v4827, %v4963
        %v4974 = vld [vmem:[%s5] sm:$0x1]
        %v4976 = vlaneseq
        %v4977 = vshrl.u32 %v4976, 7
        %v4978 = vsub.s32 0, %v4977
        %v4979 = vrot.slane %v4974, %v4978
        %v4981 = vmul.f32 %v4966, %v4979
        %v4982 = vmul.f32 %v4967, %v4979
        %v4983 = vmul.f32 %v4968, %v4979
        %v4984 = vmul.f32 %v4969, %v4979
        %v4985 = vmul.f32 %v4970, %v4979
        %v4986 = vmul.f32 %v4971, %v4979
        %v4987 = vmul.f32 %v4972, %v4979
        %v4988 = vmul.f32 %v4973, %v4979
        %v4989 = vld [vmem:[%s6] sm:$0x1]
        %v4991 = vlaneseq
        %v4992 = vshrl.u32 %v4991, 7
        %v4993 = vsub.s32 0, %v4992
        %v4994 = vrot.slane %v4989, %v4993
        %v4996 = vadd.f32 %v4981, %v4994
        %v4997 = vadd.f32 %v4982, %v4994
        %v4998 = vadd.f32 %v4983, %v4994
        %v4999 = vadd.f32 %v4984, %v4994
        %v5000 = vadd.f32 %v4985, %v4994
        %v5001 = vadd.f32 %v4986, %v4994
        %v5002 = vadd.f32 %v4987, %v4994
        %v5003 = vadd.f32 %v4988, %v4994
        %v5004 = vmax.f32 %v4996, 0.0
        %v5005 = vmax.f32 %v4997, 0.0
        %v5006 = vmax.f32 %v4998, 0.0
        %v5007 = vmax.f32 %v4999, 0.0
        %v5008 = vmax.f32 %v5000, 0.0
        %v5009 = vmax.f32 %v5001, 0.0
        %v5010 = vmax.f32 %v5002, 0.0
        %v5011 = vmax.f32 %v5003, 0.0
        %5012 = vst [vmem:[%s271] sm:$0xff] %v5004
        %5013 = vst [vmem:[%s271 + $0x8] sm:$0xff] %v5005
        %5014 = vst [vmem:[%s271 + $0x10] sm:$0xff] %v5006
        %5015 = vst [vmem:[%s271 + $0x18] sm:$0xff] %v5007
        %5016 = vst [vmem:[%s271 + $0x20] sm:$0xff] %v5008
        %5017 = vst [vmem:[%s271 + $0x28] sm:$0xff] %v5009
        %5018 = vst [vmem:[%s271 + $0x30] sm:$0xff] %v5010
        %5019 = vst [vmem:[%s271 + $0x38] sm:$0xff] %v5011
        %s5020 = sand.u32 %s181, 1
        %s5021 = scalar_lea.sflag [#allocation5], %s5020
        %s5022 = sand.u32 %s181, 1
        %s5023 = smul.addr %s5022, 64
        %s5024 = scalar_lea.vmem [#allocation4], %s5023
        // Predicated region
        $region49: #{tpu_custom_call.1} parent=47 // pred_check
          %p5025 = pneg %p191
        $region50: #{tpu_custom_call.1} parent=47 // pred_check_branch
          %5027 = sbr.rel (%p5025) target = $region52
        $region51: #{tpu_custom_call.1} parent=47 // pred_region
          %s5029 = ssub.s32 1024, 1024
          %5030 = vsyncadd %s5021, %s5029
          %s5031 = smul.addr %s21, 8
          %s5032 = smul.addr %s5031, 128
          %s5033 = scalar_lea.hbm %s7, %s5032
          %s5034 = sshll.u32 %s5024, 4
          %s5035 = int_to_ptr.vmem [resolvable:$true] %s5034
          %5040 = dma.vmem_to_hbm [thread:$0]  %s5035, 1024, %s5033, %s5021, 128, 128, 8
        $region52: #{tpu_custom_call.1} parent=47 // pred_fallthru
          _
      $region48: #{tpu_custom_call.1} parent=5 // pred_fallthru
        _
      %p5041 = scmp.le.s32.totalorder 2, %s16
      // Predicated region
      $region53: #{tpu_custom_call.1} parent=5 // pred_check
        %p5042 = pneg %p5041
      $region54: #{tpu_custom_call.1} parent=5 // pred_check_branch
        %5044 = sbr.rel (%p5042) target = $region56
      $region55: #{tpu_custom_call.1} parent=5 // pred_region
        %s5045 = ssub.s32 %s16, 2
        // Predicated region
        $region57: #{tpu_custom_call.1} parent=55 // pred_check
          %p5046 = pneg %p197
        $region58: #{tpu_custom_call.1} parent=55 // pred_check_branch
          %5048 = sbr.rel (%p5046) target = $region60
        $region59: #{tpu_custom_call.1} parent=55 // pred_region
          %s5049 = sand.u32 %s182, 1
          %s5050 = scalar_lea.sflag [#allocation5], %s5049
          %s5051 = sand.u32 %s182, 1
          %s5052 = smul.addr %s5051, 64
          %s5053 = scalar_lea.vmem [#allocation4], %s5052
          %5054 = dma.done %s5050, 1024
        $region60: #{tpu_custom_call.1} parent=55 // pred_fallthru
          _
      $region56: #{tpu_custom_call.1} parent=5 // pred_fallthru
        _
    $region6: #{tpu_custom_call.1} parent=1 // loop_footer
      %s20 = sadd.s32 1, %s16
    $region7: #{tpu_custom_call.1} parent=1 // loop_footer_branch
      %15 = sbr.rel target = $region3
    $region8: #{tpu_custom_call.1} parent=1 // loop_exit
      _
    %5055 = vsyncpa [#allocation5], 1
    %s5056 = scalar_lea.sflag [#allocation5], 1
    %5057 = vsyncpa %s5056, 1

</llo_original>
